<compile_context>
chip_gen: v5e
topology: v5e:2x2
jax: 0.10.0
libtpu: 0.0.40
codegen_flags: <defaults>
</compile_context>

<pallas_src>
import functools

import jax
import jax.numpy as jnp
from jax.experimental import pallas as pl
from jax.experimental.pallas import tpu as pltpu

LN_EPS = 1e-5
BN_EPS = 1e-5


def _layer_norm(x, g, b):
    mu = jnp.mean(x, axis=-1, keepdims=True)
    var = jnp.mean((x - mu) ** 2, axis=-1, keepdims=True)
    return (x - mu) * jax.lax.rsqrt(var + LN_EPS) * g + b


def _swish(x):
    return x * jax.nn.sigmoid(x)


def _pick_row_tile(n, target=256):
    for tm in (target, 128, 64, 32, 16, 8):
        if n % tm == 0:
            return tm
    return n


# ---------------------------------------------------------------------------
# FFN1:  out = 0.5 * FFN(x) + x      (row-tiled, no raw output emitted)
# ---------------------------------------------------------------------------
def ffn_residual_kernel(x_ref, g_ref, b_ref, w1_ref, b1_ref, w2_ref, b2_ref, out_ref):
    x = x_ref[...].astype(jnp.float32)
    xn = _layer_norm(x, g_ref[...], b_ref[...])
    h = _swish(jnp.dot(xn, w1_ref[...], preferred_element_type=jnp.float32) + b1_ref[...])
    y = jnp.dot(h, w2_ref[...], preferred_element_type=jnp.float32) + b2_ref[...]
    out_ref[...] = (0.5 * y + x).astype(out_ref.dtype)


def ffn_residual_call(x, p, *, tm):
    N, C = x.shape
    F = p["w1"].shape[1]
    row = pl.BlockSpec((tm, C), lambda i: (i, 0))
    cvec = pl.BlockSpec((1, C), lambda i: (0, 0))
    fvec = pl.BlockSpec((1, F), lambda i: (0, 0))
    return pl.pallas_call(
        ffn_residual_kernel,
        grid=(pl.cdiv(N, tm),),
        in_specs=[row, cvec, cvec,
                  pl.BlockSpec((C, F), lambda i: (0, 0)), fvec,
                  pl.BlockSpec((F, C), lambda i: (0, 0)), cvec],
        out_specs=row,
        out_shape=jax.ShapeDtypeStruct((N, C), x.dtype),
        compiler_params=pltpu.CompilerParams(dimension_semantics=("parallel",)),
    )(x, p["ln_g"], p["ln_b"], p["w1"], p["b1"], p["w2"], p["b2"])


# ---------------------------------------------------------------------------
# FFN2 + final LayerNorm fused:
#   raw = FFN2(x);  out = LN(0.5 * raw + x)          (row-tiled)
# ---------------------------------------------------------------------------
def ffn_final_ln_kernel(x_ref, g_ref, b_ref, w1_ref, b1_ref, w2_ref, b2_ref,
                        fg_ref, fb_ref, raw_ref, out_ref):
    x = x_ref[...].astype(jnp.float32)
    xn = _layer_norm(x, g_ref[...], b_ref[...])
    h = _swish(jnp.dot(xn, w1_ref[...], preferred_element_type=jnp.float32) + b1_ref[...])
    y = jnp.dot(h, w2_ref[...], preferred_element_type=jnp.float32) + b2_ref[...]
    raw_ref[...] = y.astype(raw_ref.dtype)
    out_ref[...] = _layer_norm(0.5 * y + x, fg_ref[...], fb_ref[...]).astype(out_ref.dtype)


def ffn_final_ln_call(x, p, fp, *, tm):
    N, C = x.shape
    F = p["w1"].shape[1]
    row = pl.BlockSpec((tm, C), lambda i: (i, 0))
    cvec = pl.BlockSpec((1, C), lambda i: (0, 0))
    fvec = pl.BlockSpec((1, F), lambda i: (0, 0))
    return pl.pallas_call(
        ffn_final_ln_kernel,
        grid=(pl.cdiv(N, tm),),
        in_specs=[row, cvec, cvec,
                  pl.BlockSpec((C, F), lambda i: (0, 0)), fvec,
                  pl.BlockSpec((F, C), lambda i: (0, 0)), cvec,
                  cvec, cvec],
        out_specs=(row, row),
        out_shape=(jax.ShapeDtypeStruct((N, C), x.dtype),     # raw ffn2 output (layer_result)
                   jax.ShapeDtypeStruct((N, C), x.dtype)),    # final LN output
        compiler_params=pltpu.CompilerParams(dimension_semantics=("parallel",)),
    )(x, p["ln_g"], p["ln_b"], p["w1"], p["b1"], p["w2"], p["b2"],
      fp["ln_g"], fp["ln_b"])


# ---------------------------------------------------------------------------
# Fused self-attention branch + convolution-module branch, grid=(B,).
#   x2 = MHA(LN(x)) + x
#   x3 = ConvModule(x2) + x2
# ---------------------------------------------------------------------------
def attn_conv_kernel(x_ref,
                     ag_ref, ab_ref, wq_ref, bq_ref, wk_ref, bk_ref,
                     wv_ref, bv_ref, wo_ref, bo_ref,
                     cg_ref, cb_ref, w1a_ref, w1b_ref, dw_ref, bnb_ref, w2_ref,
                     out_ref, *, num_heads, kernel_size):
    x = x_ref[0].astype(jnp.float32)                 # (T, C)
    T, C = x.shape
    H = num_heads

    # ---- self-attention branch (eval: attn dropout = identity) ----
    xn = _layer_norm(x, ag_ref[...], ab_ref[...])
    xh = jnp.broadcast_to(xn, (H, T, C))             # head-batched operand (hoisted once)
    q = jnp.einsum('htc,hcd->htd', xh, wq_ref[...],
                   preferred_element_type=jnp.float32) + bq_ref[...]   # (H,T,dh), pre-scaled
    k = jnp.einsum('htc,hcd->htd', xh, wk_ref[...],
                   preferred_element_type=jnp.float32) + bk_ref[...]
    v = jnp.einsum('htc,hcd->htd', xh, wv_ref[...],
                   preferred_element_type=jnp.float32) + bv_ref[...]
    s = jnp.einsum('htd,hsd->hts', q, k, preferred_element_type=jnp.float32)   # (H,T,T)
    s = s - jnp.max(s, axis=-1, keepdims=True)
    p = jnp.exp(s)
    p = p * pl.reciprocal(jnp.sum(p, axis=-1, keepdims=True), approx=True)
    o = jnp.einsum('hts,hsd->htd', p, v, preferred_element_type=jnp.float32)   # (H,T,dh)
    o = jnp.einsum('htd,hdc->htc', o, wo_ref[...],
                   preferred_element_type=jnp.float32)                         # (H,T,C)
    x2 = jnp.sum(o, axis=0) + bo_ref[...] + x                                  # (T,C)

    # ---- convolution-module branch (eval: conv dropout = identity) ----
    cn = _layer_norm(x2, cg_ref[...], cb_ref[...])
    h = (jnp.dot(cn, w1a_ref[...], preferred_element_type=jnp.float32)
         * jax.nn.sigmoid(jnp.dot(cn, w1b_ref[...], preferred_element_type=jnp.float32)))  # GLU
    pad = (kernel_size - 1) // 2
    dw = dw_ref[...].astype(jnp.float32)             # (K, C), BatchNorm scale pre-folded
    if pad > 0:
        z = jnp.zeros((pad, C), jnp.float32)
        hp = jnp.concatenate([z, h, z], axis=0)      # (T + 2*pad, C), stays in vregs
    else:
        hp = h
    acc = jnp.zeros((T, C), jnp.float32)
    for kk in range(kernel_size):
        if kk + T <= pad or kk >= pad + T:           # tap only touches zero padding: skip
            continue
        acc = acc + hp[kk:kk + T, :] * dw[kk]
    hb = _swish(acc + bnb_ref[...])                  # BatchNorm offset (eval) + swish
    co = jnp.dot(hb, w2_ref[...], preferred_element_type=jnp.float32)
    out_ref[0] = (co + x2).astype(out_ref.dtype)


def attn_conv_call(x, ap, cp, *, num_heads, kernel_size):
    B, T, C = x.shape
    H = num_heads
    dh = C // H
    scaling = dh ** -0.5

    # Fold 1/sqrt(dh) into the q projection, split projections per head so the kernel
    # gets batch-leading (H, C, dh) operands (no in-kernel lane slicing / transposes).
    def split_w(w):                                   # (C, C) -> (H, C, dh)
        return w.reshape(C, H, dh).transpose(1, 0, 2)

    def split_b(b):                                   # (1, C) -> (H, 1, dh)
        return b.reshape(1, H, dh).transpose(1, 0, 2)

    wq = split_w(ap["wq"] * scaling); bq = split_b(ap["bq"] * scaling)
    wk = split_w(ap["wk"]);           bk = split_b(ap["bk"])
    wv = split_w(ap["wv"]);           bv = split_b(ap["bv"])
    wo = ap["wo"].reshape(H, dh, C)                   # rows of wo are (head, dh) ordered
    bo = ap["bo"]

    # Fold eval-mode BatchNorm scale into the depthwise weights; keep only the offset.
    bn_scale = cp["bn_g"] * jax.lax.rsqrt(cp["bn_rv"] + BN_EPS)          # (C,)
    bn_off = (cp["bn_b"] - cp["bn_rm"] * bn_scale).reshape(1, C)
    dw = cp["dw"] * bn_scale[None, :]                                    # (K, C)
    w1a = cp["w1"][:, :C]
    w1b = cp["w1"][:, C:]

    xsp = pl.BlockSpec((1, T, C), lambda i: (i, 0, 0))
    cvec = pl.BlockSpec((1, C), lambda i: (0, 0))
    cmat = pl.BlockSpec((C, C), lambda i: (0, 0))
    hmat = pl.BlockSpec((H, C, dh), lambda i: (0, 0, 0))
    hvec = pl.BlockSpec((H, 1, dh), lambda i: (0, 0, 0))
    omat = pl.BlockSpec((H, dh, C), lambda i: (0, 0, 0))
    kmat = pl.BlockSpec((kernel_size, C), lambda i: (0, 0))

    return pl.pallas_call(
        functools.partial(attn_conv_kernel, num_heads=num_heads, kernel_size=kernel_size),
        grid=(B,),
        in_specs=[xsp,
                  cvec, cvec, hmat, hvec, hmat, hvec, hmat, hvec, omat, cvec,   # attention
                  cvec, cvec, cmat, cmat, kmat, cvec, cmat],                    # conv module
        out_specs=xsp,
        out_shape=jax.ShapeDtypeStruct((B, T, C), x.dtype),
        compiler_params=pltpu.CompilerParams(dimension_semantics=("parallel",)),
    )(x, ap["ln_g"], ap["ln_b"], wq, bq, wk, bk, wv, bv, wo, bo,
      cp["ln_g"], cp["ln_b"], w1a, w1b, dw, bn_off, cp["w2"])


# ---------------------------------------------------------------------------
# Full BranchformerEncoderLayer forward (eval mode)
# ---------------------------------------------------------------------------
def branchformer_layer(x, params, *, num_heads, kernel_size):
    T, B, C = x.shape
    N = T * B
    tm = _pick_row_tile(N)

    xf = x.reshape(N, C)                                      # (T*B, C), time-major order
    x1 = ffn_residual_call(xf, params["ffn1"], tm=tm)         # 0.5 * FFN1 + residual

    xb = x1.reshape(T, B, C).transpose(1, 0, 2)               # (B, T, C)
    x3 = attn_conv_call(xb, params["attn"], params["conv"],
                        num_heads=num_heads, kernel_size=kernel_size)
    x3f = x3.transpose(1, 0, 2).reshape(N, C)                 # back to time-major order

    layer_result, y = ffn_final_ln_call(x3f, params["ffn2"], params["final_ln"], tm=tm)

    attn_weights = None        # need_weights=False in the reference module
    return (y.reshape(T, B, C),
            (attn_weights, layer_result.reshape(T, B, C)))


# ---------------------------------------------------------------------------
# Pure-JAX reference (mirrors the PyTorch module, eval mode) for self-checking
# ---------------------------------------------------------------------------
def reference_layer(x, params, *, num_heads, kernel_size):
    T, B, C = x.shape
    H = num_heads
    dh = C // H

    def ln(z, g, b):
        mu = z.mean(-1, keepdims=True)
        var = ((z - mu) ** 2).mean(-1, keepdims=True)
        return (z - mu) / jnp.sqrt(var + LN_EPS) * g + b

    def ffn(z, p):
        h = ln(z, p["ln_g"], p["ln_b"]) @ p["w1"] + p["b1"]
        h = h * jax.nn.sigmoid(h)
        return h @ p["w2"] + p["b2"]

    x1 = 0.5 * ffn(x, params["ffn1"]) + x

    ap = params["attn"]
    xn = ln(x1, ap["ln_g"], ap["ln_b"])
    q = (xn @ ap["wq"] + ap["bq"]) * (dh ** -0.5)
    k = xn @ ap["wk"] + ap["bk"]
    v = xn @ ap["wv"] + ap["bv"]

    def split(z):                                     # (T,B,C) -> (B,H,T,dh)
        return z.reshape(T, B, H, dh).transpose(1, 2, 0, 3)

    s = jnp.einsum('bhtd,bhsd->bhts', split(q), split(k))
    p = jax.nn.softmax(s, axis=-1)
    o = jnp.einsum('bhts,bhsd->bhtd', p, split(v))
    o = o.transpose(2, 0, 1, 3).reshape(T, B, C) @ ap["wo"] + ap["bo"]
    x2 = o + x1

    cp = params["conv"]
    zb = ln(x2, cp["ln_g"], cp["ln_b"]).transpose(1, 0, 2)    # (B,T,C)
    y = zb @ cp["w1"]
    g = y[..., :C] * jax.nn.sigmoid(y[..., C:])
    pad = (kernel_size - 1) // 2
    gp = jnp.pad(g, ((0, 0), (pad, pad), (0, 0)))
    conv = jnp.zeros_like(g)
    for kk in range(kernel_size):
        conv = conv + gp[:, kk:kk + T, :] * cp["dw"][kk]
    bn_scale = cp["bn_g"] / jnp.sqrt(cp["bn_rv"] + BN_EPS)
    conv = conv * bn_scale + (cp["bn_b"] - cp["bn_rm"] * bn_scale)
    conv = conv * jax.nn.sigmoid(conv)
    conv = conv @ cp["w2"]
    x3 = conv.transpose(1, 0, 2) + x2

    raw = ffn(x3, params["ffn2"])
    out = ln(0.5 * raw + x3, params["final_ln"]["ln_g"], params["final_ln"]["ln_b"])
    return out, raw


# ---------------------------------------------------------------------------
# Deterministic synthetic parameters (shapes follow the module __init__)
# ---------------------------------------------------------------------------
def make_params(key, C, F, K, scale=0.25):
    ks = iter(jax.random.split(key, 32))

    def nrm(shape):
        return (scale * jax.random.normal(next(ks), shape)).astype(jnp.float32)

    def ffn_params():
        return dict(ln_g=jnp.ones((1, C), jnp.float32), ln_b=jnp.zeros((1, C), jnp.float32),
                    w1=nrm((C, F)), b1=nrm((1, F)), w2=nrm((F, C)), b2=nrm((1, C)))

    attn = dict(ln_g=jnp.ones((1, C), jnp.float32), ln_b=jnp.zeros((1, C), jnp.float32),
                wq=nrm((C, C)), bq=nrm((1, C)),
                wk=nrm((C, C)), bk=nrm((1, C)),
                wv=nrm((C, C)), bv=nrm((1, C)),
                wo=nrm((C, C)), bo=nrm((1, C)))

    conv = dict(ln_g=jnp.ones((1, C), jnp.float32), ln_b=jnp.zeros((1, C), jnp.float32),
                w1=nrm((C, 2 * C)),      # pointwise_conv1 weight (2C,C,1) transposed; bias=False
                dw=nrm((K, C)),          # depthwise weight (C,1,K) transposed to (K,C); bias=False
                w2=nrm((C, C)),          # pointwise_conv2 weight (C,C,1) transposed; bias=False
                bn_g=(1.0 + 0.1 * jax.random.normal(next(ks), (C,))).astype(jnp.float32),
                bn_b=(0.1 * jax.random.normal(next(ks), (C,))).astype(jnp.float32),
                bn_rm=(0.1 * jax.random.normal(next(ks), (C,))).astype(jnp.float32),
                bn_rv=(1.0 + 0.5 * jax.random.uniform(next(ks), (C,))).astype(jnp.float32))

    return dict(ffn1=ffn_params(), attn=attn, conv=conv, ffn2=ffn_params(),
                final_ln=dict(ln_g=jnp.ones((1, C), jnp.float32),
                              ln_b=jnp.zeros((1, C), jnp.float32)))


if __name__ == "__main__":
    T, B, C = 8, 2, 32          # seq, batch, embed_dim
    F = 64                      # ffn_embed_dim
    H = 4                       # attention_heads
    K = 31                      # depthwise_conv_kernel_size (module default)

    key = jax.random.PRNGKey(0)
    kx, kp = jax.random.split(key)
    params = make_params(kp, C, F, K)
    x = jax.random.normal(kx, (T, B, C), dtype=jnp.float32)

    fwd = jax.jit(functools.partial(branchformer_layer, num_heads=H, kernel_size=K))
    y, (attn_w, layer_result) = fwd(x, params)
    jax.block_until_ready(y)
    jax.block_until_ready(layer_result)

    assert y.shape == (T, B, C) and layer_result.shape == (T, B, C)
    assert bool(jnp.all(jnp.isfinite(y))) and bool(jnp.all(jnp.isfinite(layer_result)))

    # Correctness self-check against a pure-JAX reference of the PyTorch module (eval mode).
    # Loose tolerance accounts for the approximate softmax reciprocal on the EUP.
    y_ref, raw_ref = reference_layer(x, params, num_heads=H, kernel_size=K)
    assert bool(jnp.allclose(y, y_ref, atol=5e-2, rtol=5e-2)), \
        float(jnp.max(jnp.abs(y - y_ref)))
    assert bool(jnp.allclose(layer_result, raw_ref, atol=5e-2, rtol=5e-2)), \
        float(jnp.max(jnp.abs(layer_result - raw_ref)))

    print("KERNEL_OK")
</pallas_src>

<mosaic_0001>
module attributes {stable_mosaic.version = 11 : i64} {
  func.func @ffn_residual_kernel(%arg0: i32, %arg1: memref<16x32xf32, #tpu.memory_space<vmem>>, %arg2: memref<1x32xf32, #tpu.memory_space<vmem>>, %arg3: memref<1x32xf32, #tpu.memory_space<vmem>>, %arg4: memref<32x64xf32, #tpu.memory_space<vmem>>, %arg5: memref<1x64xf32, #tpu.memory_space<vmem>>, %arg6: memref<64x32xf32, #tpu.memory_space<vmem>>, %arg7: memref<1x32xf32, #tpu.memory_space<vmem>>, %arg8: memref<16x32xf32, #tpu.memory_space<vmem>>) attributes {dimension_semantics = [#tpu.dimension_semantics<parallel>], iteration_bounds = array<i64: 1>, scalar_prefetch = 0 : i64, scratch_operands = 0 : i64, tpu.core_type = #tpu.core_type<tc>, window_params = [{transform_indices = @transform_0, window_bounds = array<i64: 16, 32>}, {pipeline_mode = #tpu.pipeline_mode<synchronous>, transform_indices = @transform_1, window_bounds = array<i64: 1, 32>}, {pipeline_mode = #tpu.pipeline_mode<synchronous>, transform_indices = @transform_2, window_bounds = array<i64: 1, 32>}, {pipeline_mode = #tpu.pipeline_mode<synchronous>, transform_indices = @transform_3, window_bounds = array<i64: 32, 64>}, {pipeline_mode = #tpu.pipeline_mode<synchronous>, transform_indices = @transform_4, window_bounds = array<i64: 1, 64>}, {pipeline_mode = #tpu.pipeline_mode<synchronous>, transform_indices = @transform_5, window_bounds = array<i64: 64, 32>}, {pipeline_mode = #tpu.pipeline_mode<synchronous>, transform_indices = @transform_6, window_bounds = array<i64: 1, 32>}, {transform_indices = @transform_7, window_bounds = array<i64: 16, 32>}]} {
    %c0 = arith.constant 0 : index
    %c0_0 = arith.constant 0 : index
    %0 = vector.load %arg1[%c0, %c0_0] : memref<16x32xf32, #tpu.memory_space<vmem>>, vector<16x32xf32>
    %c0_1 = arith.constant 0 : index
    %c0_2 = arith.constant 0 : index
    %1 = vector.load %arg2[%c0_1, %c0_2] : memref<1x32xf32, #tpu.memory_space<vmem>>, vector<1x32xf32>
    %c0_3 = arith.constant 0 : index
    %c0_4 = arith.constant 0 : index
    %2 = vector.load %arg3[%c0_3, %c0_4] : memref<1x32xf32, #tpu.memory_space<vmem>>, vector<1x32xf32>
    %cst = arith.constant dense<0.000000e+00> : vector<16xf32>
    %3 = vector.multi_reduction <add>, %0, %cst [1] : vector<16x32xf32> to vector<16xf32>
    %4 = vector.shape_cast %3 : vector<16xf32> to vector<16x1xf32>
    %cst_5 = arith.constant 3.200000e+01 : f32
    %5 = vector.broadcast %cst_5 : f32 to vector<16x1xf32>
    %6 = arith.divf %4, %5 : vector<16x1xf32>
    %7 = vector.broadcast %6 : vector<16x1xf32> to vector<16x32xf32>
    %8 = arith.subf %0, %7 : vector<16x32xf32>
    %9 = arith.mulf %8, %8 : vector<16x32xf32>
    %cst_6 = arith.constant dense<0.000000e+00> : vector<16xf32>
    %10 = vector.multi_reduction <add>, %9, %cst_6 [1] : vector<16x32xf32> to vector<16xf32>
    %11 = vector.shape_cast %10 : vector<16xf32> to vector<16x1xf32>
    %cst_7 = arith.constant 3.200000e+01 : f32
    %12 = vector.broadcast %cst_7 : f32 to vector<16x1xf32>
    %13 = arith.divf %11, %12 : vector<16x1xf32>
    %14 = vector.broadcast %6 : vector<16x1xf32> to vector<16x32xf32>
    %15 = arith.subf %0, %14 : vector<16x32xf32>
    %cst_8 = arith.constant 9.99999974E-6 : f32
    %16 = vector.broadcast %cst_8 : f32 to vector<16x1xf32>
    %17 = arith.addf %13, %16 : vector<16x1xf32>
    %18 = math.rsqrt %17 : vector<16x1xf32>
    %19 = vector.broadcast %18 : vector<16x1xf32> to vector<16x32xf32>
    %20 = arith.mulf %15, %19 : vector<16x32xf32>
    %21 = vector.broadcast %1 : vector<1x32xf32> to vector<16x32xf32>
    %22 = arith.mulf %20, %21 : vector<16x32xf32>
    %23 = vector.broadcast %2 : vector<1x32xf32> to vector<16x32xf32>
    %24 = arith.addf %22, %23 : vector<16x32xf32>
    %c0_9 = arith.constant 0 : index
    %c0_10 = arith.constant 0 : index
    %25 = vector.load %arg4[%c0_9, %c0_10] : memref<32x64xf32, #tpu.memory_space<vmem>>, vector<32x64xf32>
    %cst_11 = arith.constant dense<0.000000e+00> : vector<16x64xf32>
    %26 = tpu.matmul %24, %25, %cst_11 {dimension_numbers = #tpu.dot_dimension_numbers<[1], [0], [0], [1], [0, 0, 1, 1], [], []>} : vector<16x32xf32>, vector<32x64xf32>, vector<16x64xf32> -> vector<16x64xf32>
    %c0_12 = arith.constant 0 : index
    %c0_13 = arith.constant 0 : index
    %27 = vector.load %arg5[%c0_12, %c0_13] : memref<1x64xf32, #tpu.memory_space<vmem>>, vector<1x64xf32>
    %28 = vector.broadcast %27 : vector<1x64xf32> to vector<16x64xf32>
    %29 = arith.addf %26, %28 : vector<16x64xf32>
    %30 = arith.negf %29 : vector<16x64xf32>
    %31 = math.exp %30 : vector<16x64xf32>
    %cst_14 = arith.constant 1.000000e+00 : f32
    %32 = vector.broadcast %cst_14 : f32 to vector<16x64xf32>
    %33 = arith.addf %32, %31 : vector<16x64xf32>
    %34 = arith.divf %32, %33 : vector<16x64xf32>
    %35 = arith.mulf %29, %34 : vector<16x64xf32>
    %c0_15 = arith.constant 0 : index
    %c0_16 = arith.constant 0 : index
    %36 = vector.load %arg6[%c0_15, %c0_16] : memref<64x32xf32, #tpu.memory_space<vmem>>, vector<64x32xf32>
    %cst_17 = arith.constant dense<0.000000e+00> : vector<16x32xf32>
    %37 = tpu.matmul %35, %36, %cst_17 {dimension_numbers = #tpu.dot_dimension_numbers<[1], [0], [0], [1], [0, 0, 1, 1], [], []>} : vector<16x64xf32>, vector<64x32xf32>, vector<16x32xf32> -> vector<16x32xf32>
    %c0_18 = arith.constant 0 : index
    %c0_19 = arith.constant 0 : index
    %38 = vector.load %arg7[%c0_18, %c0_19] : memref<1x32xf32, #tpu.memory_space<vmem>>, vector<1x32xf32>
    %39 = vector.broadcast %38 : vector<1x32xf32> to vector<16x32xf32>
    %40 = arith.addf %37, %39 : vector<16x32xf32>
    %cst_20 = arith.constant 5.000000e-01 : f32
    %41 = vector.broadcast %cst_20 : f32 to vector<16x32xf32>
    %42 = arith.mulf %41, %40 : vector<16x32xf32>
    %43 = arith.addf %42, %0 : vector<16x32xf32>
    %c0_21 = arith.constant 0 : index
    %c0_22 = arith.constant 0 : index
    %44 = vector.load %arg8[%c0_21, %c0_22] : memref<16x32xf32, #tpu.memory_space<vmem>>, vector<16x32xf32>
    tpu.vector_store %arg8[%c0_21, %c0_22], %43 {strides = array<i32>} : memref<16x32xf32, #tpu.memory_space<vmem>>, vector<16x32xf32>,
    return
  }
  func.func @transform_0(%arg0: i32) -> (i32, i32) {
    %c0_i32 = arith.constant 0 : i32
    %c0_i32_0 = arith.constant 0 : i32
    return %arg0, %c0_i32 : i32, i32
  }
  func.func @transform_1(%arg0: i32) -> (i32, i32) {
    %c0_i32 = arith.constant 0 : i32
    %c0_i32_0 = arith.constant 0 : i32
    %c0_i32_1 = arith.constant 0 : i32
    return %c0_i32, %c0_i32_0 : i32, i32
  }
  func.func @transform_2(%arg0: i32) -> (i32, i32) {
    %c0_i32 = arith.constant 0 : i32
    %c0_i32_0 = arith.constant 0 : i32
    %c0_i32_1 = arith.constant 0 : i32
    return %c0_i32, %c0_i32_0 : i32, i32
  }
  func.func @transform_3(%arg0: i32) -> (i32, i32) {
    %c0_i32 = arith.constant 0 : i32
    %c0_i32_0 = arith.constant 0 : i32
    %c0_i32_1 = arith.constant 0 : i32
    return %c0_i32, %c0_i32_0 : i32, i32
  }
  func.func @transform_4(%arg0: i32) -> (i32, i32) {
    %c0_i32 = arith.constant 0 : i32
    %c0_i32_0 = arith.constant 0 : i32
    %c0_i32_1 = arith.constant 0 : i32
    return %c0_i32, %c0_i32_0 : i32, i32
  }
  func.func @transform_5(%arg0: i32) -> (i32, i32) {
    %c0_i32 = arith.constant 0 : i32
    %c0_i32_0 = arith.constant 0 : i32
    %c0_i32_1 = arith.constant 0 : i32
    return %c0_i32, %c0_i32_0 : i32, i32
  }
  func.func @transform_6(%arg0: i32) -> (i32, i32) {
    %c0_i32 = arith.constant 0 : i32
    %c0_i32_0 = arith.constant 0 : i32
    %c0_i32_1 = arith.constant 0 : i32
    return %c0_i32, %c0_i32_0 : i32, i32
  }
  func.func @transform_7(%arg0: i32) -> (i32, i32) {
    %c0_i32 = arith.constant 0 : i32
    %c0_i32_0 = arith.constant 0 : i32
    return %arg0, %c0_i32 : i32, i32
  }
}

module attributes {stable_mosaic.version = 11 : i64} {
  func.func @attn_conv_kernel(%arg0: i32, %arg1: memref<1x8x32xf32, #tpu.memory_space<vmem>>, %arg2: memref<1x32xf32, #tpu.memory_space<vmem>>, %arg3: memref<1x32xf32, #tpu.memory_space<vmem>>, %arg4: memref<4x32x8xf32, #tpu.memory_space<vmem>>, %arg5: memref<4x1x8xf32, #tpu.memory_space<vmem>>, %arg6: memref<4x32x8xf32, #tpu.memory_space<vmem>>, %arg7: memref<4x1x8xf32, #tpu.memory_space<vmem>>, %arg8: memref<4x32x8xf32, #tpu.memory_space<vmem>>, %arg9: memref<4x1x8xf32, #tpu.memory_space<vmem>>, %arg10: memref<4x8x32xf32, #tpu.memory_space<vmem>>, %arg11: memref<1x32xf32, #tpu.memory_space<vmem>>, %arg12: memref<1x32xf32, #tpu.memory_space<vmem>>, %arg13: memref<1x32xf32, #tpu.memory_space<vmem>>, %arg14: memref<32x32xf32, #tpu.memory_space<vmem>>, %arg15: memref<32x32xf32, #tpu.memory_space<vmem>>, %arg16: memref<31x32xf32, #tpu.memory_space<vmem>>, %arg17: memref<1x32xf32, #tpu.memory_space<vmem>>, %arg18: memref<32x32xf32, #tpu.memory_space<vmem>>, %arg19: memref<1x8x32xf32, #tpu.memory_space<vmem>>) attributes {dimension_semantics = [#tpu.dimension_semantics<parallel>], iteration_bounds = array<i64: 2>, scalar_prefetch = 0 : i64, scratch_operands = 0 : i64, tpu.core_type = #tpu.core_type<tc>, window_params = [{transform_indices = @transform_0, window_bounds = array<i64: 1, 8, 32>}, {pipeline_mode = #tpu.pipeline_mode<synchronous>, transform_indices = @transform_1, window_bounds = array<i64: 1, 32>}, {pipeline_mode = #tpu.pipeline_mode<synchronous>, transform_indices = @transform_2, window_bounds = array<i64: 1, 32>}, {pipeline_mode = #tpu.pipeline_mode<synchronous>, transform_indices = @transform_3, window_bounds = array<i64: 4, 32, 8>}, {pipeline_mode = #tpu.pipeline_mode<synchronous>, transform_indices = @transform_4, window_bounds = array<i64: 4, 1, 8>}, {pipeline_mode = #tpu.pipeline_mode<synchronous>, transform_indices = @transform_5, window_bounds = array<i64: 4, 32, 8>}, {pipeline_mode = #tpu.pipeline_mode<synchronous>, transform_indices = @transform_6, window_bounds = array<i64: 4, 1, 8>}, {pipeline_mode = #tpu.pipeline_mode<synchronous>, transform_indices = @transform_7, window_bounds = array<i64: 4, 32, 8>}, {pipeline_mode = #tpu.pipeline_mode<synchronous>, transform_indices = @transform_8, window_bounds = array<i64: 4, 1, 8>}, {pipeline_mode = #tpu.pipeline_mode<synchronous>, transform_indices = @transform_9, window_bounds = array<i64: 4, 8, 32>}, {pipeline_mode = #tpu.pipeline_mode<synchronous>, transform_indices = @transform_10, window_bounds = array<i64: 1, 32>}, {pipeline_mode = #tpu.pipeline_mode<synchronous>, transform_indices = @transform_11, window_bounds = array<i64: 1, 32>}, {pipeline_mode = #tpu.pipeline_mode<synchronous>, transform_indices = @transform_12, window_bounds = array<i64: 1, 32>}, {pipeline_mode = #tpu.pipeline_mode<synchronous>, transform_indices = @transform_13, window_bounds = array<i64: 32, 32>}, {pipeline_mode = #tpu.pipeline_mode<synchronous>, transform_indices = @transform_14, window_bounds = array<i64: 32, 32>}, {pipeline_mode = #tpu.pipeline_mode<synchronous>, transform_indices = @transform_15, window_bounds = array<i64: 31, 32>}, {pipeline_mode = #tpu.pipeline_mode<synchronous>, transform_indices = @transform_16, window_bounds = array<i64: 1, 32>}, {pipeline_mode = #tpu.pipeline_mode<synchronous>, transform_indices = @transform_17, window_bounds = array<i64: 32, 32>}, {transform_indices = @transform_18, window_bounds = array<i64: 1, 8, 32>}]} {
    %c0 = arith.constant 0 : index
    %c0_0 = arith.constant 0 : index
    %c0_1 = arith.constant 0 : index
    %0 = vector.load %arg1[%c0, %c0_0, %c0_1] : memref<1x8x32xf32, #tpu.memory_space<vmem>>, vector<1x8x32xf32>
    %1 = vector.shape_cast %0 : vector<1x8x32xf32> to vector<8x32xf32>
    %c0_2 = arith.constant 0 : index
    %c0_3 = arith.constant 0 : index
    %2 = vector.load %arg2[%c0_2, %c0_3] : memref<1x32xf32, #tpu.memory_space<vmem>>, vector<1x32xf32>
    %c0_4 = arith.constant 0 : index
    %c0_5 = arith.constant 0 : index
    %3 = vector.load %arg3[%c0_4, %c0_5] : memref<1x32xf32, #tpu.memory_space<vmem>>, vector<1x32xf32>
    %cst = arith.constant dense<0.000000e+00> : vector<8xf32>
    %4 = vector.multi_reduction <add>, %1, %cst [1] : vector<8x32xf32> to vector<8xf32>
    %5 = vector.shape_cast %4 : vector<8xf32> to vector<8x1xf32>
    %cst_6 = arith.constant 3.200000e+01 : f32
    %6 = vector.broadcast %cst_6 : f32 to vector<8x1xf32>
    %7 = arith.divf %5, %6 : vector<8x1xf32>
    %8 = vector.broadcast %7 : vector<8x1xf32> to vector<8x32xf32>
    %9 = arith.subf %1, %8 : vector<8x32xf32>
    %10 = arith.mulf %9, %9 : vector<8x32xf32>
    %cst_7 = arith.constant dense<0.000000e+00> : vector<8xf32>
    %11 = vector.multi_reduction <add>, %10, %cst_7 [1] : vector<8x32xf32> to vector<8xf32>
    %12 = vector.shape_cast %11 : vector<8xf32> to vector<8x1xf32>
    %cst_8 = arith.constant 3.200000e+01 : f32
    %13 = vector.broadcast %cst_8 : f32 to vector<8x1xf32>
    %14 = arith.divf %12, %13 : vector<8x1xf32>
    %15 = vector.broadcast %7 : vector<8x1xf32> to vector<8x32xf32>
    %16 = arith.subf %1, %15 : vector<8x32xf32>
    %cst_9 = arith.constant 9.99999974E-6 : f32
    %17 = vector.broadcast %cst_9 : f32 to vector<8x1xf32>
    %18 = arith.addf %14, %17 : vector<8x1xf32>
    %19 = math.rsqrt %18 : vector<8x1xf32>
    %20 = vector.broadcast %19 : vector<8x1xf32> to vector<8x32xf32>
    %21 = arith.mulf %16, %20 : vector<8x32xf32>
    %22 = vector.broadcast %2 : vector<1x32xf32> to vector<8x32xf32>
    %23 = arith.mulf %21, %22 : vector<8x32xf32>
    %24 = vector.broadcast %3 : vector<1x32xf32> to vector<8x32xf32>
    %25 = arith.addf %23, %24 : vector<8x32xf32>
    %26 = vector.shape_cast %25 : vector<8x32xf32> to vector<1x8x32xf32>
    %27 = vector.broadcast %26 : vector<1x8x32xf32> to vector<4x8x32xf32>
    %c0_10 = arith.constant 0 : index
    %c0_11 = arith.constant 0 : index
    %c0_12 = arith.constant 0 : index
    %28 = vector.load %arg4[%c0_10, %c0_11, %c0_12] : memref<4x32x8xf32, #tpu.memory_space<vmem>>, vector<4x32x8xf32>
    "tpu.trace_start"() <{level = 10 : i32, message = "htc,hcd->htd"}> : () -> ()
    %cst_13 = arith.constant dense<0.000000e+00> : vector<4x8x8xf32>
    %29 = tpu.matmul %27, %28, %cst_13 {dimension_numbers = #tpu.dot_dimension_numbers<[2], [1], [1], [2], [0, 0, 0, 1, 1, 2], [0], [0]>} : vector<4x8x32xf32>, vector<4x32x8xf32>, vector<4x8x8xf32> -> vector<4x8x8xf32>
    "tpu.trace_stop"() : () -> ()
    %c0_14 = arith.constant 0 : index
    %c0_15 = arith.constant 0 : index
    %c0_16 = arith.constant 0 : index
    %30 = vector.load %arg5[%c0_14, %c0_15, %c0_16] : memref<4x1x8xf32, #tpu.memory_space<vmem>>, vector<4x1x8xf32>
    %31 = vector.broadcast %30 : vector<4x1x8xf32> to vector<4x8x8xf32>
    %32 = arith.addf %29, %31 : vector<4x8x8xf32>
    %c0_17 = arith.constant 0 : index
    %c0_18 = arith.constant 0 : index
    %c0_19 = arith.constant 0 : index
    %33 = vector.load %arg6[%c0_17, %c0_18, %c0_19] : memref<4x32x8xf32, #tpu.memory_space<vmem>>, vector<4x32x8xf32>
    "tpu.trace_start"() <{level = 10 : i32, message = "htc,hcd->htd"}> : () -> ()
    %cst_20 = arith.constant dense<0.000000e+00> : vector<4x8x8xf32>
    %34 = tpu.matmul %27, %33, %cst_20 {dimension_numbers = #tpu.dot_dimension_numbers<[2], [1], [1], [2], [0, 0, 0, 1, 1, 2], [0], [0]>} : vector<4x8x32xf32>, vector<4x32x8xf32>, vector<4x8x8xf32> -> vector<4x8x8xf32>
    "tpu.trace_stop"() : () -> ()
    %c0_21 = arith.constant 0 : index
    %c0_22 = arith.constant 0 : index
    %c0_23 = arith.constant 0 : index
    %35 = vector.load %arg7[%c0_21, %c0_22, %c0_23] : memref<4x1x8xf32, #tpu.memory_space<vmem>>, vector<4x1x8xf32>
    %36 = vector.broadcast %35 : vector<4x1x8xf32> to vector<4x8x8xf32>
    %37 = arith.addf %34, %36 : vector<4x8x8xf32>
    %c0_24 = arith.constant 0 : index
    %c0_25 = arith.constant 0 : index
    %c0_26 = arith.constant 0 : index
    %38 = vector.load %arg8[%c0_24, %c0_25, %c0_26] : memref<4x32x8xf32, #tpu.memory_space<vmem>>, vector<4x32x8xf32>
    "tpu.trace_start"() <{level = 10 : i32, message = "htc,hcd->htd"}> : () -> ()
    %cst_27 = arith.constant dense<0.000000e+00> : vector<4x8x8xf32>
    %39 = tpu.matmul %27, %38, %cst_27 {dimension_numbers = #tpu.dot_dimension_numbers<[2], [1], [1], [2], [0, 0, 0, 1, 1, 2], [0], [0]>} : vector<4x8x32xf32>, vector<4x32x8xf32>, vector<4x8x8xf32> -> vector<4x8x8xf32>
    "tpu.trace_stop"() : () -> ()
    %c0_28 = arith.constant 0 : index
    %c0_29 = arith.constant 0 : index
    %c0_30 = arith.constant 0 : index
    %40 = vector.load %arg9[%c0_28, %c0_29, %c0_30] : memref<4x1x8xf32, #tpu.memory_space<vmem>>, vector<4x1x8xf32>
    %41 = vector.broadcast %40 : vector<4x1x8xf32> to vector<4x8x8xf32>
    %42 = arith.addf %39, %41 : vector<4x8x8xf32>
    "tpu.trace_start"() <{level = 10 : i32, message = "htd,hsd->hts"}> : () -> ()
    %cst_31 = arith.constant dense<0.000000e+00> : vector<4x8x8xf32>
    %43 = tpu.matmul %32, %37, %cst_31 {dimension_numbers = #tpu.dot_dimension_numbers<[2], [2], [1], [1], [0, 0, 0, 1, 1, 1], [0], [0]>} : vector<4x8x8xf32>, vector<4x8x8xf32>, vector<4x8x8xf32> -> vector<4x8x8xf32>
    "tpu.trace_stop"() : () -> ()
    %cst_32 = arith.constant dense<0xFF800000> : vector<4x8xf32>
    %44 = vector.multi_reduction <maximumf>, %43, %cst_32 [2] : vector<4x8x8xf32> to vector<4x8xf32>
    %45 = vector.shape_cast %44 : vector<4x8xf32> to vector<4x8x1xf32>
    %46 = vector.broadcast %45 : vector<4x8x1xf32> to vector<4x8x8xf32>
    %47 = arith.subf %43, %46 : vector<4x8x8xf32>
    %48 = math.exp %47 : vector<4x8x8xf32>
    %cst_33 = arith.constant dense<0.000000e+00> : vector<4x8xf32>
    %49 = vector.multi_reduction <add>, %48, %cst_33 [2] : vector<4x8x8xf32> to vector<4x8xf32>
    %50 = vector.shape_cast %49 : vector<4x8xf32> to vector<4x8x1xf32>
    %51 = tpu.reciprocal %50 {approx = true} : vector<4x8x1xf32> -> vector<4x8x1xf32>
    %52 = vector.broadcast %51 : vector<4x8x1xf32> to vector<4x8x8xf32>
    %53 = arith.mulf %48, %52 : vector<4x8x8xf32>
    "tpu.trace_start"() <{level = 10 : i32, message = "hts,hsd->htd"}> : () -> ()
    %cst_34 = arith.constant dense<0.000000e+00> : vector<4x8x8xf32>
    %54 = tpu.matmul %53, %42, %cst_34 {dimension_numbers = #tpu.dot_dimension_numbers<[2], [1], [1], [2], [0, 0, 0, 1, 1, 2], [0], [0]>} : vector<4x8x8xf32>, vector<4x8x8xf32>, vector<4x8x8xf32> -> vector<4x8x8xf32>
    "tpu.trace_stop"() : () -> ()
    %c0_35 = arith.constant 0 : index
    %c0_36 = arith.constant 0 : index
    %c0_37 = arith.constant 0 : index
    %55 = vector.load %arg10[%c0_35, %c0_36, %c0_37] : memref<4x8x32xf32, #tpu.memory_space<vmem>>, vector<4x8x32xf32>
    "tpu.trace_start"() <{level = 10 : i32, message = "htd,hdc->htc"}> : () -> ()
    %cst_38 = arith.constant dense<0.000000e+00> : vector<4x8x32xf32>
    %56 = tpu.matmul %54, %55, %cst_38 {dimension_numbers = #tpu.dot_dimension_numbers<[2], [1], [1], [2], [0, 0, 0, 1, 1, 2], [0], [0]>} : vector<4x8x8xf32>, vector<4x8x32xf32>, vector<4x8x32xf32> -> vector<4x8x32xf32>
    "tpu.trace_stop"() : () -> ()
    %cst_39 = arith.constant dense<0.000000e+00> : vector<8x32xf32>
    %57 = vector.multi_reduction <add>, %56, %cst_39 [0] : vector<4x8x32xf32> to vector<8x32xf32>
    %c0_40 = arith.constant 0 : index
    %c0_41 = arith.constant 0 : index
    %58 = vector.load %arg11[%c0_40, %c0_41] : memref<1x32xf32, #tpu.memory_space<vmem>>, vector<1x32xf32>
    %59 = vector.broadcast %58 : vector<1x32xf32> to vector<8x32xf32>
    %60 = arith.addf %57, %59 : vector<8x32xf32>
    %61 = arith.addf %60, %1 : vector<8x32xf32>
    %c0_42 = arith.constant 0 : index
    %c0_43 = arith.constant 0 : index
    %62 = vector.load %arg12[%c0_42, %c0_43] : memref<1x32xf32, #tpu.memory_space<vmem>>, vector<1x32xf32>
    %c0_44 = arith.constant 0 : index
    %c0_45 = arith.constant 0 : index
    %63 = vector.load %arg13[%c0_44, %c0_45] : memref<1x32xf32, #tpu.memory_space<vmem>>, vector<1x32xf32>
    %cst_46 = arith.constant dense<0.000000e+00> : vector<8xf32>
    %64 = vector.multi_reduction <add>, %61, %cst_46 [1] : vector<8x32xf32> to vector<8xf32>
    %65 = vector.shape_cast %64 : vector<8xf32> to vector<8x1xf32>
    %cst_47 = arith.constant 3.200000e+01 : f32
    %66 = vector.broadcast %cst_47 : f32 to vector<8x1xf32>
    %67 = arith.divf %65, %66 : vector<8x1xf32>
    %68 = vector.broadcast %67 : vector<8x1xf32> to vector<8x32xf32>
    %69 = arith.subf %61, %68 : vector<8x32xf32>
    %70 = arith.mulf %69, %69 : vector<8x32xf32>
    %cst_48 = arith.constant dense<0.000000e+00> : vector<8xf32>
    %71 = vector.multi_reduction <add>, %70, %cst_48 [1] : vector<8x32xf32> to vector<8xf32>
    %72 = vector.shape_cast %71 : vector<8xf32> to vector<8x1xf32>
    %cst_49 = arith.constant 3.200000e+01 : f32
    %73 = vector.broadcast %cst_49 : f32 to vector<8x1xf32>
    %74 = arith.divf %72, %73 : vector<8x1xf32>
    %75 = vector.broadcast %67 : vector<8x1xf32> to vector<8x32xf32>
    %76 = arith.subf %61, %75 : vector<8x32xf32>
    %cst_50 = arith.constant 9.99999974E-6 : f32
    %77 = vector.broadcast %cst_50 : f32 to vector<8x1xf32>
    %78 = arith.addf %74, %77 : vector<8x1xf32>
    %79 = math.rsqrt %78 : vector<8x1xf32>
    %80 = vector.broadcast %79 : vector<8x1xf32> to vector<8x32xf32>
    %81 = arith.mulf %76, %80 : vector<8x32xf32>
    %82 = vector.broadcast %62 : vector<1x32xf32> to vector<8x32xf32>
    %83 = arith.mulf %81, %82 : vector<8x32xf32>
    %84 = vector.broadcast %63 : vector<1x32xf32> to vector<8x32xf32>
    %85 = arith.addf %83, %84 : vector<8x32xf32>
    %c0_51 = arith.constant 0 : index
    %c0_52 = arith.constant 0 : index
    %86 = vector.load %arg14[%c0_51, %c0_52] : memref<32x32xf32, #tpu.memory_space<vmem>>, vector<32x32xf32>
    %cst_53 = arith.constant dense<0.000000e+00> : vector<8x32xf32>
    %87 = tpu.matmul %85, %86, %cst_53 {dimension_numbers = #tpu.dot_dimension_numbers<[1], [0], [0], [1], [0, 0, 1, 1], [], []>} : vector<8x32xf32>, vector<32x32xf32>, vector<8x32xf32> -> vector<8x32xf32>
    %c0_54 = arith.constant 0 : index
    %c0_55 = arith.constant 0 : index
    %88 = vector.load %arg15[%c0_54, %c0_55] : memref<32x32xf32, #tpu.memory_space<vmem>>, vector<32x32xf32>
    %cst_56 = arith.constant dense<0.000000e+00> : vector<8x32xf32>
    %89 = tpu.matmul %85, %88, %cst_56 {dimension_numbers = #tpu.dot_dimension_numbers<[1], [0], [0], [1], [0, 0, 1, 1], [], []>} : vector<8x32xf32>, vector<32x32xf32>, vector<8x32xf32> -> vector<8x32xf32>
    %90 = arith.negf %89 : vector<8x32xf32>
    %91 = math.exp %90 : vector<8x32xf32>
    %cst_57 = arith.constant 1.000000e+00 : f32
    %92 = vector.broadcast %cst_57 : f32 to vector<8x32xf32>
    %93 = arith.addf %92, %91 : vector<8x32xf32>
    %94 = arith.divf %92, %93 : vector<8x32xf32>
    %95 = arith.mulf %87, %94 : vector<8x32xf32>
    %c0_58 = arith.constant 0 : index
    %c0_59 = arith.constant 0 : index
    %96 = vector.load %arg16[%c0_58, %c0_59] : memref<31x32xf32, #tpu.memory_space<vmem>>, vector<31x32xf32>
    %cst_60 = arith.constant 0.000000e+00 : f32
    %97 = vector.broadcast %cst_60 : f32 to vector<15x32xf32>
    %98 = tpu.concatenate %97, %95, %97 in 0 : vector<15x32xf32>, vector<8x32xf32>, vector<15x32xf32> -> vector<38x32xf32>
    %cst_61 = arith.constant 0.000000e+00 : f32
    %99 = vector.broadcast %cst_61 : f32 to vector<8x32xf32>
    %100 = vector.extract_strided_slice %98 {offsets = [8, 0], sizes = [8, 32], strides = [1, 1]} : vector<38x32xf32> to vector<8x32xf32>
    %101 = vector.extract_strided_slice %96 {offsets = [8, 0], sizes = [1, 32], strides = [1, 1]} : vector<31x32xf32> to vector<1x32xf32>
    %102 = vector.shape_cast %101 : vector<1x32xf32> to vector<32xf32>
    %103 = vector.shape_cast %102 : vector<32xf32> to vector<1x32xf32>
    %104 = vector.broadcast %103 : vector<1x32xf32> to vector<8x32xf32>
    %105 = arith.mulf %100, %104 : vector<8x32xf32>
    %106 = arith.addf %99, %105 : vector<8x32xf32>
    %107 = vector.extract_strided_slice %98 {offsets = [9, 0], sizes = [8, 32], strides = [1, 1]} : vector<38x32xf32> to vector<8x32xf32>
    %108 = vector.extract_strided_slice %96 {offsets = [9, 0], sizes = [1, 32], strides = [1, 1]} : vector<31x32xf32> to vector<1x32xf32>
    %109 = vector.shape_cast %108 : vector<1x32xf32> to vector<32xf32>
    %110 = vector.shape_cast %109 : vector<32xf32> to vector<1x32xf32>
    %111 = vector.broadcast %110 : vector<1x32xf32> to vector<8x32xf32>
    %112 = arith.mulf %107, %111 : vector<8x32xf32>
    %113 = arith.addf %106, %112 : vector<8x32xf32>
    %114 = vector.extract_strided_slice %98 {offsets = [10, 0], sizes = [8, 32], strides = [1, 1]} : vector<38x32xf32> to vector<8x32xf32>
    %115 = vector.extract_strided_slice %96 {offsets = [10, 0], sizes = [1, 32], strides = [1, 1]} : vector<31x32xf32> to vector<1x32xf32>
    %116 = vector.shape_cast %115 : vector<1x32xf32> to vector<32xf32>
    %117 = vector.shape_cast %116 : vector<32xf32> to vector<1x32xf32>
    %118 = vector.broadcast %117 : vector<1x32xf32> to vector<8x32xf32>
    %119 = arith.mulf %114, %118 : vector<8x32xf32>
    %120 = arith.addf %113, %119 : vector<8x32xf32>
    %121 = vector.extract_strided_slice %98 {offsets = [11, 0], sizes = [8, 32], strides = [1, 1]} : vector<38x32xf32> to vector<8x32xf32>
    %122 = vector.extract_strided_slice %96 {offsets = [11, 0], sizes = [1, 32], strides = [1, 1]} : vector<31x32xf32> to vector<1x32xf32>
    %123 = vector.shape_cast %122 : vector<1x32xf32> to vector<32xf32>
    %124 = vector.shape_cast %123 : vector<32xf32> to vector<1x32xf32>
    %125 = vector.broadcast %124 : vector<1x32xf32> to vector<8x32xf32>
    %126 = arith.mulf %121, %125 : vector<8x32xf32>
    %127 = arith.addf %120, %126 : vector<8x32xf32>
    %128 = vector.extract_strided_slice %98 {offsets = [12, 0], sizes = [8, 32], strides = [1, 1]} : vector<38x32xf32> to vector<8x32xf32>
    %129 = vector.extract_strided_slice %96 {offsets = [12, 0], sizes = [1, 32], strides = [1, 1]} : vector<31x32xf32> to vector<1x32xf32>
    %130 = vector.shape_cast %129 : vector<1x32xf32> to vector<32xf32>
    %131 = vector.shape_cast %130 : vector<32xf32> to vector<1x32xf32>
    %132 = vector.broadcast %131 : vector<1x32xf32> to vector<8x32xf32>
    %133 = arith.mulf %128, %132 : vector<8x32xf32>
    %134 = arith.addf %127, %133 : vector<8x32xf32>
    %135 = vector.extract_strided_slice %98 {offsets = [13, 0], sizes = [8, 32], strides = [1, 1]} : vector<38x32xf32> to vector<8x32xf32>
    %136 = vector.extract_strided_slice %96 {offsets = [13, 0], sizes = [1, 32], strides = [1, 1]} : vector<31x32xf32> to vector<1x32xf32>
    %137 = vector.shape_cast %136 : vector<1x32xf32> to vector<32xf32>
    %138 = vector.shape_cast %137 : vector<32xf32> to vector<1x32xf32>
    %139 = vector.broadcast %138 : vector<1x32xf32> to vector<8x32xf32>
    %140 = arith.mulf %135, %139 : vector<8x32xf32>
    %141 = arith.addf %134, %140 : vector<8x32xf32>
    %142 = vector.extract_strided_slice %98 {offsets = [14, 0], sizes = [8, 32], strides = [1, 1]} : vector<38x32xf32> to vector<8x32xf32>
    %143 = vector.extract_strided_slice %96 {offsets = [14, 0], sizes = [1, 32], strides = [1, 1]} : vector<31x32xf32> to vector<1x32xf32>
    %144 = vector.shape_cast %143 : vector<1x32xf32> to vector<32xf32>
    %145 = vector.shape_cast %144 : vector<32xf32> to vector<1x32xf32>
    %146 = vector.broadcast %145 : vector<1x32xf32> to vector<8x32xf32>
    %147 = arith.mulf %142, %146 : vector<8x32xf32>
    %148 = arith.addf %141, %147 : vector<8x32xf32>
    %149 = vector.extract_strided_slice %98 {offsets = [15, 0], sizes = [8, 32], strides = [1, 1]} : vector<38x32xf32> to vector<8x32xf32>
    %150 = vector.extract_strided_slice %96 {offsets = [15, 0], sizes = [1, 32], strides = [1, 1]} : vector<31x32xf32> to vector<1x32xf32>
    %151 = vector.shape_cast %150 : vector<1x32xf32> to vector<32xf32>
    %152 = vector.shape_cast %151 : vector<32xf32> to vector<1x32xf32>
    %153 = vector.broadcast %152 : vector<1x32xf32> to vector<8x32xf32>
    %154 = arith.mulf %149, %153 : vector<8x32xf32>
    %155 = arith.addf %148, %154 : vector<8x32xf32>
    %156 = vector.extract_strided_slice %98 {offsets = [16, 0], sizes = [8, 32], strides = [1, 1]} : vector<38x32xf32> to vector<8x32xf32>
    %157 = vector.extract_strided_slice %96 {offsets = [16, 0], sizes = [1, 32], strides = [1, 1]} : vector<31x32xf32> to vector<1x32xf32>
    %158 = vector.shape_cast %157 : vector<1x32xf32> to vector<32xf32>
    %159 = vector.shape_cast %158 : vector<32xf32> to vector<1x32xf32>
    %160 = vector.broadcast %159 : vector<1x32xf32> to vector<8x32xf32>
    %161 = arith.mulf %156, %160 : vector<8x32xf32>
    %162 = arith.addf %155, %161 : vector<8x32xf32>
    %163 = vector.extract_strided_slice %98 {offsets = [17, 0], sizes = [8, 32], strides = [1, 1]} : vector<38x32xf32> to vector<8x32xf32>
    %164 = vector.extract_strided_slice %96 {offsets = [17, 0], sizes = [1, 32], strides = [1, 1]} : vector<31x32xf32> to vector<1x32xf32>
    %165 = vector.shape_cast %164 : vector<1x32xf32> to vector<32xf32>
    %166 = vector.shape_cast %165 : vector<32xf32> to vector<1x32xf32>
    %167 = vector.broadcast %166 : vector<1x32xf32> to vector<8x32xf32>
    %168 = arith.mulf %163, %167 : vector<8x32xf32>
    %169 = arith.addf %162, %168 : vector<8x32xf32>
    %170 = vector.extract_strided_slice %98 {offsets = [18, 0], sizes = [8, 32], strides = [1, 1]} : vector<38x32xf32> to vector<8x32xf32>
    %171 = vector.extract_strided_slice %96 {offsets = [18, 0], sizes = [1, 32], strides = [1, 1]} : vector<31x32xf32> to vector<1x32xf32>
    %172 = vector.shape_cast %171 : vector<1x32xf32> to vector<32xf32>
    %173 = vector.shape_cast %172 : vector<32xf32> to vector<1x32xf32>
    %174 = vector.broadcast %173 : vector<1x32xf32> to vector<8x32xf32>
    %175 = arith.mulf %170, %174 : vector<8x32xf32>
    %176 = arith.addf %169, %175 : vector<8x32xf32>
    %177 = vector.extract_strided_slice %98 {offsets = [19, 0], sizes = [8, 32], strides = [1, 1]} : vector<38x32xf32> to vector<8x32xf32>
    %178 = vector.extract_strided_slice %96 {offsets = [19, 0], sizes = [1, 32], strides = [1, 1]} : vector<31x32xf32> to vector<1x32xf32>
    %179 = vector.shape_cast %178 : vector<1x32xf32> to vector<32xf32>
    %180 = vector.shape_cast %179 : vector<32xf32> to vector<1x32xf32>
    %181 = vector.broadcast %180 : vector<1x32xf32> to vector<8x32xf32>
    %182 = arith.mulf %177, %181 : vector<8x32xf32>
    %183 = arith.addf %176, %182 : vector<8x32xf32>
    %184 = vector.extract_strided_slice %98 {offsets = [20, 0], sizes = [8, 32], strides = [1, 1]} : vector<38x32xf32> to vector<8x32xf32>
    %185 = vector.extract_strided_slice %96 {offsets = [20, 0], sizes = [1, 32], strides = [1, 1]} : vector<31x32xf32> to vector<1x32xf32>
    %186 = vector.shape_cast %185 : vector<1x32xf32> to vector<32xf32>
    %187 = vector.shape_cast %186 : vector<32xf32> to vector<1x32xf32>
    %188 = vector.broadcast %187 : vector<1x32xf32> to vector<8x32xf32>
    %189 = arith.mulf %184, %188 : vector<8x32xf32>
    %190 = arith.addf %183, %189 : vector<8x32xf32>
    %191 = vector.extract_strided_slice %98 {offsets = [21, 0], sizes = [8, 32], strides = [1, 1]} : vector<38x32xf32> to vector<8x32xf32>
    %192 = vector.extract_strided_slice %96 {offsets = [21, 0], sizes = [1, 32], strides = [1, 1]} : vector<31x32xf32> to vector<1x32xf32>
    %193 = vector.shape_cast %192 : vector<1x32xf32> to vector<32xf32>
    %194 = vector.shape_cast %193 : vector<32xf32> to vector<1x32xf32>
    %195 = vector.broadcast %194 : vector<1x32xf32> to vector<8x32xf32>
    %196 = arith.mulf %191, %195 : vector<8x32xf32>
    %197 = arith.addf %190, %196 : vector<8x32xf32>
    %198 = vector.extract_strided_slice %98 {offsets = [22, 0], sizes = [8, 32], strides = [1, 1]} : vector<38x32xf32> to vector<8x32xf32>
    %199 = vector.extract_strided_slice %96 {offsets = [22, 0], sizes = [1, 32], strides = [1, 1]} : vector<31x32xf32> to vector<1x32xf32>
    %200 = vector.shape_cast %199 : vector<1x32xf32> to vector<32xf32>
    %201 = vector.shape_cast %200 : vector<32xf32> to vector<1x32xf32>
    %202 = vector.broadcast %201 : vector<1x32xf32> to vector<8x32xf32>
    %203 = arith.mulf %198, %202 : vector<8x32xf32>
    %204 = arith.addf %197, %203 : vector<8x32xf32>
    %c0_62 = arith.constant 0 : index
    %c0_63 = arith.constant 0 : index
    %205 = vector.load %arg17[%c0_62, %c0_63] : memref<1x32xf32, #tpu.memory_space<vmem>>, vector<1x32xf32>
    %206 = vector.broadcast %205 : vector<1x32xf32> to vector<8x32xf32>
    %207 = arith.addf %204, %206 : vector<8x32xf32>
    %208 = arith.negf %207 : vector<8x32xf32>
    %209 = math.exp %208 : vector<8x32xf32>
    %cst_64 = arith.constant 1.000000e+00 : f32
    %210 = vector.broadcast %cst_64 : f32 to vector<8x32xf32>
    %211 = arith.addf %210, %209 : vector<8x32xf32>
    %212 = arith.divf %210, %211 : vector<8x32xf32>
    %213 = arith.mulf %207, %212 : vector<8x32xf32>
    %c0_65 = arith.constant 0 : index
    %c0_66 = arith.constant 0 : index
    %214 = vector.load %arg18[%c0_65, %c0_66] : memref<32x32xf32, #tpu.memory_space<vmem>>, vector<32x32xf32>
    %cst_67 = arith.constant dense<0.000000e+00> : vector<8x32xf32>
    %215 = tpu.matmul %213, %214, %cst_67 {dimension_numbers = #tpu.dot_dimension_numbers<[1], [0], [0], [1], [0, 0, 1, 1], [], []>} : vector<8x32xf32>, vector<32x32xf32>, vector<8x32xf32> -> vector<8x32xf32>
    %216 = arith.addf %215, %61 : vector<8x32xf32>
    %c0_68 = arith.constant 0 : index
    %c0_69 = arith.constant 0 : index
    %c0_70 = arith.constant 0 : index
    %217 = vector.load %arg19[%c0_68, %c0_69, %c0_70] : memref<1x8x32xf32, #tpu.memory_space<vmem>>, vector<1x8x32xf32>
    %218 = vector.shape_cast %217 : vector<1x8x32xf32> to vector<8x32xf32>
    %219 = vector.shape_cast %216 : vector<8x32xf32> to vector<1x8x32xf32>
    tpu.vector_store %arg19[%c0_68, %c0_69, %c0_70], %219 {strides = array<i32>} : memref<1x8x32xf32, #tpu.memory_space<vmem>>, vector<1x8x32xf32>,
    return
  }
  func.func @transform_0(%arg0: i32) -> (i32, i32, i32) {
    %c0_i32 = arith.constant 0 : i32
    %c0_i32_0 = arith.constant 0 : i32
    %c0_i32_1 = arith.constant 0 : i32
    return %arg0, %c0_i32, %c0_i32_0 : i32, i32, i32
  }
  func.func @transform_1(%arg0: i32) -> (i32, i32) {
    %c0_i32 = arith.constant 0 : i32
    %c0_i32_0 = arith.constant 0 : i32
    %c0_i32_1 = arith.constant 0 : i32
    return %c0_i32, %c0_i32_0 : i32, i32
  }
  func.func @transform_2(%arg0: i32) -> (i32, i32) {
    %c0_i32 = arith.constant 0 : i32
    %c0_i32_0 = arith.constant 0 : i32
    %c0_i32_1 = arith.constant 0 : i32
    return %c0_i32, %c0_i32_0 : i32, i32
  }
  func.func @transform_3(%arg0: i32) -> (i32, i32, i32) {
    %c0_i32 = arith.constant 0 : i32
    %c0_i32_0 = arith.constant 0 : i32
    %c0_i32_1 = arith.constant 0 : i32
    %c0_i32_2 = arith.constant 0 : i32
    return %c0_i32, %c0_i32_0, %c0_i32_1 : i32, i32, i32
  }
  func.func @transform_4(%arg0: i32) -> (i32, i32, i32) {
    %c0_i32 = arith.constant 0 : i32
    %c0_i32_0 = arith.constant 0 : i32
    %c0_i32_1 = arith.constant 0 : i32
    %c0_i32_2 = arith.constant 0 : i32
    return %c0_i32, %c0_i32_0, %c0_i32_1 : i32, i32, i32
  }
  func.func @transform_5(%arg0: i32) -> (i32, i32, i32) {
    %c0_i32 = arith.constant 0 : i32
    %c0_i32_0 = arith.constant 0 : i32
    %c0_i32_1 = arith.constant 0 : i32
    %c0_i32_2 = arith.constant 0 : i32
    return %c0_i32, %c0_i32_0, %c0_i32_1 : i32, i32, i32
  }
  func.func @transform_6(%arg0: i32) -> (i32, i32, i32) {
    %c0_i32 = arith.constant 0 : i32
    %c0_i32_0 = arith.constant 0 : i32
    %c0_i32_1 = arith.constant 0 : i32
    %c0_i32_2 = arith.constant 0 : i32
    return %c0_i32, %c0_i32_0, %c0_i32_1 : i32, i32, i32
  }
  func.func @transform_7(%arg0: i32) -> (i32, i32, i32) {
    %c0_i32 = arith.constant 0 : i32
    %c0_i32_0 = arith.constant 0 : i32
    %c0_i32_1 = arith.constant 0 : i32
    %c0_i32_2 = arith.constant 0 : i32
    return %c0_i32, %c0_i32_0, %c0_i32_1 : i32, i32, i32
  }
  func.func @transform_8(%arg0: i32) -> (i32, i32, i32) {
    %c0_i32 = arith.constant 0 : i32
    %c0_i32_0 = arith.constant 0 : i32
    %c0_i32_1 = arith.constant 0 : i32
    %c0_i32_2 = arith.constant 0 : i32
    return %c0_i32, %c0_i32_0, %c0_i32_1 : i32, i32, i32
  }
  func.func @transform_9(%arg0: i32) -> (i32, i32, i32) {
    %c0_i32 = arith.constant 0 : i32
    %c0_i32_0 = arith.constant 0 : i32
    %c0_i32_1 = arith.constant 0 : i32
    %c0_i32_2 = arith.constant 0 : i32
    return %c0_i32, %c0_i32_0, %c0_i32_1 : i32, i32, i32
  }
  func.func @transform_10(%arg0: i32) -> (i32, i32) {
    %c0_i32 = arith.constant 0 : i32
    %c0_i32_0 = arith.constant 0 : i32
    %c0_i32_1 = arith.constant 0 : i32
    return %c0_i32, %c0_i32_0 : i32, i32
  }
  func.func @transform_11(%arg0: i32) -> (i32, i32) {
    %c0_i32 = arith.constant 0 : i32
    %c0_i32_0 = arith.constant 0 : i32
    %c0_i32_1 = arith.constant 0 : i32
    return %c0_i32, %c0_i32_0 : i32, i32
  }
  func.func @transform_12(%arg0: i32) -> (i32, i32) {
    %c0_i32 = arith.constant 0 : i32
    %c0_i32_0 = arith.constant 0 : i32
    %c0_i32_1 = arith.constant 0 : i32
    return %c0_i32, %c0_i32_0 : i32, i32
  }
  func.func @transform_13(%arg0: i32) -> (i32, i32) {
    %c0_i32 = arith.constant 0 : i32
    %c0_i32_0 = arith.constant 0 : i32
    %c0_i32_1 = arith.constant 0 : i32
    return %c0_i32, %c0_i32_0 : i32, i32
  }
  func.func @transform_14(%arg0: i32) -> (i32, i32) {
    %c0_i32 = arith.constant 0 : i32
    %c0_i32_0 = arith.constant 0 : i32
    %c0_i32_1 = arith.constant 0 : i32
    return %c0_i32, %c0_i32_0 : i32, i32
  }
  func.func @transform_15(%arg0: i32) -> (i32, i32) {
    %c0_i32 = arith.constant 0 : i32
    %c0_i32_0 = arith.constant 0 : i32
    %c0_i32_1 = arith.constant 0 : i32
    return %c0_i32, %c0_i32_0 : i32, i32
  }
  func.func @transform_16(%arg0: i32) -> (i32, i32) {
    %c0_i32 = arith.constant 0 : i32
    %c0_i32_0 = arith.constant 0 : i32
    %c0_i32_1 = arith.constant 0 : i32
    return %c0_i32, %c0_i32_0 : i32, i32
  }
  func.func @transform_17(%arg0: i32) -> (i32, i32) {
    %c0_i32 = arith.constant 0 : i32
    %c0_i32_0 = arith.constant 0 : i32
    %c0_i32_1 = arith.constant 0 : i32
    return %c0_i32, %c0_i32_0 : i32, i32
  }
  func.func @transform_18(%arg0: i32) -> (i32, i32, i32) {
    %c0_i32 = arith.constant 0 : i32
    %c0_i32_0 = arith.constant 0 : i32
    %c0_i32_1 = arith.constant 0 : i32
    return %arg0, %c0_i32, %c0_i32_0 : i32, i32, i32
  }
}

module attributes {stable_mosaic.version = 11 : i64} {
  func.func @ffn_final_ln_kernel(%arg0: i32, %arg1: memref<16x32xf32, #tpu.memory_space<vmem>>, %arg2: memref<1x32xf32, #tpu.memory_space<vmem>>, %arg3: memref<1x32xf32, #tpu.memory_space<vmem>>, %arg4: memref<32x64xf32, #tpu.memory_space<vmem>>, %arg5: memref<1x64xf32, #tpu.memory_space<vmem>>, %arg6: memref<64x32xf32, #tpu.memory_space<vmem>>, %arg7: memref<1x32xf32, #tpu.memory_space<vmem>>, %arg8: memref<1x32xf32, #tpu.memory_space<vmem>>, %arg9: memref<1x32xf32, #tpu.memory_space<vmem>>, %arg10: memref<16x32xf32, #tpu.memory_space<vmem>>, %arg11: memref<16x32xf32, #tpu.memory_space<vmem>>) attributes {dimension_semantics = [#tpu.dimension_semantics<parallel>], iteration_bounds = array<i64: 1>, scalar_prefetch = 0 : i64, scratch_operands = 0 : i64, tpu.core_type = #tpu.core_type<tc>, window_params = [{transform_indices = @transform_0, window_bounds = array<i64: 16, 32>}, {pipeline_mode = #tpu.pipeline_mode<synchronous>, transform_indices = @transform_1, window_bounds = array<i64: 1, 32>}, {pipeline_mode = #tpu.pipeline_mode<synchronous>, transform_indices = @transform_2, window_bounds = array<i64: 1, 32>}, {pipeline_mode = #tpu.pipeline_mode<synchronous>, transform_indices = @transform_3, window_bounds = array<i64: 32, 64>}, {pipeline_mode = #tpu.pipeline_mode<synchronous>, transform_indices = @transform_4, window_bounds = array<i64: 1, 64>}, {pipeline_mode = #tpu.pipeline_mode<synchronous>, transform_indices = @transform_5, window_bounds = array<i64: 64, 32>}, {pipeline_mode = #tpu.pipeline_mode<synchronous>, transform_indices = @transform_6, window_bounds = array<i64: 1, 32>}, {pipeline_mode = #tpu.pipeline_mode<synchronous>, transform_indices = @transform_7, window_bounds = array<i64: 1, 32>}, {pipeline_mode = #tpu.pipeline_mode<synchronous>, transform_indices = @transform_8, window_bounds = array<i64: 1, 32>}, {transform_indices = @transform_9, window_bounds = array<i64: 16, 32>}, {transform_indices = @transform_10, window_bounds = array<i64: 16, 32>}]} {
    %c0 = arith.constant 0 : index
    %c0_0 = arith.constant 0 : index
    %0 = vector.load %arg1[%c0, %c0_0] : memref<16x32xf32, #tpu.memory_space<vmem>>, vector<16x32xf32>
    %c0_1 = arith.constant 0 : index
    %c0_2 = arith.constant 0 : index
    %1 = vector.load %arg2[%c0_1, %c0_2] : memref<1x32xf32, #tpu.memory_space<vmem>>, vector<1x32xf32>
    %c0_3 = arith.constant 0 : index
    %c0_4 = arith.constant 0 : index
    %2 = vector.load %arg3[%c0_3, %c0_4] : memref<1x32xf32, #tpu.memory_space<vmem>>, vector<1x32xf32>
    %cst = arith.constant dense<0.000000e+00> : vector<16xf32>
    %3 = vector.multi_reduction <add>, %0, %cst [1] : vector<16x32xf32> to vector<16xf32>
    %4 = vector.shape_cast %3 : vector<16xf32> to vector<16x1xf32>
    %cst_5 = arith.constant 3.200000e+01 : f32
    %5 = vector.broadcast %cst_5 : f32 to vector<16x1xf32>
    %6 = arith.divf %4, %5 : vector<16x1xf32>
    %7 = vector.broadcast %6 : vector<16x1xf32> to vector<16x32xf32>
    %8 = arith.subf %0, %7 : vector<16x32xf32>
    %9 = arith.mulf %8, %8 : vector<16x32xf32>
    %cst_6 = arith.constant dense<0.000000e+00> : vector<16xf32>
    %10 = vector.multi_reduction <add>, %9, %cst_6 [1] : vector<16x32xf32> to vector<16xf32>
    %11 = vector.shape_cast %10 : vector<16xf32> to vector<16x1xf32>
    %cst_7 = arith.constant 3.200000e+01 : f32
    %12 = vector.broadcast %cst_7 : f32 to vector<16x1xf32>
    %13 = arith.divf %11, %12 : vector<16x1xf32>
    %14 = vector.broadcast %6 : vector<16x1xf32> to vector<16x32xf32>
    %15 = arith.subf %0, %14 : vector<16x32xf32>
    %cst_8 = arith.constant 9.99999974E-6 : f32
    %16 = vector.broadcast %cst_8 : f32 to vector<16x1xf32>
    %17 = arith.addf %13, %16 : vector<16x1xf32>
    %18 = math.rsqrt %17 : vector<16x1xf32>
    %19 = vector.broadcast %18 : vector<16x1xf32> to vector<16x32xf32>
    %20 = arith.mulf %15, %19 : vector<16x32xf32>
    %21 = vector.broadcast %1 : vector<1x32xf32> to vector<16x32xf32>
    %22 = arith.mulf %20, %21 : vector<16x32xf32>
    %23 = vector.broadcast %2 : vector<1x32xf32> to vector<16x32xf32>
    %24 = arith.addf %22, %23 : vector<16x32xf32>
    %c0_9 = arith.constant 0 : index
    %c0_10 = arith.constant 0 : index
    %25 = vector.load %arg4[%c0_9, %c0_10] : memref<32x64xf32, #tpu.memory_space<vmem>>, vector<32x64xf32>
    %cst_11 = arith.constant dense<0.000000e+00> : vector<16x64xf32>
    %26 = tpu.matmul %24, %25, %cst_11 {dimension_numbers = #tpu.dot_dimension_numbers<[1], [0], [0], [1], [0, 0, 1, 1], [], []>} : vector<16x32xf32>, vector<32x64xf32>, vector<16x64xf32> -> vector<16x64xf32>
    %c0_12 = arith.constant 0 : index
    %c0_13 = arith.constant 0 : index
    %27 = vector.load %arg5[%c0_12, %c0_13] : memref<1x64xf32, #tpu.memory_space<vmem>>, vector<1x64xf32>
    %28 = vector.broadcast %27 : vector<1x64xf32> to vector<16x64xf32>
    %29 = arith.addf %26, %28 : vector<16x64xf32>
    %30 = arith.negf %29 : vector<16x64xf32>
    %31 = math.exp %30 : vector<16x64xf32>
    %cst_14 = arith.constant 1.000000e+00 : f32
    %32 = vector.broadcast %cst_14 : f32 to vector<16x64xf32>
    %33 = arith.addf %32, %31 : vector<16x64xf32>
    %34 = arith.divf %32, %33 : vector<16x64xf32>
    %35 = arith.mulf %29, %34 : vector<16x64xf32>
    %c0_15 = arith.constant 0 : index
    %c0_16 = arith.constant 0 : index
    %36 = vector.load %arg6[%c0_15, %c0_16] : memref<64x32xf32, #tpu.memory_space<vmem>>, vector<64x32xf32>
    %cst_17 = arith.constant dense<0.000000e+00> : vector<16x32xf32>
    %37 = tpu.matmul %35, %36, %cst_17 {dimension_numbers = #tpu.dot_dimension_numbers<[1], [0], [0], [1], [0, 0, 1, 1], [], []>} : vector<16x64xf32>, vector<64x32xf32>, vector<16x32xf32> -> vector<16x32xf32>
    %c0_18 = arith.constant 0 : index
    %c0_19 = arith.constant 0 : index
    %38 = vector.load %arg7[%c0_18, %c0_19] : memref<1x32xf32, #tpu.memory_space<vmem>>, vector<1x32xf32>
    %39 = vector.broadcast %38 : vector<1x32xf32> to vector<16x32xf32>
    %40 = arith.addf %37, %39 : vector<16x32xf32>
    %c0_20 = arith.constant 0 : index
    %c0_21 = arith.constant 0 : index
    %41 = vector.load %arg10[%c0_20, %c0_21] : memref<16x32xf32, #tpu.memory_space<vmem>>, vector<16x32xf32>
    tpu.vector_store %arg10[%c0_20, %c0_21], %40 {strides = array<i32>} : memref<16x32xf32, #tpu.memory_space<vmem>>, vector<16x32xf32>,
    %cst_22 = arith.constant 5.000000e-01 : f32
    %42 = vector.broadcast %cst_22 : f32 to vector<16x32xf32>
    %43 = arith.mulf %42, %40 : vector<16x32xf32>
    %44 = arith.addf %43, %0 : vector<16x32xf32>
    %c0_23 = arith.constant 0 : index
    %c0_24 = arith.constant 0 : index
    %45 = vector.load %arg8[%c0_23, %c0_24] : memref<1x32xf32, #tpu.memory_space<vmem>>, vector<1x32xf32>
    %c0_25 = arith.constant 0 : index
    %c0_26 = arith.constant 0 : index
    %46 = vector.load %arg9[%c0_25, %c0_26] : memref<1x32xf32, #tpu.memory_space<vmem>>, vector<1x32xf32>
    %cst_27 = arith.constant dense<0.000000e+00> : vector<16xf32>
    %47 = vector.multi_reduction <add>, %44, %cst_27 [1] : vector<16x32xf32> to vector<16xf32>
    %48 = vector.shape_cast %47 : vector<16xf32> to vector<16x1xf32>
    %cst_28 = arith.constant 3.200000e+01 : f32
    %49 = vector.broadcast %cst_28 : f32 to vector<16x1xf32>
    %50 = arith.divf %48, %49 : vector<16x1xf32>
    %51 = vector.broadcast %50 : vector<16x1xf32> to vector<16x32xf32>
    %52 = arith.subf %44, %51 : vector<16x32xf32>
    %53 = arith.mulf %52, %52 : vector<16x32xf32>
    %cst_29 = arith.constant dense<0.000000e+00> : vector<16xf32>
    %54 = vector.multi_reduction <add>, %53, %cst_29 [1] : vector<16x32xf32> to vector<16xf32>
    %55 = vector.shape_cast %54 : vector<16xf32> to vector<16x1xf32>
    %cst_30 = arith.constant 3.200000e+01 : f32
    %56 = vector.broadcast %cst_30 : f32 to vector<16x1xf32>
    %57 = arith.divf %55, %56 : vector<16x1xf32>
    %58 = vector.broadcast %50 : vector<16x1xf32> to vector<16x32xf32>
    %59 = arith.subf %44, %58 : vector<16x32xf32>
    %cst_31 = arith.constant 9.99999974E-6 : f32
    %60 = vector.broadcast %cst_31 : f32 to vector<16x1xf32>
    %61 = arith.addf %57, %60 : vector<16x1xf32>
    %62 = math.rsqrt %61 : vector<16x1xf32>
    %63 = vector.broadcast %62 : vector<16x1xf32> to vector<16x32xf32>
    %64 = arith.mulf %59, %63 : vector<16x32xf32>
    %65 = vector.broadcast %45 : vector<1x32xf32> to vector<16x32xf32>
    %66 = arith.mulf %64, %65 : vector<16x32xf32>
    %67 = vector.broadcast %46 : vector<1x32xf32> to vector<16x32xf32>
    %68 = arith.addf %66, %67 : vector<16x32xf32>
    %c0_32 = arith.constant 0 : index
    %c0_33 = arith.constant 0 : index
    %69 = vector.load %arg11[%c0_32, %c0_33] : memref<16x32xf32, #tpu.memory_space<vmem>>, vector<16x32xf32>
    tpu.vector_store %arg11[%c0_32, %c0_33], %68 {strides = array<i32>} : memref<16x32xf32, #tpu.memory_space<vmem>>, vector<16x32xf32>,
    return
  }
  func.func @transform_0(%arg0: i32) -> (i32, i32) {
    %c0_i32 = arith.constant 0 : i32
    %c0_i32_0 = arith.constant 0 : i32
    return %arg0, %c0_i32 : i32, i32
  }
  func.func @transform_1(%arg0: i32) -> (i32, i32) {
    %c0_i32 = arith.constant 0 : i32
    %c0_i32_0 = arith.constant 0 : i32
    %c0_i32_1 = arith.constant 0 : i32
    return %c0_i32, %c0_i32_0 : i32, i32
  }
  func.func @transform_2(%arg0: i32) -> (i32, i32) {
    %c0_i32 = arith.constant 0 : i32
    %c0_i32_0 = arith.constant 0 : i32
    %c0_i32_1 = arith.constant 0 : i32
    return %c0_i32, %c0_i32_0 : i32, i32
  }
  func.func @transform_3(%arg0: i32) -> (i32, i32) {
    %c0_i32 = arith.constant 0 : i32
    %c0_i32_0 = arith.constant 0 : i32
    %c0_i32_1 = arith.constant 0 : i32
    return %c0_i32, %c0_i32_0 : i32, i32
  }
  func.func @transform_4(%arg0: i32) -> (i32, i32) {
    %c0_i32 = arith.constant 0 : i32
    %c0_i32_0 = arith.constant 0 : i32
    %c0_i32_1 = arith.constant 0 : i32
    return %c0_i32, %c0_i32_0 : i32, i32
  }
  func.func @transform_5(%arg0: i32) -> (i32, i32) {
    %c0_i32 = arith.constant 0 : i32
    %c0_i32_0 = arith.constant 0 : i32
    %c0_i32_1 = arith.constant 0 : i32
    return %c0_i32, %c0_i32_0 : i32, i32
  }
  func.func @transform_6(%arg0: i32) -> (i32, i32) {
    %c0_i32 = arith.constant 0 : i32
    %c0_i32_0 = arith.constant 0 : i32
    %c0_i32_1 = arith.constant 0 : i32
    return %c0_i32, %c0_i32_0 : i32, i32
  }
  func.func @transform_7(%arg0: i32) -> (i32, i32) {
    %c0_i32 = arith.constant 0 : i32
    %c0_i32_0 = arith.constant 0 : i32
    %c0_i32_1 = arith.constant 0 : i32
    return %c0_i32, %c0_i32_0 : i32, i32
  }
  func.func @transform_8(%arg0: i32) -> (i32, i32) {
    %c0_i32 = arith.constant 0 : i32
    %c0_i32_0 = arith.constant 0 : i32
    %c0_i32_1 = arith.constant 0 : i32
    return %c0_i32, %c0_i32_0 : i32, i32
  }
  func.func @transform_9(%arg0: i32) -> (i32, i32) {
    %c0_i32 = arith.constant 0 : i32
    %c0_i32_0 = arith.constant 0 : i32
    return %arg0, %c0_i32 : i32, i32
  }
  func.func @transform_10(%arg0: i32) -> (i32, i32) {
    %c0_i32 = arith.constant 0 : i32
    %c0_i32_0 = arith.constant 0 : i32
    return %arg0, %c0_i32 : i32, i32
  }
}

</mosaic_0001>

<llo_original>
// kernel: branchformer_layer.3
$region0: #{branchformer_layer.3}
  #allocation0 [shape = 'u32[]', space=smem, size = 0x4, offset = 0x4, fixed_abs, tag = 'smem constant byte address 0x4 - core index']
  #allocation1 [shape = 'u32[72,128]{1,0:T(1,128)}', space=vmem, size = 0x9000, scoped, tag = 'internal scratch']
  %s0 = inlined_call_operand.vmem [shape: f32[16,32], index: 0, kind: input, shape index: {}]
  %s1 = inlined_call_operand.vmem [shape: f32[1,32], index: 1, kind: input, shape index: {}]
  %s2 = inlined_call_operand.vmem [shape: f32[1,32], index: 2, kind: input, shape index: {}]
  %s3 = inlined_call_operand.vmem [shape: f32[32,64], index: 3, kind: input, shape index: {}]
  %s4 = inlined_call_operand.vmem [shape: f32[1,64], index: 4, kind: input, shape index: {}]
  %s5 = inlined_call_operand.vmem [shape: f32[64,32], index: 5, kind: input, shape index: {}]
  %s6 = inlined_call_operand.vmem [shape: f32[1,32], index: 6, kind: input, shape index: {}]
  %s7 = inlined_call_operand.vmem [shape: f32[16,32], index: 7, kind: output, shape index: {}]
  %s8 = sld [smem:[#allocation0]]
  $region38: #{branchformer_layer.3} parent=0
    _
  %s10 = ssub.s32 1, %s8
  %s11 = scalar_select 0, %s10, %s8
  // Predicated region
  $region2: #{branchformer_layer.3} parent=0 // pred_check
    _
  $region3: #{branchformer_layer.3} parent=0 // pred_check_branch
    %13 = sbr.rel (0) target = $region5
  $region4: #{branchformer_layer.3} parent=0 // pred_region
    _
  $region5: #{branchformer_layer.3} parent=0 // pred_fallthru
    _
  // Predicated region
  $region6: #{branchformer_layer.3} parent=0 // pred_check
    _
  $region7: #{branchformer_layer.3} parent=0 // pred_check_branch
    %15 = sbr.rel (0) target = $region9
  $region8: #{branchformer_layer.3} parent=0 // pred_region
    _
  $region9: #{branchformer_layer.3} parent=0 // pred_fallthru
    _
  // Predicated region
  $region10: #{branchformer_layer.3} parent=0 // pred_check
    _
  $region11: #{branchformer_layer.3} parent=0 // pred_check_branch
    %17 = sbr.rel (0) target = $region13
  $region12: #{branchformer_layer.3} parent=0 // pred_region
    _
  $region13: #{branchformer_layer.3} parent=0 // pred_fallthru
    _
  // Predicated region
  $region14: #{branchformer_layer.3} parent=0 // pred_check
    _
  $region15: #{branchformer_layer.3} parent=0 // pred_check_branch
    %19 = sbr.rel (0) target = $region17
  $region16: #{branchformer_layer.3} parent=0 // pred_region
    _
  $region17: #{branchformer_layer.3} parent=0 // pred_fallthru
    _
  // Predicated region
  $region18: #{branchformer_layer.3} parent=0 // pred_check
    _
  $region19: #{branchformer_layer.3} parent=0 // pred_check_branch
    %21 = sbr.rel (0) target = $region21
  $region20: #{branchformer_layer.3} parent=0 // pred_region
    _
  $region21: #{branchformer_layer.3} parent=0 // pred_fallthru
    _
  // Predicated region
  $region22: #{branchformer_layer.3} parent=0 // pred_check
    _
  $region23: #{branchformer_layer.3} parent=0 // pred_check_branch
    %23 = sbr.rel (0) target = $region25
  $region24: #{branchformer_layer.3} parent=0 // pred_region
    _
  $region25: #{branchformer_layer.3} parent=0 // pred_fallthru
    _
  // Predicated region
  $region26: #{branchformer_layer.3} parent=0 // pred_check
    _
  $region27: #{branchformer_layer.3} parent=0 // pred_check_branch
    %25 = sbr.rel (0) target = $region29
  $region28: #{branchformer_layer.3} parent=0 // pred_region
    _
  $region29: #{branchformer_layer.3} parent=0 // pred_fallthru
    _
  %v26 = vld [vmem:[%s0] sm:$0xff]
  %v27 = vld [vmem:[%s0 + $0x8] sm:$0xff]
  %v28 = vld [vmem:[%s1] sm:$0x1]
  %v29 = vld [vmem:[%s2] sm:$0x1]
  %vm30 = vcmask 261120
  %v31 = vsel %vm30, %v26, 0.0
  %32 = vadd.xlane.f32.xlu0 %v31
  %v33 = vpop.xlane.xlu0 %32
  %v34 = vsel %vm30, %v27, 0.0
  %35 = vadd.xlane.f32.xlu0 %v34
  %v36 = vpop.xlane.xlu0 %35
  %v37 = vrcp.pop 32.0
  %v38 = vmul.f32 32.0, %v37
  %v39 = vsub.f32 1.0, %v38
  %v40 = vmul.f32 %v37, %v39
  %v41 = vadd.f32 %v37, %v40
  %vm42 = vweird.f32 %v37
  %v43 = vsel %vm42, %v37, %v41
  %v44 = vmul.f32 %v33, %v43
  %v45 = vmul.f32 %v36, %v43
  %v46 = vsub.f32 %v26, %v44
  %v47 = vsub.f32 %v27, %v45
  %v48 = vmul.f32 %v46, %v46
  %v49 = vmul.f32 %v47, %v47
  %v50 = vsel %vm30, %v48, 0.0
  %51 = vadd.xlane.f32.xlu0 %v50
  %v52 = vpop.xlane.xlu0 %51
  %v53 = vsel %vm30, %v49, 0.0
  %54 = vadd.xlane.f32.xlu0 %v53
  %v55 = vpop.xlane.xlu0 %54
  %v56 = vmul.f32 %v52, %v43
  %v57 = vmul.f32 %v55, %v43
  %v58 = vadd.f32 %v56, 1e-05
  %v59 = vadd.f32 %v57, 1e-05
  %v60 = vrsqrt.pop %v58
  %v61 = vmul.f32 %v60, %v58
  %v62 = vmul.f32 %v61, %v60
  %v63 = vmul.f32 0.5, %v62
  %v64 = vsub.f32 1.5, %v63
  %v65 = vmul.f32 %v60, %v64
  %vm66 = vweird.f32 %v58
  %vm67 = vweird.f32 %v60
  %vm68 = vmor %vm66, %vm67
  %v69 = vsel %vm68, %v60, %v65
  %v70 = vrsqrt.pop %v59
  %v71 = vmul.f32 %v70, %v59
  %v72 = vmul.f32 %v71, %v70
  %v73 = vmul.f32 0.5, %v72
  %v74 = vsub.f32 1.5, %v73
  %v75 = vmul.f32 %v70, %v74
  %vm76 = vweird.f32 %v59
  %vm77 = vweird.f32 %v70
  %vm78 = vmor %vm76, %vm77
  %v79 = vsel %vm78, %v70, %v75
  %v80 = vmul.f32 %v46, %v69
  %v81 = vmul.f32 %v47, %v79
  %v83 = vperm.slane %v28, 0
  %v85 = vmul.f32 %v80, %v83
  %v86 = vmul.f32 %v81, %v83
  %v88 = vperm.slane %v29, 0
  %v90 = vadd.f32 %v85, %v88
  %v91 = vadd.f32 %v86, %v88
  %v92 = vld [vmem:[%s3] sm:$0xff]
  %v93 = vld [vmem:[%s3 + $0x8] sm:$0xff]
  %v94 = vld [vmem:[%s3 + $0x10] sm:$0xff]
  %v95 = vld [vmem:[%s3 + $0x18] sm:$0xff]
  %v96 = vld [vmem:[%s4] sm:$0x1]
  %v98 = vperm.slane %v96, 0
  %v101 = vsel %vm30, %v90, 0
  %v104 = vsel %vm30, %v91, 0
  %106 = vmatpush.msra.mxu0 0.0
  %107 = vmatpush.msra.mxu0 0.0
  %108 = vmatpush.msra.mxu0 0.0
  %109 = vmatpush.msra.mxu0 0.0
  %110 = vmatpush.msra.mxu0 0.0
  %111 = vmatpush.msra.mxu0 0.0
  %112 = vmatpush.msra.mxu0 0.0
  %113 = vmatpush.msra.mxu0 0.0
  %114 = vmatpush.msra.mxu0 0.0
  %115 = vmatpush.msra.mxu0 0.0
  %116 = vmatpush.msra.mxu0 0.0
  %117 = vmatpush.msra.mxu0 0.0
  %118 = vmatpush.msra.mxu0 %v95
  %119 = vmatpush.msra.mxu0 %v94
  %120 = vmatpush.msra.mxu0 %v93
  %121 = vmatpush.msra.mxu0 %v92
  %122 = vmatmul.f32.gmra.mxu0 %v101
  %v123 = vpop.f32.mrf.mxu0
  %v124 = vadd.f32 %v98, %v123
  %125 = vmatmul.f32.gmra.mxu0 %v104
  %v126 = vpop.f32.mrf.mxu0
  %v127 = vadd.f32 %v98, %v126
  %128 = vdwg.mxu0
  %v129 = vxor.u32 %v124, 2147483648
  %v130 = vxor.u32 %v127, 2147483648
  %v131 = vmul.f32 %v129, 1.442695
  %v132 = vpow.pop %v131
  %v133 = vmul.f32 %v130, 1.442695
  %v134 = vpow.pop %v133
  %v135 = vadd.f32 %v132, 1.0
  %v136 = vadd.f32 %v134, 1.0
  %v137 = vrcp.pop %v135
  %v138 = vmul.f32 %v135, %v137
  %v139 = vsub.f32 1.0, %v138
  %v140 = vmul.f32 %v137, %v139
  %v141 = vadd.f32 %v137, %v140
  %vm142 = vweird.f32 %v135
  %vm143 = vweird.f32 %v137
  %vm144 = vmor %vm142, %vm143
  %v145 = vsel %vm144, %v137, %v141
  %v146 = vand.u32 2147483647, %v135
  %vm147 = vcmp.eq.f32.partialorder %v146, 8.507059e+37
  %v148 = vand.u32 %v135, 2147483648
  %v149 = vor.u32 1.1754944e-38, %v148
  %v150 = vsel %vm147, %v149, %v145
  %v151 = vmul.f32 1.0, %v150
  %v152 = vrcp.pop %v136
  %v153 = vmul.f32 %v136, %v152
  %v154 = vsub.f32 1.0, %v153
  %v155 = vmul.f32 %v152, %v154
  %v156 = vadd.f32 %v152, %v155
  %vm157 = vweird.f32 %v136
  %vm158 = vweird.f32 %v152
  %vm159 = vmor %vm157, %vm158
  %v160 = vsel %vm159, %v152, %v156
  %v161 = vand.u32 2147483647, %v136
  %vm162 = vcmp.eq.f32.partialorder %v161, 8.507059e+37
  %v163 = vand.u32 %v136, 2147483648
  %v164 = vor.u32 1.1754944e-38, %v163
  %v165 = vsel %vm162, %v164, %v160
  %v166 = vmul.f32 1.0, %v165
  %v167 = vmul.f32 %v124, %v151
  %v168 = vmul.f32 %v127, %v166
  %v169 = vld [vmem:[%s5] sm:$0xff]
  %v170 = vld [vmem:[%s5 + $0x8] sm:$0xff]
  %v171 = vld [vmem:[%s5 + $0x10] sm:$0xff]
  %v172 = vld [vmem:[%s5 + $0x18] sm:$0xff]
  %v173 = vld [vmem:[%s5 + $0x20] sm:$0xff]
  %v174 = vld [vmem:[%s5 + $0x28] sm:$0xff]
  %v175 = vld [vmem:[%s5 + $0x30] sm:$0xff]
  %v176 = vld [vmem:[%s5 + $0x38] sm:$0xff]
  %v177 = vld [vmem:[%s6] sm:$0x1]
  %v179 = vperm.slane %v177, 0
  %vm181 = vcmask 523264
  %v183 = vsel %vm181, %v167, 0
  %v186 = vsel %vm181, %v168, 0
  %188 = vmatpush.msra.mxu0 0.0
  %189 = vmatpush.msra.mxu0 0.0
  %190 = vmatpush.msra.mxu0 0.0
  %191 = vmatpush.msra.mxu0 0.0
  %192 = vmatpush.msra.mxu0 0.0
  %193 = vmatpush.msra.mxu0 0.0
  %194 = vmatpush.msra.mxu0 0.0
  %195 = vmatpush.msra.mxu0 0.0
  %196 = vmatpush.msra.mxu0 %v176
  %197 = vmatpush.msra.mxu0 %v175
  %198 = vmatpush.msra.mxu0 %v174
  %199 = vmatpush.msra.mxu0 %v173
  %200 = vmatpush.msra.mxu0 %v172
  %201 = vmatpush.msra.mxu0 %v171
  %202 = vmatpush.msra.mxu0 %v170
  %203 = vmatpush.msra.mxu0 %v169
  %204 = vmatmul.f32.gmra.mxu0 %v183
  %v205 = vpop.f32.mrf.mxu0
  %v206 = vadd.f32 %v179, %v205
  %207 = vmatmul.f32.gmra.mxu0 %v186
  %v208 = vpop.f32.mrf.mxu0
  %v209 = vadd.f32 %v179, %v208
  %210 = vdwg.mxu0
  %v211 = vmul.f32 %v206, 0.5
  %v212 = vmul.f32 %v209, 0.5
  %v213 = vadd.f32 %v211, %v26
  %v214 = vadd.f32 %v212, %v27
  %215 = vst.msk [vmem:[%s7] sm:$0xff] %vm30, %v213
  %216 = vst.msk [vmem:[%s7 + $0x8] sm:$0xff] %vm30, %v214
  // Predicated region
  $region30: #{branchformer_layer.3} parent=0 // pred_check
    _
  $region31: #{branchformer_layer.3} parent=0 // pred_check_branch
    %218 = sbr.rel (0) target = $region33
  $region32: #{branchformer_layer.3} parent=0 // pred_region
    _
  $region33: #{branchformer_layer.3} parent=0 // pred_fallthru
    _
  // Predicated region
  $region34: #{branchformer_layer.3} parent=0 // pred_check
    _
  $region35: #{branchformer_layer.3} parent=0 // pred_check_branch
    %220 = sbr.rel (0) target = $region37
  $region36: #{branchformer_layer.3} parent=0 // pred_region
    _
  $region37: #{branchformer_layer.3} parent=0 // pred_fallthru
    _

// kernel: branchformer_layer.5
$region0: #{branchformer_layer.5}
  #allocation0 [shape = 'u32[]', space=smem, size = 0x4, offset = 0x4, fixed_abs, tag = 'smem constant byte address 0x4 - core index']
  #allocation1 [shape = 'u32[72,128]{1,0:T(1,128)}', space=vmem, size = 0x9000, scoped, tag = 'internal scratch']
  %s0 = inlined_call_operand.vmem [shape: f32[16,32], index: 0, kind: input, shape index: {}]
  %s1 = inlined_call_operand.vmem [shape: f32[1,32], index: 1, kind: input, shape index: {}]
  %s2 = inlined_call_operand.vmem [shape: f32[1,32], index: 2, kind: input, shape index: {}]
  %s3 = inlined_call_operand.vmem [shape: f32[32,64], index: 3, kind: input, shape index: {}]
  %s4 = inlined_call_operand.vmem [shape: f32[1,64], index: 4, kind: input, shape index: {}]
  %s5 = inlined_call_operand.vmem [shape: f32[64,32], index: 5, kind: input, shape index: {}]
  %s6 = inlined_call_operand.vmem [shape: f32[1,32], index: 6, kind: input, shape index: {}]
  %s7 = inlined_call_operand.vmem [shape: f32[1,32], index: 7, kind: input, shape index: {}]
  %s8 = inlined_call_operand.vmem [shape: f32[1,32], index: 8, kind: input, shape index: {}]
  %s9 = inlined_call_operand.hbm [shape: f32[16,32], index: 9, kind: output, shape index: {0}]
  %s10 = inlined_call_operand.hbm [shape: f32[16,32], index: 10, kind: output, shape index: {1}]
  %11 = xla_tuple %s9, %s10
  %s12 = sld [smem:[#allocation0]]
  $region54: #{branchformer_layer.5} parent=0
    _
  %s14 = ssub.s32 1, %s12
  %s15 = scalar_select 0, %s14, %s12
  $region1: #{branchformer_layer.5} parent=0
    #allocation2 [shape = 'u8[8192]{0}', space=vmem, size = 0x2000, scoped, tag = 'output window, operand 0, single buffered']
    #allocation3 [shape = 's32[1]{0}', space=sflag, size = 0x4, scoped, tag = 'scoped memory for branchformer_layer.5']
    #allocation4 [shape = 'u8[8192]{0}', space=vmem, size = 0x2000, scoped, tag = 'output window, operand 1, single buffered']
    #allocation5 [shape = 's32[1]{0}', space=sflag, size = 0x4, scoped, tag = 'scoped memory for branchformer_layer.5']
    %16 = vsyncpa [#allocation3], 0
    %17 = vsyncpa [#allocation5], 0
    // Predicated region
    $region2: #{branchformer_layer.5} parent=1 // pred_check
      _
    $region3: #{branchformer_layer.5} parent=1 // pred_check_branch
      %19 = sbr.rel (0) target = $region5
    $region4: #{branchformer_layer.5} parent=1 // pred_region
      _
    $region5: #{branchformer_layer.5} parent=1 // pred_fallthru
      _
    // Predicated region
    $region6: #{branchformer_layer.5} parent=1 // pred_check
      _
    $region7: #{branchformer_layer.5} parent=1 // pred_check_branch
      %21 = sbr.rel (0) target = $region9
    $region8: #{branchformer_layer.5} parent=1 // pred_region
      _
    $region9: #{branchformer_layer.5} parent=1 // pred_fallthru
      _
    // Predicated region
    $region10: #{branchformer_layer.5} parent=1 // pred_check
      _
    $region11: #{branchformer_layer.5} parent=1 // pred_check_branch
      %23 = sbr.rel (0) target = $region13
    $region12: #{branchformer_layer.5} parent=1 // pred_region
      _
    $region13: #{branchformer_layer.5} parent=1 // pred_fallthru
      _
    // Predicated region
    $region14: #{branchformer_layer.5} parent=1 // pred_check
      _
    $region15: #{branchformer_layer.5} parent=1 // pred_check_branch
      %25 = sbr.rel (0) target = $region17
    $region16: #{branchformer_layer.5} parent=1 // pred_region
      _
    $region17: #{branchformer_layer.5} parent=1 // pred_fallthru
      _
    // Predicated region
    $region18: #{branchformer_layer.5} parent=1 // pred_check
      _
    $region19: #{branchformer_layer.5} parent=1 // pred_check_branch
      %27 = sbr.rel (0) target = $region21
    $region20: #{branchformer_layer.5} parent=1 // pred_region
      _
    $region21: #{branchformer_layer.5} parent=1 // pred_fallthru
      _
    // Predicated region
    $region22: #{branchformer_layer.5} parent=1 // pred_check
      _
    $region23: #{branchformer_layer.5} parent=1 // pred_check_branch
      %29 = sbr.rel (0) target = $region25
    $region24: #{branchformer_layer.5} parent=1 // pred_region
      _
    $region25: #{branchformer_layer.5} parent=1 // pred_fallthru
      _
    // Predicated region
    $region26: #{branchformer_layer.5} parent=1 // pred_check
      _
    $region27: #{branchformer_layer.5} parent=1 // pred_check_branch
      %31 = sbr.rel (0) target = $region29
    $region28: #{branchformer_layer.5} parent=1 // pred_region
      _
    $region29: #{branchformer_layer.5} parent=1 // pred_fallthru
      _
    // Predicated region
    $region30: #{branchformer_layer.5} parent=1 // pred_check
      _
    $region31: #{branchformer_layer.5} parent=1 // pred_check_branch
      %33 = sbr.rel (0) target = $region33
    $region32: #{branchformer_layer.5} parent=1 // pred_region
      _
    $region33: #{branchformer_layer.5} parent=1 // pred_fallthru
      _
    // Predicated region
    $region34: #{branchformer_layer.5} parent=1 // pred_check
      _
    $region35: #{branchformer_layer.5} parent=1 // pred_check_branch
      %35 = sbr.rel (0) target = $region37
    $region36: #{branchformer_layer.5} parent=1 // pred_region
      _
    $region37: #{branchformer_layer.5} parent=1 // pred_fallthru
      _
    %v36 = vld [vmem:[%s0] sm:$0xff]
    %v37 = vld [vmem:[%s0 + $0x8] sm:$0xff]
    %v38 = vld [vmem:[%s1] sm:$0x1]
    %v39 = vld [vmem:[%s2] sm:$0x1]
    %vm40 = vcmask 261120
    %v41 = vsel %vm40, %v36, 0.0
    %42 = vadd.xlane.f32.xlu0 %v41
    %v43 = vpop.xlane.xlu0 %42
    %v44 = vsel %vm40, %v37, 0.0
    %45 = vadd.xlane.f32.xlu0 %v44
    %v46 = vpop.xlane.xlu0 %45
    %v47 = vrcp.pop 32.0
    %v48 = vmul.f32 32.0, %v47
    %v49 = vsub.f32 1.0, %v48
    %v50 = vmul.f32 %v47, %v49
    %v51 = vadd.f32 %v47, %v50
    %vm52 = vweird.f32 %v47
    %v53 = vsel %vm52, %v47, %v51
    %v54 = vmul.f32 %v43, %v53
    %v55 = vmul.f32 %v46, %v53
    %v56 = vsub.f32 %v36, %v54
    %v57 = vsub.f32 %v37, %v55
    %v58 = vmul.f32 %v56, %v56
    %v59 = vmul.f32 %v57, %v57
    %v60 = vsel %vm40, %v58, 0.0
    %61 = vadd.xlane.f32.xlu0 %v60
    %v62 = vpop.xlane.xlu0 %61
    %v63 = vsel %vm40, %v59, 0.0
    %64 = vadd.xlane.f32.xlu0 %v63
    %v65 = vpop.xlane.xlu0 %64
    %v66 = vmul.f32 %v62, %v53
    %v67 = vmul.f32 %v65, %v53
    %v68 = vadd.f32 %v66, 1e-05
    %v69 = vadd.f32 %v67, 1e-05
    %v70 = vrsqrt.pop %v68
    %v71 = vmul.f32 %v70, %v68
    %v72 = vmul.f32 %v71, %v70
    %v73 = vmul.f32 0.5, %v72
    %v74 = vsub.f32 1.5, %v73
    %v75 = vmul.f32 %v70, %v74
    %vm76 = vweird.f32 %v68
    %vm77 = vweird.f32 %v70
    %vm78 = vmor %vm76, %vm77
    %v79 = vsel %vm78, %v70, %v75
    %v80 = vrsqrt.pop %v69
    %v81 = vmul.f32 %v80, %v69
    %v82 = vmul.f32 %v81, %v80
    %v83 = vmul.f32 0.5, %v82
    %v84 = vsub.f32 1.5, %v83
    %v85 = vmul.f32 %v80, %v84
    %vm86 = vweird.f32 %v69
    %vm87 = vweird.f32 %v80
    %vm88 = vmor %vm86, %vm87
    %v89 = vsel %vm88, %v80, %v85
    %v90 = vmul.f32 %v56, %v79
    %v91 = vmul.f32 %v57, %v89
    %v93 = vperm.slane %v38, 0
    %v95 = vmul.f32 %v90, %v93
    %v96 = vmul.f32 %v91, %v93
    %v98 = vperm.slane %v39, 0
    %v100 = vadd.f32 %v95, %v98
    %v101 = vadd.f32 %v96, %v98
    %v102 = vld [vmem:[%s3] sm:$0xff]
    %v103 = vld [vmem:[%s3 + $0x8] sm:$0xff]
    %v104 = vld [vmem:[%s3 + $0x10] sm:$0xff]
    %v105 = vld [vmem:[%s3 + $0x18] sm:$0xff]
    %v106 = vld [vmem:[%s4] sm:$0x1]
    %v108 = vperm.slane %v106, 0
    %v111 = vsel %vm40, %v100, 0
    %v114 = vsel %vm40, %v101, 0
    %116 = vmatpush.msra.mxu0 0.0
    %117 = vmatpush.msra.mxu0 0.0
    %118 = vmatpush.msra.mxu0 0.0
    %119 = vmatpush.msra.mxu0 0.0
    %120 = vmatpush.msra.mxu0 0.0
    %121 = vmatpush.msra.mxu0 0.0
    %122 = vmatpush.msra.mxu0 0.0
    %123 = vmatpush.msra.mxu0 0.0
    %124 = vmatpush.msra.mxu0 0.0
    %125 = vmatpush.msra.mxu0 0.0
    %126 = vmatpush.msra.mxu0 0.0
    %127 = vmatpush.msra.mxu0 0.0
    %128 = vmatpush.msra.mxu0 %v105
    %129 = vmatpush.msra.mxu0 %v104
    %130 = vmatpush.msra.mxu0 %v103
    %131 = vmatpush.msra.mxu0 %v102
    %132 = vmatmul.f32.gmra.mxu0 %v111
    %v133 = vpop.f32.mrf.mxu0
    %v134 = vadd.f32 %v108, %v133
    %135 = vmatmul.f32.gmra.mxu0 %v114
    %v136 = vpop.f32.mrf.mxu0
    %v137 = vadd.f32 %v108, %v136
    %138 = vdwg.mxu0
    %v139 = vxor.u32 %v134, 2147483648
    %v140 = vxor.u32 %v137, 2147483648
    %v141 = vmul.f32 %v139, 1.442695
    %v142 = vpow.pop %v141
    %v143 = vmul.f32 %v140, 1.442695
    %v144 = vpow.pop %v143
    %v145 = vadd.f32 %v142, 1.0
    %v146 = vadd.f32 %v144, 1.0
    %v147 = vrcp.pop %v145
    %v148 = vmul.f32 %v145, %v147
    %v149 = vsub.f32 1.0, %v148
    %v150 = vmul.f32 %v147, %v149
    %v151 = vadd.f32 %v147, %v150
    %vm152 = vweird.f32 %v145
    %vm153 = vweird.f32 %v147
    %vm154 = vmor %vm152, %vm153
    %v155 = vsel %vm154, %v147, %v151
    %v156 = vand.u32 2147483647, %v145
    %vm157 = vcmp.eq.f32.partialorder %v156, 8.507059e+37
    %v158 = vand.u32 %v145, 2147483648
    %v159 = vor.u32 1.1754944e-38, %v158
    %v160 = vsel %vm157, %v159, %v155
    %v161 = vmul.f32 1.0, %v160
    %v162 = vrcp.pop %v146
    %v163 = vmul.f32 %v146, %v162
    %v164 = vsub.f32 1.0, %v163
    %v165 = vmul.f32 %v162, %v164
    %v166 = vadd.f32 %v162, %v165
    %vm167 = vweird.f32 %v146
    %vm168 = vweird.f32 %v162
    %vm169 = vmor %vm167, %vm168
    %v170 = vsel %vm169, %v162, %v166
    %v171 = vand.u32 2147483647, %v146
    %vm172 = vcmp.eq.f32.partialorder %v171, 8.507059e+37
    %v173 = vand.u32 %v146, 2147483648
    %v174 = vor.u32 1.1754944e-38, %v173
    %v175 = vsel %vm172, %v174, %v170
    %v176 = vmul.f32 1.0, %v175
    %v177 = vmul.f32 %v134, %v161
    %v178 = vmul.f32 %v137, %v176
    %v179 = vld [vmem:[%s5] sm:$0xff]
    %v180 = vld [vmem:[%s5 + $0x8] sm:$0xff]
    %v181 = vld [vmem:[%s5 + $0x10] sm:$0xff]
    %v182 = vld [vmem:[%s5 + $0x18] sm:$0xff]
    %v183 = vld [vmem:[%s5 + $0x20] sm:$0xff]
    %v184 = vld [vmem:[%s5 + $0x28] sm:$0xff]
    %v185 = vld [vmem:[%s5 + $0x30] sm:$0xff]
    %v186 = vld [vmem:[%s5 + $0x38] sm:$0xff]
    %v187 = vld [vmem:[%s6] sm:$0x1]
    %v189 = vperm.slane %v187, 0
    %vm191 = vcmask 523264
    %v193 = vsel %vm191, %v177, 0
    %v196 = vsel %vm191, %v178, 0
    %198 = vmatpush.msra.mxu0 0.0
    %199 = vmatpush.msra.mxu0 0.0
    %200 = vmatpush.msra.mxu0 0.0
    %201 = vmatpush.msra.mxu0 0.0
    %202 = vmatpush.msra.mxu0 0.0
    %203 = vmatpush.msra.mxu0 0.0
    %204 = vmatpush.msra.mxu0 0.0
    %205 = vmatpush.msra.mxu0 0.0
    %206 = vmatpush.msra.mxu0 %v186
    %207 = vmatpush.msra.mxu0 %v185
    %208 = vmatpush.msra.mxu0 %v184
    %209 = vmatpush.msra.mxu0 %v183
    %210 = vmatpush.msra.mxu0 %v182
    %211 = vmatpush.msra.mxu0 %v181
    %212 = vmatpush.msra.mxu0 %v180
    %213 = vmatpush.msra.mxu0 %v179
    %214 = vmatmul.f32.gmra.mxu0 %v193
    %v215 = vpop.f32.mrf.mxu0
    %v216 = vadd.f32 %v189, %v215
    %217 = vmatmul.f32.gmra.mxu0 %v196
    %v218 = vpop.f32.mrf.mxu0
    %v219 = vadd.f32 %v189, %v218
    %220 = vdwg.mxu0
    %221 = vst.msk [vmem:[#allocation2] sm:$0xff] %vm40, %v216
    %222 = vst.msk [vmem:[#allocation2 + $0x8] sm:$0xff] %vm40, %v219
    %v223 = vmul.f32 %v216, 0.5
    %v224 = vmul.f32 %v219, 0.5
    %v225 = vadd.f32 %v223, %v36
    %v226 = vadd.f32 %v224, %v37
    %v227 = vld [vmem:[%s7] sm:$0x1]
    %v228 = vld [vmem:[%s8] sm:$0x1]
    %v229 = vsel %vm40, %v225, 0.0
    %230 = vadd.xlane.f32.xlu0 %v229
    %v231 = vpop.xlane.xlu0 %230
    %v232 = vsel %vm40, %v226, 0.0
    %233 = vadd.xlane.f32.xlu0 %v232
    %v234 = vpop.xlane.xlu0 %233
    %v235 = vmul.f32 %v231, %v53
    %v236 = vmul.f32 %v234, %v53
    %v237 = vsub.f32 %v225, %v235
    %v238 = vsub.f32 %v226, %v236
    %v239 = vmul.f32 %v237, %v237
    %v240 = vmul.f32 %v238, %v238
    %v241 = vsel %vm40, %v239, 0.0
    %242 = vadd.xlane.f32.xlu0 %v241
    %v243 = vpop.xlane.xlu0 %242
    %v244 = vsel %vm40, %v240, 0.0
    %245 = vadd.xlane.f32.xlu0 %v244
    %v246 = vpop.xlane.xlu0 %245
    %v247 = vmul.f32 %v243, %v53
    %v248 = vmul.f32 %v246, %v53
    %v249 = vadd.f32 %v247, 1e-05
    %v250 = vadd.f32 %v248, 1e-05
    %v251 = vrsqrt.pop %v249
    %v252 = vmul.f32 %v251, %v249
    %v253 = vmul.f32 %v252, %v251
    %v254 = vmul.f32 0.5, %v253
    %v255 = vsub.f32 1.5, %v254
    %v256 = vmul.f32 %v251, %v255
    %vm257 = vweird.f32 %v249
    %vm258 = vweird.f32 %v251
    %vm259 = vmor %vm257, %vm258
    %v260 = vsel %vm259, %v251, %v256
    %v261 = vrsqrt.pop %v250
    %v262 = vmul.f32 %v261, %v250
    %v263 = vmul.f32 %v262, %v261
    %v264 = vmul.f32 0.5, %v263
    %v265 = vsub.f32 1.5, %v264
    %v266 = vmul.f32 %v261, %v265
    %vm267 = vweird.f32 %v250
    %vm268 = vweird.f32 %v261
    %vm269 = vmor %vm267, %vm268
    %v270 = vsel %vm269, %v261, %v266
    %v271 = vmul.f32 %v237, %v260
    %v272 = vmul.f32 %v238, %v270
    %v274 = vperm.slane %v227, 0
    %v276 = vmul.f32 %v271, %v274
    %v277 = vmul.f32 %v272, %v274
    %v279 = vperm.slane %v228, 0
    %v281 = vadd.f32 %v276, %v279
    %v282 = vadd.f32 %v277, %v279
    %283 = vst.msk [vmem:[#allocation4] sm:$0xff] %vm40, %v281
    %284 = vst.msk [vmem:[#allocation4 + $0x8] sm:$0xff] %vm40, %v282
    // Predicated region
    $region38: #{branchformer_layer.5} parent=1 // pred_check
      _
    $region39: #{branchformer_layer.5} parent=1 // pred_check_branch
      %286 = sbr.rel (0) target = $region41
    $region40: #{branchformer_layer.5} parent=1 // pred_region
      %288 = vsyncadd [#allocation3], 0
      %s289 = sshll.u32 [#allocation2], 4
      %s290 = int_to_ptr.vmem [resolvable:$true] %s289
      %s291 = sshll.u32 %s9, 4
      %s292 = int_to_ptr.hbm [resolvable:$true] %s291
      %297 = dma.vmem_to_hbm [thread:$0]  %s290, 256, %s292, [#allocation3], 128, 128, 8
    $region41: #{branchformer_layer.5} parent=1 // pred_fallthru
      _
    // Predicated region
    $region42: #{branchformer_layer.5} parent=1 // pred_check
      _
    $region43: #{branchformer_layer.5} parent=1 // pred_check_branch
      %299 = sbr.rel (0) target = $region45
    $region44: #{branchformer_layer.5} parent=1 // pred_region
      %301 = vsyncadd [#allocation5], 0
      %s302 = sshll.u32 [#allocation4], 4
      %s303 = int_to_ptr.vmem [resolvable:$true] %s302
      %s304 = sshll.u32 %s10, 4
      %s305 = int_to_ptr.hbm [resolvable:$true] %s304
      %310 = dma.vmem_to_hbm [thread:$0]  %s303, 256, %s305, [#allocation5], 128, 128, 8
    $region45: #{branchformer_layer.5} parent=1 // pred_fallthru
      _
    // Predicated region
    $region46: #{branchformer_layer.5} parent=1 // pred_check
      _
    $region47: #{branchformer_layer.5} parent=1 // pred_check_branch
      %312 = sbr.rel (0) target = $region49
    $region48: #{branchformer_layer.5} parent=1 // pred_region
      %314 = dma.done [#allocation3], 256
    $region49: #{branchformer_layer.5} parent=1 // pred_fallthru
      _
    // Predicated region
    $region50: #{branchformer_layer.5} parent=1 // pred_check
      _
    $region51: #{branchformer_layer.5} parent=1 // pred_check_branch
      %316 = sbr.rel (0) target = $region53
    $region52: #{branchformer_layer.5} parent=1 // pred_region
      %318 = dma.done [#allocation5], 256
    $region53: #{branchformer_layer.5} parent=1 // pred_fallthru
      _
    %319 = vsyncpa [#allocation3], 1
    %320 = vsyncpa [#allocation5], 1

// kernel: branchformer_layer.4
$region0: #{branchformer_layer.4}
  #allocation0 [shape = 'u32[]', space=smem, size = 0x4, offset = 0x4, fixed_abs, tag = 'smem constant byte address 0x4 - core index']
  #allocation1 [shape = 'u32[72,128]{1,0:T(1,128)}', space=vmem, size = 0x9000, scoped, tag = 'internal scratch']
  %s0 = inlined_call_operand.vmem [shape: f32[2,8,32], index: 0, kind: input, shape index: {}]
  %s1 = inlined_call_operand.vmem [shape: f32[1,32], index: 1, kind: input, shape index: {}]
  %s2 = inlined_call_operand.vmem [shape: f32[1,32], index: 2, kind: input, shape index: {}]
  %s3 = inlined_call_operand.vmem [shape: f32[4,32,8], index: 3, kind: input, shape index: {}]
  %s4 = inlined_call_operand.vmem [shape: f32[4,1,8], index: 4, kind: input, shape index: {}]
  %s5 = inlined_call_operand.vmem [shape: f32[4,32,8], index: 5, kind: input, shape index: {}]
  %s6 = inlined_call_operand.vmem [shape: f32[4,1,8], index: 6, kind: input, shape index: {}]
  %s7 = inlined_call_operand.vmem [shape: f32[4,32,8], index: 7, kind: input, shape index: {}]
  %s8 = inlined_call_operand.vmem [shape: f32[4,1,8], index: 8, kind: input, shape index: {}]
  %s9 = inlined_call_operand.vmem [shape: f32[4,8,32], index: 9, kind: input, shape index: {}]
  %s10 = inlined_call_operand.vmem [shape: f32[1,32], index: 10, kind: input, shape index: {}]
  %s11 = inlined_call_operand.vmem [shape: f32[1,32], index: 11, kind: input, shape index: {}]
  %s12 = inlined_call_operand.vmem [shape: f32[1,32], index: 12, kind: input, shape index: {}]
  %s13 = inlined_call_operand.vmem [shape: f32[32,32], index: 13, kind: input, shape index: {}]
  %s14 = inlined_call_operand.vmem [shape: f32[32,32], index: 14, kind: input, shape index: {}]
  %s15 = inlined_call_operand.vmem [shape: f32[31,32], index: 15, kind: input, shape index: {}]
  %s16 = inlined_call_operand.vmem [shape: f32[1,32], index: 16, kind: input, shape index: {}]
  %s17 = inlined_call_operand.vmem [shape: f32[32,32], index: 17, kind: input, shape index: {}]
  %s18 = inlined_call_operand.vmem [shape: f32[2,8,32], index: 18, kind: output, shape index: {}]
  %s19 = sld [smem:[#allocation0]]
  $region105: #{branchformer_layer.4} parent=0
    _
  %s21 = ssub.s32 1, %s19
  %s22 = scalar_select 0, %s21, %s19
  loop: start=0, step=1, limit=4
  $region2: #{branchformer_layer.4} parent=0 // loop_pre_header
    _
  $region3: #{branchformer_layer.4} parent=0 // loop_header
    %s24 = sphi 0, %s28
    %p25 = scmp.ge.s32.totalorder %s24, 4
    %s34 = sphi 0, %s36
    %s37 = sphi 0, %s34
    %s38 = sphi 0, %s37
    %s54 = sphi 0, %s38
    %s58 = sphi 0, %s58
    %s60 = sphi 0, %s58
    %s61 = sphi 0, %s60
    %s75 = sphi 0, %s61
    %s79 = sphi 0, %s79
    %s81 = sphi 0, %s79
    %s82 = sphi 0, %s81
    %s96 = sphi 0, %s82
    %s100 = sphi 0, %s100
    %s102 = sphi 0, %s100
    %s103 = sphi 0, %s102
    %s117 = sphi 0, %s103
    %s121 = sphi 0, %s121
    %s123 = sphi 0, %s121
    %s124 = sphi 0, %s123
    %s138 = sphi 0, %s124
    %s142 = sphi 0, %s142
    %s144 = sphi 0, %s142
    %s145 = sphi 0, %s144
    %s159 = sphi 0, %s145
    %s163 = sphi 0, %s163
    %s165 = sphi 0, %s163
    %s166 = sphi 0, %s165
    %s180 = sphi 0, %s166
    %s184 = sphi 0, %s184
    %s186 = sphi 0, %s184
    %s187 = sphi 0, %s186
    %s201 = sphi 0, %s187
    %s205 = sphi 0, %s205
    %s207 = sphi 0, %s205
    %s208 = sphi 0, %s207
    %s222 = sphi 0, %s208
    %s226 = sphi 0, %s226
    %s228 = sphi 0, %s226
    %s229 = sphi 0, %s228
    %s243 = sphi 0, %s229
    %s247 = sphi 0, %s247
    %s249 = sphi 0, %s247
    %s250 = sphi 0, %s249
    %s264 = sphi 0, %s250
    %s268 = sphi 0, %s268
    %s270 = sphi 0, %s268
    %s271 = sphi 0, %s270
    %s285 = sphi 0, %s271
    %s289 = sphi 0, %s289
    %s291 = sphi 0, %s289
    %s292 = sphi 0, %s291
    %s306 = sphi 0, %s292
    %s310 = sphi 0, %s310
    %s312 = sphi 0, %s310
    %s313 = sphi 0, %s312
    %s327 = sphi 0, %s313
    %s331 = sphi 0, %s331
    %s333 = sphi 0, %s331
    %s334 = sphi 0, %s333
    %s348 = sphi 0, %s334
    %s352 = sphi 0, %s352
    %s354 = sphi 0, %s352
    %s355 = sphi 0, %s354
    %s369 = sphi 0, %s355
    %s373 = sphi 0, %s373
    %s375 = sphi 0, %s373
    %s376 = sphi 0, %s375
    %s390 = sphi 0, %s376
    %s394 = sphi 0, %s394
    %s396 = sphi 0, %s394
    %s397 = sphi 0, %s396
    %s411 = sphi 0, %s397
    %s417 = sphi 0, %s419
    %s420 = sphi 0, %s417
    %s421 = sphi 0, %s420
    %s437 = sphi 0, %s421
  $region4: #{branchformer_layer.4} parent=0 // loop_header_branch
    %27 = sbr.rel (%p25) target = $region8
  $region5: #{branchformer_layer.4} parent=0 // loop_body
    %s29 = ssub.s32 %s24, 1
    %s30 = ssub.s32 %s24, 2
    %s31 = sadd.s32 %s24, 1
    %s32 = ssub.s32 %s24, %s31
    %p33 = scmp.eq.s32.totalorder %s32, 0
    %s35 = sadd.s32 %s34, 1
    %s36 = scalar_select %p33, %s34, %s35
    %p39 = pneg %p33
    %p40 = scmp.eq.s32.totalorder %s24, 1
    %p41 = por %p39, %p40
    %p42 = scmp.ne.s32.totalorder %s34, %s37
    %p43 = scmp.eq.s32.totalorder %s24, 0
    %p44 = por %p42, %p43
    %p45 = scmp.ne.s32.totalorder %s34, %s37
    %p46 = scmp.eq.s32.totalorder %s29, 1
    %p47 = por %p45, %p46
    %p48 = scmp.ne.s32.totalorder %s37, %s38
    %p49 = scmp.eq.s32.totalorder %s29, 0
    %p50 = por %p48, %p49
    %p51 = scmp.ne.s32.totalorder %s37, %s38
    %p52 = scmp.eq.s32.totalorder %s30, 1
    %p53 = por %p51, %p52
    %p55 = scmp.ne.s32.totalorder %s38, %s54
    %p56 = scmp.eq.s32.totalorder %s30, 0
    %p57 = por %p55, %p56
    %s59 = sadd.s32 %s58, 1
    %p62 = scmp.eq.s32.totalorder %s24, 1
    %p63 = scmp.ne.s32.totalorder %s58, %s60
    %p64 = scmp.eq.s32.totalorder %s24, 0
    %p65 = por %p63, %p64
    %p66 = scmp.ne.s32.totalorder %s58, %s60
    %p67 = scmp.eq.s32.totalorder %s29, 1
    %p68 = por %p66, %p67
    %p69 = scmp.ne.s32.totalorder %s60, %s61
    %p70 = scmp.eq.s32.totalorder %s29, 0
    %p71 = por %p69, %p70
    %p72 = scmp.ne.s32.totalorder %s60, %s61
    %p73 = scmp.eq.s32.totalorder %s30, 1
    %p74 = por %p72, %p73
    %p76 = scmp.ne.s32.totalorder %s61, %s75
    %p77 = scmp.eq.s32.totalorder %s30, 0
    %p78 = por %p76, %p77
    %s80 = sadd.s32 %s79, 1
    %p83 = scmp.eq.s32.totalorder %s24, 1
    %p84 = scmp.ne.s32.totalorder %s79, %s81
    %p85 = scmp.eq.s32.totalorder %s24, 0
    %p86 = por %p84, %p85
    %p87 = scmp.ne.s32.totalorder %s79, %s81
    %p88 = scmp.eq.s32.totalorder %s29, 1
    %p89 = por %p87, %p88
    %p90 = scmp.ne.s32.totalorder %s81, %s82
    %p91 = scmp.eq.s32.totalorder %s29, 0
    %p92 = por %p90, %p91
    %p93 = scmp.ne.s32.totalorder %s81, %s82
    %p94 = scmp.eq.s32.totalorder %s30, 1
    %p95 = por %p93, %p94
    %p97 = scmp.ne.s32.totalorder %s82, %s96
    %p98 = scmp.eq.s32.totalorder %s30, 0
    %p99 = por %p97, %p98
    %s101 = sadd.s32 %s100, 1
    %p104 = scmp.eq.s32.totalorder %s24, 1
    %p105 = scmp.ne.s32.totalorder %s100, %s102
    %p106 = scmp.eq.s32.totalorder %s24, 0
    %p107 = por %p105, %p106
    %p108 = scmp.ne.s32.totalorder %s100, %s102
    %p109 = scmp.eq.s32.totalorder %s29, 1
    %p110 = por %p108, %p109
    %p111 = scmp.ne.s32.totalorder %s102, %s103
    %p112 = scmp.eq.s32.totalorder %s29, 0
    %p113 = por %p111, %p112
    %p114 = scmp.ne.s32.totalorder %s102, %s103
    %p115 = scmp.eq.s32.totalorder %s30, 1
    %p116 = por %p114, %p115
    %p118 = scmp.ne.s32.totalorder %s103, %s117
    %p119 = scmp.eq.s32.totalorder %s30, 0
    %p120 = por %p118, %p119
    %s122 = sadd.s32 %s121, 1
    %p125 = scmp.eq.s32.totalorder %s24, 1
    %p126 = scmp.ne.s32.totalorder %s121, %s123
    %p127 = scmp.eq.s32.totalorder %s24, 0
    %p128 = por %p126, %p127
    %p129 = scmp.ne.s32.totalorder %s121, %s123
    %p130 = scmp.eq.s32.totalorder %s29, 1
    %p131 = por %p129, %p130
    %p132 = scmp.ne.s32.totalorder %s123, %s124
    %p133 = scmp.eq.s32.totalorder %s29, 0
    %p134 = por %p132, %p133
    %p135 = scmp.ne.s32.totalorder %s123, %s124
    %p136 = scmp.eq.s32.totalorder %s30, 1
    %p137 = por %p135, %p136
    %p139 = scmp.ne.s32.totalorder %s124, %s138
    %p140 = scmp.eq.s32.totalorder %s30, 0
    %p141 = por %p139, %p140
    %s143 = sadd.s32 %s142, 1
    %p146 = scmp.eq.s32.totalorder %s24, 1
    %p147 = scmp.ne.s32.totalorder %s142, %s144
    %p148 = scmp.eq.s32.totalorder %s24, 0
    %p149 = por %p147, %p148
    %p150 = scmp.ne.s32.totalorder %s142, %s144
    %p151 = scmp.eq.s32.totalorder %s29, 1
    %p152 = por %p150, %p151
    %p153 = scmp.ne.s32.totalorder %s144, %s145
    %p154 = scmp.eq.s32.totalorder %s29, 0
    %p155 = por %p153, %p154
    %p156 = scmp.ne.s32.totalorder %s144, %s145
    %p157 = scmp.eq.s32.totalorder %s30, 1
    %p158 = por %p156, %p157
    %p160 = scmp.ne.s32.totalorder %s145, %s159
    %p161 = scmp.eq.s32.totalorder %s30, 0
    %p162 = por %p160, %p161
    %s164 = sadd.s32 %s163, 1
    %p167 = scmp.eq.s32.totalorder %s24, 1
    %p168 = scmp.ne.s32.totalorder %s163, %s165
    %p169 = scmp.eq.s32.totalorder %s24, 0
    %p170 = por %p168, %p169
    %p171 = scmp.ne.s32.totalorder %s163, %s165
    %p172 = scmp.eq.s32.totalorder %s29, 1
    %p173 = por %p171, %p172
    %p174 = scmp.ne.s32.totalorder %s165, %s166
    %p175 = scmp.eq.s32.totalorder %s29, 0
    %p176 = por %p174, %p175
    %p177 = scmp.ne.s32.totalorder %s165, %s166
    %p178 = scmp.eq.s32.totalorder %s30, 1
    %p179 = por %p177, %p178
    %p181 = scmp.ne.s32.totalorder %s166, %s180
    %p182 = scmp.eq.s32.totalorder %s30, 0
    %p183 = por %p181, %p182
    %s185 = sadd.s32 %s184, 1
    %p188 = scmp.eq.s32.totalorder %s24, 1
    %p189 = scmp.ne.s32.totalorder %s184, %s186
    %p190 = scmp.eq.s32.totalorder %s24, 0
    %p191 = por %p189, %p190
    %p192 = scmp.ne.s32.totalorder %s184, %s186
    %p193 = scmp.eq.s32.totalorder %s29, 1
    %p194 = por %p192, %p193
    %p195 = scmp.ne.s32.totalorder %s186, %s187
    %p196 = scmp.eq.s32.totalorder %s29, 0
    %p197 = por %p195, %p196
    %p198 = scmp.ne.s32.totalorder %s186, %s187
    %p199 = scmp.eq.s32.totalorder %s30, 1
    %p200 = por %p198, %p199
    %p202 = scmp.ne.s32.totalorder %s187, %s201
    %p203 = scmp.eq.s32.totalorder %s30, 0
    %p204 = por %p202, %p203
    %s206 = sadd.s32 %s205, 1
    %p209 = scmp.eq.s32.totalorder %s24, 1
    %p210 = scmp.ne.s32.totalorder %s205, %s207
    %p211 = scmp.eq.s32.totalorder %s24, 0
    %p212 = por %p210, %p211
    %p213 = scmp.ne.s32.totalorder %s205, %s207
    %p214 = scmp.eq.s32.totalorder %s29, 1
    %p215 = por %p213, %p214
    %p216 = scmp.ne.s32.totalorder %s207, %s208
    %p217 = scmp.eq.s32.totalorder %s29, 0
    %p218 = por %p216, %p217
    %p219 = scmp.ne.s32.totalorder %s207, %s208
    %p220 = scmp.eq.s32.totalorder %s30, 1
    %p221 = por %p219, %p220
    %p223 = scmp.ne.s32.totalorder %s208, %s222
    %p224 = scmp.eq.s32.totalorder %s30, 0
    %p225 = por %p223, %p224
    %s227 = sadd.s32 %s226, 1
    %p230 = scmp.eq.s32.totalorder %s24, 1
    %p231 = scmp.ne.s32.totalorder %s226, %s228
    %p232 = scmp.eq.s32.totalorder %s24, 0
    %p233 = por %p231, %p232
    %p234 = scmp.ne.s32.totalorder %s226, %s228
    %p235 = scmp.eq.s32.totalorder %s29, 1
    %p236 = por %p234, %p235
    %p237 = scmp.ne.s32.totalorder %s228, %s229
    %p238 = scmp.eq.s32.totalorder %s29, 0
    %p239 = por %p237, %p238
    %p240 = scmp.ne.s32.totalorder %s228, %s229
    %p241 = scmp.eq.s32.totalorder %s30, 1
    %p242 = por %p240, %p241
    %p244 = scmp.ne.s32.totalorder %s229, %s243
    %p245 = scmp.eq.s32.totalorder %s30, 0
    %p246 = por %p244, %p245
    %s248 = sadd.s32 %s247, 1
    %p251 = scmp.eq.s32.totalorder %s24, 1
    %p252 = scmp.ne.s32.totalorder %s247, %s249
    %p253 = scmp.eq.s32.totalorder %s24, 0
    %p254 = por %p252, %p253
    %p255 = scmp.ne.s32.totalorder %s247, %s249
    %p256 = scmp.eq.s32.totalorder %s29, 1
    %p257 = por %p255, %p256
    %p258 = scmp.ne.s32.totalorder %s249, %s250
    %p259 = scmp.eq.s32.totalorder %s29, 0
    %p260 = por %p258, %p259
    %p261 = scmp.ne.s32.totalorder %s249, %s250
    %p262 = scmp.eq.s32.totalorder %s30, 1
    %p263 = por %p261, %p262
    %p265 = scmp.ne.s32.totalorder %s250, %s264
    %p266 = scmp.eq.s32.totalorder %s30, 0
    %p267 = por %p265, %p266
    %s269 = sadd.s32 %s268, 1
    %p272 = scmp.eq.s32.totalorder %s24, 1
    %p273 = scmp.ne.s32.totalorder %s268, %s270
    %p274 = scmp.eq.s32.totalorder %s24, 0
    %p275 = por %p273, %p274
    %p276 = scmp.ne.s32.totalorder %s268, %s270
    %p277 = scmp.eq.s32.totalorder %s29, 1
    %p278 = por %p276, %p277
    %p279 = scmp.ne.s32.totalorder %s270, %s271
    %p280 = scmp.eq.s32.totalorder %s29, 0
    %p281 = por %p279, %p280
    %p282 = scmp.ne.s32.totalorder %s270, %s271
    %p283 = scmp.eq.s32.totalorder %s30, 1
    %p284 = por %p282, %p283
    %p286 = scmp.ne.s32.totalorder %s271, %s285
    %p287 = scmp.eq.s32.totalorder %s30, 0
    %p288 = por %p286, %p287
    %s290 = sadd.s32 %s289, 1
    %p293 = scmp.eq.s32.totalorder %s24, 1
    %p294 = scmp.ne.s32.totalorder %s289, %s291
    %p295 = scmp.eq.s32.totalorder %s24, 0
    %p296 = por %p294, %p295
    %p297 = scmp.ne.s32.totalorder %s289, %s291
    %p298 = scmp.eq.s32.totalorder %s29, 1
    %p299 = por %p297, %p298
    %p300 = scmp.ne.s32.totalorder %s291, %s292
    %p301 = scmp.eq.s32.totalorder %s29, 0
    %p302 = por %p300, %p301
    %p303 = scmp.ne.s32.totalorder %s291, %s292
    %p304 = scmp.eq.s32.totalorder %s30, 1
    %p305 = por %p303, %p304
    %p307 = scmp.ne.s32.totalorder %s292, %s306
    %p308 = scmp.eq.s32.totalorder %s30, 0
    %p309 = por %p307, %p308
    %s311 = sadd.s32 %s310, 1
    %p314 = scmp.eq.s32.totalorder %s24, 1
    %p315 = scmp.ne.s32.totalorder %s310, %s312
    %p316 = scmp.eq.s32.totalorder %s24, 0
    %p317 = por %p315, %p316
    %p318 = scmp.ne.s32.totalorder %s310, %s312
    %p319 = scmp.eq.s32.totalorder %s29, 1
    %p320 = por %p318, %p319
    %p321 = scmp.ne.s32.totalorder %s312, %s313
    %p322 = scmp.eq.s32.totalorder %s29, 0
    %p323 = por %p321, %p322
    %p324 = scmp.ne.s32.totalorder %s312, %s313
    %p325 = scmp.eq.s32.totalorder %s30, 1
    %p326 = por %p324, %p325
    %p328 = scmp.ne.s32.totalorder %s313, %s327
    %p329 = scmp.eq.s32.totalorder %s30, 0
    %p330 = por %p328, %p329
    %s332 = sadd.s32 %s331, 1
    %p335 = scmp.eq.s32.totalorder %s24, 1
    %p336 = scmp.ne.s32.totalorder %s331, %s333
    %p337 = scmp.eq.s32.totalorder %s24, 0
    %p338 = por %p336, %p337
    %p339 = scmp.ne.s32.totalorder %s331, %s333
    %p340 = scmp.eq.s32.totalorder %s29, 1
    %p341 = por %p339, %p340
    %p342 = scmp.ne.s32.totalorder %s333, %s334
    %p343 = scmp.eq.s32.totalorder %s29, 0
    %p344 = por %p342, %p343
    %p345 = scmp.ne.s32.totalorder %s333, %s334
    %p346 = scmp.eq.s32.totalorder %s30, 1
    %p347 = por %p345, %p346
    %p349 = scmp.ne.s32.totalorder %s334, %s348
    %p350 = scmp.eq.s32.totalorder %s30, 0
    %p351 = por %p349, %p350
    %s353 = sadd.s32 %s352, 1
    %p356 = scmp.eq.s32.totalorder %s24, 1
    %p357 = scmp.ne.s32.totalorder %s352, %s354
    %p358 = scmp.eq.s32.totalorder %s24, 0
    %p359 = por %p357, %p358
    %p360 = scmp.ne.s32.totalorder %s352, %s354
    %p361 = scmp.eq.s32.totalorder %s29, 1
    %p362 = por %p360, %p361
    %p363 = scmp.ne.s32.totalorder %s354, %s355
    %p364 = scmp.eq.s32.totalorder %s29, 0
    %p365 = por %p363, %p364
    %p366 = scmp.ne.s32.totalorder %s354, %s355
    %p367 = scmp.eq.s32.totalorder %s30, 1
    %p368 = por %p366, %p367
    %p370 = scmp.ne.s32.totalorder %s355, %s369
    %p371 = scmp.eq.s32.totalorder %s30, 0
    %p372 = por %p370, %p371
    %s374 = sadd.s32 %s373, 1
    %p377 = scmp.eq.s32.totalorder %s24, 1
    %p378 = scmp.ne.s32.totalorder %s373, %s375
    %p379 = scmp.eq.s32.totalorder %s24, 0
    %p380 = por %p378, %p379
    %p381 = scmp.ne.s32.totalorder %s373, %s375
    %p382 = scmp.eq.s32.totalorder %s29, 1
    %p383 = por %p381, %p382
    %p384 = scmp.ne.s32.totalorder %s375, %s376
    %p385 = scmp.eq.s32.totalorder %s29, 0
    %p386 = por %p384, %p385
    %p387 = scmp.ne.s32.totalorder %s375, %s376
    %p388 = scmp.eq.s32.totalorder %s30, 1
    %p389 = por %p387, %p388
    %p391 = scmp.ne.s32.totalorder %s376, %s390
    %p392 = scmp.eq.s32.totalorder %s30, 0
    %p393 = por %p391, %p392
    %s395 = sadd.s32 %s394, 1
    %p398 = scmp.eq.s32.totalorder %s24, 1
    %p399 = scmp.ne.s32.totalorder %s394, %s396
    %p400 = scmp.eq.s32.totalorder %s24, 0
    %p401 = por %p399, %p400
    %p402 = scmp.ne.s32.totalorder %s394, %s396
    %p403 = scmp.eq.s32.totalorder %s29, 1
    %p404 = por %p402, %p403
    %p405 = scmp.ne.s32.totalorder %s396, %s397
    %p406 = scmp.eq.s32.totalorder %s29, 0
    %p407 = por %p405, %p406
    %p408 = scmp.ne.s32.totalorder %s396, %s397
    %p409 = scmp.eq.s32.totalorder %s30, 1
    %p410 = por %p408, %p409
    %p412 = scmp.ne.s32.totalorder %s397, %s411
    %p413 = scmp.eq.s32.totalorder %s30, 0
    %p414 = por %p412, %p413
    %s415 = ssub.s32 %s24, %s31
    %p416 = scmp.eq.s32.totalorder %s415, 0
    %s418 = sadd.s32 %s417, 1
    %s419 = scalar_select %p416, %s417, %s418
    %p422 = pneg %p416
    %p423 = scmp.eq.s32.totalorder %s24, 1
    %p424 = por %p422, %p423
    %p425 = scmp.ne.s32.totalorder %s417, %s420
    %p426 = scmp.eq.s32.totalorder %s24, 0
    %p427 = por %p425, %p426
    %p428 = scmp.ne.s32.totalorder %s417, %s420
    %p429 = scmp.eq.s32.totalorder %s29, 1
    %p430 = por %p428, %p429
    %p431 = scmp.ne.s32.totalorder %s420, %s421
    %p432 = scmp.eq.s32.totalorder %s29, 0
    %p433 = por %p431, %p432
    %p434 = scmp.ne.s32.totalorder %s420, %s421
    %p435 = scmp.eq.s32.totalorder %s30, 1
    %p436 = por %p434, %p435
    %p438 = scmp.ne.s32.totalorder %s421, %s437
    %p439 = scmp.eq.s32.totalorder %s30, 0
    %p440 = por %p438, %p439
    %p441 = scmp.le.s32.totalorder 1, %s24
    %p442 = scmp.lt.s32.totalorder %s24, 3
    %p443 = pnand %p441, %p442
    %p444 = pneg %p443
    // Predicated region
    $region9: #{branchformer_layer.4} parent=5 // pred_check
      _
    $region10: #{branchformer_layer.4} parent=5 // pred_check_branch
      %446 = sbr.rel (%p443) target = $region12
    $region11: #{branchformer_layer.4} parent=5 // pred_region
      %s447 = ssub.s32 %s24, 1
      // Predicated region
      $region13: #{branchformer_layer.4} parent=11 // pred_check
        %p448 = pneg %p71
      $region14: #{branchformer_layer.4} parent=11 // pred_check_branch
        %450 = sbr.rel (%p448) target = $region16
      $region15: #{branchformer_layer.4} parent=11 // pred_region
        _
      $region16: #{branchformer_layer.4} parent=11 // pred_fallthru
        _
      // Predicated region
      $region17: #{branchformer_layer.4} parent=11 // pred_check
        %p451 = pneg %p92
      $region18: #{branchformer_layer.4} parent=11 // pred_check_branch
        %453 = sbr.rel (%p451) target = $region20
      $region19: #{branchformer_layer.4} parent=11 // pred_region
        _
      $region20: #{branchformer_layer.4} parent=11 // pred_fallthru
        _
      // Predicated region
      $region21: #{branchformer_layer.4} parent=11 // pred_check
        %p454 = pneg %p113
      $region22: #{branchformer_layer.4} parent=11 // pred_check_branch
        %456 = sbr.rel (%p454) target = $region24
      $region23: #{branchformer_layer.4} parent=11 // pred_region
        _
      $region24: #{branchformer_layer.4} parent=11 // pred_fallthru
        _
      // Predicated region
      $region25: #{branchformer_layer.4} parent=11 // pred_check
        %p457 = pneg %p134
      $region26: #{branchformer_layer.4} parent=11 // pred_check_branch
        %459 = sbr.rel (%p457) target = $region28
      $region27: #{branchformer_layer.4} parent=11 // pred_region
        _
      $region28: #{branchformer_layer.4} parent=11 // pred_fallthru
        _
      // Predicated region
      $region29: #{branchformer_layer.4} parent=11 // pred_check
        %p460 = pneg %p155
      $region30: #{branchformer_layer.4} parent=11 // pred_check_branch
        %462 = sbr.rel (%p460) target = $region32
      $region31: #{branchformer_layer.4} parent=11 // pred_region
        _
      $region32: #{branchformer_layer.4} parent=11 // pred_fallthru
        _
      // Predicated region
      $region33: #{branchformer_layer.4} parent=11 // pred_check
        %p463 = pneg %p176
      $region34: #{branchformer_layer.4} parent=11 // pred_check_branch
        %465 = sbr.rel (%p463) target = $region36
      $region35: #{branchformer_layer.4} parent=11 // pred_region
        _
      $region36: #{branchformer_layer.4} parent=11 // pred_fallthru
        _
      // Predicated region
      $region37: #{branchformer_layer.4} parent=11 // pred_check
        %p466 = pneg %p197
      $region38: #{branchformer_layer.4} parent=11 // pred_check_branch
        %468 = sbr.rel (%p466) target = $region40
      $region39: #{branchformer_layer.4} parent=11 // pred_region
        _
      $region40: #{branchformer_layer.4} parent=11 // pred_fallthru
        _
      // Predicated region
      $region41: #{branchformer_layer.4} parent=11 // pred_check
        %p469 = pneg %p218
      $region42: #{branchformer_layer.4} parent=11 // pred_check_branch
        %471 = sbr.rel (%p469) target = $region44
      $region43: #{branchformer_layer.4} parent=11 // pred_region
        _
      $region44: #{branchformer_layer.4} parent=11 // pred_fallthru
        _
      // Predicated region
      $region45: #{branchformer_layer.4} parent=11 // pred_check
        %p472 = pneg %p239
      $region46: #{branchformer_layer.4} parent=11 // pred_check_branch
        %474 = sbr.rel (%p472) target = $region48
      $region47: #{branchformer_layer.4} parent=11 // pred_region
        _
      $region48: #{branchformer_layer.4} parent=11 // pred_fallthru
        _
      // Predicated region
      $region49: #{branchformer_layer.4} parent=11 // pred_check
        %p475 = pneg %p260
      $region50: #{branchformer_layer.4} parent=11 // pred_check_branch
        %477 = sbr.rel (%p475) target = $region52
      $region51: #{branchformer_layer.4} parent=11 // pred_region
        _
      $region52: #{branchformer_layer.4} parent=11 // pred_fallthru
        _
      // Predicated region
      $region53: #{branchformer_layer.4} parent=11 // pred_check
        %p478 = pneg %p281
      $region54: #{branchformer_layer.4} parent=11 // pred_check_branch
        %480 = sbr.rel (%p478) target = $region56
      $region55: #{branchformer_layer.4} parent=11 // pred_region
        _
      $region56: #{branchformer_layer.4} parent=11 // pred_fallthru
        _
      // Predicated region
      $region57: #{branchformer_layer.4} parent=11 // pred_check
        %p481 = pneg %p302
      $region58: #{branchformer_layer.4} parent=11 // pred_check_branch
        %483 = sbr.rel (%p481) target = $region60
      $region59: #{branchformer_layer.4} parent=11 // pred_region
        _
      $region60: #{branchformer_layer.4} parent=11 // pred_fallthru
        _
      // Predicated region
      $region61: #{branchformer_layer.4} parent=11 // pred_check
        %p484 = pneg %p323
      $region62: #{branchformer_layer.4} parent=11 // pred_check_branch
        %486 = sbr.rel (%p484) target = $region64
      $region63: #{branchformer_layer.4} parent=11 // pred_region
        _
      $region64: #{branchformer_layer.4} parent=11 // pred_fallthru
        _
      // Predicated region
      $region65: #{branchformer_layer.4} parent=11 // pred_check
        %p487 = pneg %p344
      $region66: #{branchformer_layer.4} parent=11 // pred_check_branch
        %489 = sbr.rel (%p487) target = $region68
      $region67: #{branchformer_layer.4} parent=11 // pred_region
        _
      $region68: #{branchformer_layer.4} parent=11 // pred_fallthru
        _
      // Predicated region
      $region69: #{branchformer_layer.4} parent=11 // pred_check
        %p490 = pneg %p365
      $region70: #{branchformer_layer.4} parent=11 // pred_check_branch
        %492 = sbr.rel (%p490) target = $region72
      $region71: #{branchformer_layer.4} parent=11 // pred_region
        _
      $region72: #{branchformer_layer.4} parent=11 // pred_fallthru
        _
      // Predicated region
      $region73: #{branchformer_layer.4} parent=11 // pred_check
        %p493 = pneg %p386
      $region74: #{branchformer_layer.4} parent=11 // pred_check_branch
        %495 = sbr.rel (%p493) target = $region76
      $region75: #{branchformer_layer.4} parent=11 // pred_region
        _
      $region76: #{branchformer_layer.4} parent=11 // pred_fallthru
        _
      // Predicated region
      $region77: #{branchformer_layer.4} parent=11 // pred_check
        %p496 = pneg %p407
      $region78: #{branchformer_layer.4} parent=11 // pred_check_branch
        %498 = sbr.rel (%p496) target = $region80
      $region79: #{branchformer_layer.4} parent=11 // pred_region
        _
      $region80: #{branchformer_layer.4} parent=11 // pred_fallthru
        _
    $region12: #{branchformer_layer.4} parent=5 // pred_fallthru
      _
    %p499 = scmp.lt.s32.totalorder %s24, 2
    // Predicated region
    $region81: #{branchformer_layer.4} parent=5 // pred_check
      %p500 = pneg %p499
    $region82: #{branchformer_layer.4} parent=5 // pred_check_branch
      %502 = sbr.rel (%p500) target = $region84
    $region83: #{branchformer_layer.4} parent=5 // pred_region
      // Predicated region
      $region85: #{branchformer_layer.4} parent=83 // pred_check
        %p503 = pneg %p44
      $region86: #{branchformer_layer.4} parent=83 // pred_check_branch
        %505 = sbr.rel (%p503) target = $region88
      $region87: #{branchformer_layer.4} parent=83 // pred_region
        %p506 = scmp.lt.s32.totalorder %s24, 1
        %s507 = scalar_select %p506, %s24, 1
        %s508 = smul.addr %s507, 8
        %s509 = scalar_lea.vmem %s0, %s508
      $region88: #{branchformer_layer.4} parent=83 // pred_fallthru
        _
    $region84: #{branchformer_layer.4} parent=5 // pred_fallthru
      _
    %p510 = scmp.le.s32.totalorder 1, %s24
    %p511 = scmp.lt.s32.totalorder %s24, 3
    %p512 = pnand %p510, %p511
    %p513 = pneg %p512
    // Predicated region
    $region89: #{branchformer_layer.4} parent=5 // pred_check
      _
    $region90: #{branchformer_layer.4} parent=5 // pred_check_branch
      %515 = sbr.rel (%p512) target = $region92
    $region91: #{branchformer_layer.4} parent=5 // pred_region
      %s516 = ssub.s32 %s24, 1
      %p517 = scmp.lt.s32.totalorder %s29, 1
      %s518 = scalar_select %p517, %s29, 1
      %s519 = smul.addr %s518, 8
      %s520 = scalar_lea.vmem %s0, %s519
      %p521 = pneg %p50
      %p522 = pneg %p47
      %p523 = pneg %p71
      %p524 = pneg %p68
      %p525 = pneg %p92
      %p526 = pneg %p89
      %p527 = pneg %p113
      %p528 = pneg %p110
      %p529 = pneg %p134
      %p530 = pneg %p131
      %p531 = pneg %p155
      %p532 = pneg %p152
      %p533 = pneg %p176
      %p534 = pneg %p173
      %p535 = pneg %p197
      %p536 = pneg %p194
      %p537 = pneg %p218
      %p538 = pneg %p215
      %p539 = pneg %p239
      %p540 = pneg %p236
      %p541 = pneg %p260
      %p542 = pneg %p257
      %p543 = pneg %p281
      %p544 = pneg %p278
      %p545 = pneg %p302
      %p546 = pneg %p299
      %p547 = pneg %p323
      %p548 = pneg %p320
      %p549 = pneg %p344
      %p550 = pneg %p341
      %p551 = pneg %p365
      %p552 = pneg %p362
      %p553 = pneg %p386
      %p554 = pneg %p383
      %p555 = pneg %p407
      %p556 = pneg %p404
      %p557 = pneg %p433
      %p558 = pneg %p430
      %p559 = scmp.lt.s32.totalorder %s29, 1
      %s560 = scalar_select %p559, %s29, 1
      %s561 = smul.addr %s560, 8
      %s562 = scalar_lea.vmem %s18, %s561
      %p563 = scmp.lt.s32.totalorder %s29, 1
      %s564 = scalar_select %p563, %s29, 1
      %s565 = smul.addr %s564, 8
      %s566 = scalar_lea.vmem %s0, %s565
      %p567 = scmp.lt.s32.totalorder %s29, 1
      %s568 = scalar_select %p567, %s29, 1
      %s569 = smul.addr %s568, 8
      %s570 = scalar_lea.vmem %s18, %s569
      %v571 = vld [vmem:[%s566] sm:$0xff]
      %v572 = vld [vmem:[%s1] sm:$0x1]
      %v573 = vld [vmem:[%s2] sm:$0x1]
      %vm574 = vcmask 261120
      %v575 = vsel %vm574, %v571, 0.0
      %576 = vadd.xlane.f32.xlu0 %v575
      %v577 = vpop.xlane.xlu0 %576
      %v578 = vrcp.pop 32.0
      %v579 = vmul.f32 32.0, %v578
      %v580 = vsub.f32 1.0, %v579
      %v581 = vmul.f32 %v578, %v580
      %v582 = vadd.f32 %v578, %v581
      %vm583 = vweird.f32 %v578
      %v584 = vsel %vm583, %v578, %v582
      %v585 = vmul.f32 %v577, %v584
      %v586 = vsub.f32 %v571, %v585
      %v587 = vmul.f32 %v586, %v586
      %v588 = vsel %vm574, %v587, 0.0
      %589 = vadd.xlane.f32.xlu0 %v588
      %v590 = vpop.xlane.xlu0 %589
      %v591 = vmul.f32 %v590, %v584
      %v592 = vadd.f32 %v591, 1e-05
      %v593 = vrsqrt.pop %v592
      %v594 = vmul.f32 %v593, %v592
      %v595 = vmul.f32 %v594, %v593
      %v596 = vmul.f32 0.5, %v595
      %v597 = vsub.f32 1.5, %v596
      %v598 = vmul.f32 %v593, %v597
      %vm599 = vweird.f32 %v592
      %vm600 = vweird.f32 %v593
      %vm601 = vmor %vm599, %vm600
      %v602 = vsel %vm601, %v593, %v598
      %v603 = vmul.f32 %v586, %v602
      %v605 = vperm.slane %v572, 0
      %v607 = vmul.f32 %v603, %v605
      %v609 = vperm.slane %v573, 0
      %v611 = vadd.f32 %v607, %v609
      %v612 = vld [vmem:[%s3] sm:$0xff]
      %v613 = vld [vmem:[%s3 + $0x8] sm:$0xff]
      %v614 = vld [vmem:[%s3 + $0x10] sm:$0xff]
      %v615 = vld [vmem:[%s3 + $0x18] sm:$0xff]
      %v616 = vld [vmem:[%s3 + $0x20] sm:$0xff]
      %v617 = vld [vmem:[%s3 + $0x28] sm:$0xff]
      %v618 = vld [vmem:[%s3 + $0x30] sm:$0xff]
      %v619 = vld [vmem:[%s3 + $0x38] sm:$0xff]
      %v620 = vld [vmem:[%s3 + $0x40] sm:$0xff]
      %v621 = vld [vmem:[%s3 + $0x48] sm:$0xff]
      %v622 = vld [vmem:[%s3 + $0x50] sm:$0xff]
      %v623 = vld [vmem:[%s3 + $0x58] sm:$0xff]
      %v624 = vld [vmem:[%s3 + $0x60] sm:$0xff]
      %v625 = vld [vmem:[%s3 + $0x68] sm:$0xff]
      %v626 = vld [vmem:[%s3 + $0x70] sm:$0xff]
      %v627 = vld [vmem:[%s3 + $0x78] sm:$0xff]
      %v628 = vld [vmem:[%s4] sm:$0x1]
      %v629 = vld [vmem:[%s4 + $0x1] sm:$0x1]
      %v630 = vld [vmem:[%s4 + $0x2] sm:$0x1]
      %v631 = vld [vmem:[%s4 + $0x3] sm:$0x1]
      %v636 = vperm.slane %v628, 0
      %v637 = vperm.slane %v629, 0
      %v638 = vperm.slane %v630, 0
      %v639 = vperm.slane %v631, 0
      %v645 = vsel %vm574, %v611, 0
      %647 = vmatpush.msra.mxu0 0.0
      %648 = vmatpush.msra.mxu0 0.0
      %649 = vmatpush.msra.mxu0 0.0
      %650 = vmatpush.msra.mxu0 0.0
      %651 = vmatpush.msra.mxu0 0.0
      %652 = vmatpush.msra.mxu0 0.0
      %653 = vmatpush.msra.mxu0 0.0
      %654 = vmatpush.msra.mxu0 0.0
      %655 = vmatpush.msra.mxu0 0.0
      %656 = vmatpush.msra.mxu0 0.0
      %657 = vmatpush.msra.mxu0 0.0
      %658 = vmatpush.msra.mxu0 0.0
      %659 = vmatpush.msra.mxu0 %v615
      %660 = vmatpush.msra.mxu0 %v614
      %661 = vmatpush.msra.mxu0 %v613
      %662 = vmatpush.msra.mxu0 %v612
      %663 = vmatmul.f32.gmra.mxu0 %v645
      %v664 = vpop.f32.mrf.mxu0
      %v665 = vadd.f32 %v636, %v664
      %666 = vdwg.mxu0
      %667 = vmatpush.msra.mxu0 0.0
      %668 = vmatpush.msra.mxu0 0.0
      %669 = vmatpush.msra.mxu0 0.0
      %670 = vmatpush.msra.mxu0 0.0
      %671 = vmatpush.msra.mxu0 0.0
      %672 = vmatpush.msra.mxu0 0.0
      %673 = vmatpush.msra.mxu0 0.0
      %674 = vmatpush.msra.mxu0 0.0
      %675 = vmatpush.msra.mxu0 0.0
      %676 = vmatpush.msra.mxu0 0.0
      %677 = vmatpush.msra.mxu0 0.0
      %678 = vmatpush.msra.mxu0 0.0
      %679 = vmatpush.msra.mxu0 %v619
      %680 = vmatpush.msra.mxu0 %v618
      %681 = vmatpush.msra.mxu0 %v617
      %682 = vmatpush.msra.mxu0 %v616
      %683 = vmatmul.f32.gmra.mxu0 %v645
      %v684 = vpop.f32.mrf.mxu0
      %v685 = vadd.f32 %v637, %v684
      %686 = vdwg.mxu0
      %687 = vmatpush.msra.mxu0 0.0
      %688 = vmatpush.msra.mxu0 0.0
      %689 = vmatpush.msra.mxu0 0.0
      %690 = vmatpush.msra.mxu0 0.0
      %691 = vmatpush.msra.mxu0 0.0
      %692 = vmatpush.msra.mxu0 0.0
      %693 = vmatpush.msra.mxu0 0.0
      %694 = vmatpush.msra.mxu0 0.0
      %695 = vmatpush.msra.mxu0 0.0
      %696 = vmatpush.msra.mxu0 0.0
      %697 = vmatpush.msra.mxu0 0.0
      %698 = vmatpush.msra.mxu0 0.0
      %699 = vmatpush.msra.mxu0 %v623
      %700 = vmatpush.msra.mxu0 %v622
      %701 = vmatpush.msra.mxu0 %v621
      %702 = vmatpush.msra.mxu0 %v620
      %703 = vmatmul.f32.gmra.mxu0 %v645
      %v704 = vpop.f32.mrf.mxu0
      %v705 = vadd.f32 %v638, %v704
      %706 = vdwg.mxu0
      %707 = vmatpush.msra.mxu0 0.0
      %708 = vmatpush.msra.mxu0 0.0
      %709 = vmatpush.msra.mxu0 0.0
      %710 = vmatpush.msra.mxu0 0.0
      %711 = vmatpush.msra.mxu0 0.0
      %712 = vmatpush.msra.mxu0 0.0
      %713 = vmatpush.msra.mxu0 0.0
      %714 = vmatpush.msra.mxu0 0.0
      %715 = vmatpush.msra.mxu0 0.0
      %716 = vmatpush.msra.mxu0 0.0
      %717 = vmatpush.msra.mxu0 0.0
      %718 = vmatpush.msra.mxu0 0.0
      %719 = vmatpush.msra.mxu0 %v627
      %720 = vmatpush.msra.mxu0 %v626
      %721 = vmatpush.msra.mxu0 %v625
      %722 = vmatpush.msra.mxu0 %v624
      %723 = vmatmul.f32.gmra.mxu0 %v645
      %v724 = vpop.f32.mrf.mxu0
      %v725 = vadd.f32 %v639, %v724
      %726 = vdwg.mxu0
      %v727 = vld [vmem:[%s5] sm:$0xff]
      %v728 = vld [vmem:[%s5 + $0x8] sm:$0xff]
      %v729 = vld [vmem:[%s5 + $0x10] sm:$0xff]
      %v730 = vld [vmem:[%s5 + $0x18] sm:$0xff]
      %v731 = vld [vmem:[%s5 + $0x20] sm:$0xff]
      %v732 = vld [vmem:[%s5 + $0x28] sm:$0xff]
      %v733 = vld [vmem:[%s5 + $0x30] sm:$0xff]
      %v734 = vld [vmem:[%s5 + $0x38] sm:$0xff]
      %v735 = vld [vmem:[%s5 + $0x40] sm:$0xff]
      %v736 = vld [vmem:[%s5 + $0x48] sm:$0xff]
      %v737 = vld [vmem:[%s5 + $0x50] sm:$0xff]
      %v738 = vld [vmem:[%s5 + $0x58] sm:$0xff]
      %v739 = vld [vmem:[%s5 + $0x60] sm:$0xff]
      %v740 = vld [vmem:[%s5 + $0x68] sm:$0xff]
      %v741 = vld [vmem:[%s5 + $0x70] sm:$0xff]
      %v742 = vld [vmem:[%s5 + $0x78] sm:$0xff]
      %v743 = vld [vmem:[%s6] sm:$0x1]
      %v744 = vld [vmem:[%s6 + $0x1] sm:$0x1]
      %v745 = vld [vmem:[%s6 + $0x2] sm:$0x1]
      %v746 = vld [vmem:[%s6 + $0x3] sm:$0x1]
      %v751 = vperm.slane %v743, 0
      %v752 = vperm.slane %v744, 0
      %v753 = vperm.slane %v745, 0
      %v754 = vperm.slane %v746, 0
      %759 = vmatpush.msra.mxu0 0.0
      %760 = vmatpush.msra.mxu0 0.0
      %761 = vmatpush.msra.mxu0 0.0
      %762 = vmatpush.msra.mxu0 0.0
      %763 = vmatpush.msra.mxu0 0.0
      %764 = vmatpush.msra.mxu0 0.0
      %765 = vmatpush.msra.mxu0 0.0
      %766 = vmatpush.msra.mxu0 0.0
      %767 = vmatpush.msra.mxu0 0.0
      %768 = vmatpush.msra.mxu0 0.0
      %769 = vmatpush.msra.mxu0 0.0
      %770 = vmatpush.msra.mxu0 0.0
      %771 = vmatpush.msra.mxu0 %v730
      %772 = vmatpush.msra.mxu0 %v729
      %773 = vmatpush.msra.mxu0 %v728
      %774 = vmatpush.msra.mxu0 %v727
      %775 = vmatmul.f32.gmra.mxu0 %v645
      %v776 = vpop.f32.mrf.mxu0
      %v777 = vadd.f32 %v751, %v776
      %778 = vdwg.mxu0
      %779 = vmatpush.msra.mxu0 0.0
      %780 = vmatpush.msra.mxu0 0.0
      %781 = vmatpush.msra.mxu0 0.0
      %782 = vmatpush.msra.mxu0 0.0
      %783 = vmatpush.msra.mxu0 0.0
      %784 = vmatpush.msra.mxu0 0.0
      %785 = vmatpush.msra.mxu0 0.0
      %786 = vmatpush.msra.mxu0 0.0
      %787 = vmatpush.msra.mxu0 0.0
      %788 = vmatpush.msra.mxu0 0.0
      %789 = vmatpush.msra.mxu0 0.0
      %790 = vmatpush.msra.mxu0 0.0
      %791 = vmatpush.msra.mxu0 %v734
      %792 = vmatpush.msra.mxu0 %v733
      %793 = vmatpush.msra.mxu0 %v732
      %794 = vmatpush.msra.mxu0 %v731
      %795 = vmatmul.f32.gmra.mxu0 %v645
      %v796 = vpop.f32.mrf.mxu0
      %v797 = vadd.f32 %v752, %v796
      %798 = vdwg.mxu0
      %799 = vmatpush.msra.mxu0 0.0
      %800 = vmatpush.msra.mxu0 0.0
      %801 = vmatpush.msra.mxu0 0.0
      %802 = vmatpush.msra.mxu0 0.0
      %803 = vmatpush.msra.mxu0 0.0
      %804 = vmatpush.msra.mxu0 0.0
      %805 = vmatpush.msra.mxu0 0.0
      %806 = vmatpush.msra.mxu0 0.0
      %807 = vmatpush.msra.mxu0 0.0
      %808 = vmatpush.msra.mxu0 0.0
      %809 = vmatpush.msra.mxu0 0.0
      %810 = vmatpush.msra.mxu0 0.0
      %811 = vmatpush.msra.mxu0 %v738
      %812 = vmatpush.msra.mxu0 %v737
      %813 = vmatpush.msra.mxu0 %v736
      %814 = vmatpush.msra.mxu0 %v735
      %815 = vmatmul.f32.gmra.mxu0 %v645
      %v816 = vpop.f32.mrf.mxu0
      %v817 = vadd.f32 %v753, %v816
      %818 = vdwg.mxu0
      %819 = vmatpush.msra.mxu0 0.0
      %820 = vmatpush.msra.mxu0 0.0
      %821 = vmatpush.msra.mxu0 0.0
      %822 = vmatpush.msra.mxu0 0.0
      %823 = vmatpush.msra.mxu0 0.0
      %824 = vmatpush.msra.mxu0 0.0
      %825 = vmatpush.msra.mxu0 0.0
      %826 = vmatpush.msra.mxu0 0.0
      %827 = vmatpush.msra.mxu0 0.0
      %828 = vmatpush.msra.mxu0 0.0
      %829 = vmatpush.msra.mxu0 0.0
      %830 = vmatpush.msra.mxu0 0.0
      %831 = vmatpush.msra.mxu0 %v742
      %832 = vmatpush.msra.mxu0 %v741
      %833 = vmatpush.msra.mxu0 %v740
      %834 = vmatpush.msra.mxu0 %v739
      %835 = vmatmul.f32.gmra.mxu0 %v645
      %v836 = vpop.f32.mrf.mxu0
      %v837 = vadd.f32 %v754, %v836
      %838 = vdwg.mxu0
      %v839 = vld [vmem:[%s7] sm:$0xff]
      %v840 = vld [vmem:[%s7 + $0x8] sm:$0xff]
      %v841 = vld [vmem:[%s7 + $0x10] sm:$0xff]
      %v842 = vld [vmem:[%s7 + $0x18] sm:$0xff]
      %v843 = vld [vmem:[%s7 + $0x20] sm:$0xff]
      %v844 = vld [vmem:[%s7 + $0x28] sm:$0xff]
      %v845 = vld [vmem:[%s7 + $0x30] sm:$0xff]
      %v846 = vld [vmem:[%s7 + $0x38] sm:$0xff]
      %v847 = vld [vmem:[%s7 + $0x40] sm:$0xff]
      %v848 = vld [vmem:[%s7 + $0x48] sm:$0xff]
      %v849 = vld [vmem:[%s7 + $0x50] sm:$0xff]
      %v850 = vld [vmem:[%s7 + $0x58] sm:$0xff]
      %v851 = vld [vmem:[%s7 + $0x60] sm:$0xff]
      %v852 = vld [vmem:[%s7 + $0x68] sm:$0xff]
      %v853 = vld [vmem:[%s7 + $0x70] sm:$0xff]
      %v854 = vld [vmem:[%s7 + $0x78] sm:$0xff]
      %v855 = vld [vmem:[%s8] sm:$0x1]
      %v856 = vld [vmem:[%s8 + $0x1] sm:$0x1]
      %v857 = vld [vmem:[%s8 + $0x2] sm:$0x1]
      %v858 = vld [vmem:[%s8 + $0x3] sm:$0x1]
      %v863 = vperm.slane %v855, 0
      %v864 = vperm.slane %v856, 0
      %v865 = vperm.slane %v857, 0
      %v866 = vperm.slane %v858, 0
      %871 = vmatpush.msra.mxu0 0.0
      %872 = vmatpush.msra.mxu0 0.0
      %873 = vmatpush.msra.mxu0 0.0
      %874 = vmatpush.msra.mxu0 0.0
      %875 = vmatpush.msra.mxu0 0.0
      %876 = vmatpush.msra.mxu0 0.0
      %877 = vmatpush.msra.mxu0 0.0
      %878 = vmatpush.msra.mxu0 0.0
      %879 = vmatpush.msra.mxu0 0.0
      %880 = vmatpush.msra.mxu0 0.0
      %881 = vmatpush.msra.mxu0 0.0
      %882 = vmatpush.msra.mxu0 0.0
      %883 = vmatpush.msra.mxu0 %v842
      %884 = vmatpush.msra.mxu0 %v841
      %885 = vmatpush.msra.mxu0 %v840
      %886 = vmatpush.msra.mxu0 %v839
      %887 = vmatmul.f32.gmra.mxu0 %v645
      %v888 = vpop.f32.mrf.mxu0
      %v889 = vadd.f32 %v863, %v888
      %890 = vdwg.mxu0
      %891 = vmatpush.msra.mxu0 0.0
      %892 = vmatpush.msra.mxu0 0.0
      %893 = vmatpush.msra.mxu0 0.0
      %894 = vmatpush.msra.mxu0 0.0
      %895 = vmatpush.msra.mxu0 0.0
      %896 = vmatpush.msra.mxu0 0.0
      %897 = vmatpush.msra.mxu0 0.0
      %898 = vmatpush.msra.mxu0 0.0
      %899 = vmatpush.msra.mxu0 0.0
      %900 = vmatpush.msra.mxu0 0.0
      %901 = vmatpush.msra.mxu0 0.0
      %902 = vmatpush.msra.mxu0 0.0
      %903 = vmatpush.msra.mxu0 %v846
      %904 = vmatpush.msra.mxu0 %v845
      %905 = vmatpush.msra.mxu0 %v844
      %906 = vmatpush.msra.mxu0 %v843
      %907 = vmatmul.f32.gmra.mxu0 %v645
      %v908 = vpop.f32.mrf.mxu0
      %v909 = vadd.f32 %v864, %v908
      %910 = vdwg.mxu0
      %911 = vmatpush.msra.mxu0 0.0
      %912 = vmatpush.msra.mxu0 0.0
      %913 = vmatpush.msra.mxu0 0.0
      %914 = vmatpush.msra.mxu0 0.0
      %915 = vmatpush.msra.mxu0 0.0
      %916 = vmatpush.msra.mxu0 0.0
      %917 = vmatpush.msra.mxu0 0.0
      %918 = vmatpush.msra.mxu0 0.0
      %919 = vmatpush.msra.mxu0 0.0
      %920 = vmatpush.msra.mxu0 0.0
      %921 = vmatpush.msra.mxu0 0.0
      %922 = vmatpush.msra.mxu0 0.0
      %923 = vmatpush.msra.mxu0 %v850
      %924 = vmatpush.msra.mxu0 %v849
      %925 = vmatpush.msra.mxu0 %v848
      %926 = vmatpush.msra.mxu0 %v847
      %927 = vmatmul.f32.gmra.mxu0 %v645
      %v928 = vpop.f32.mrf.mxu0
      %v929 = vadd.f32 %v865, %v928
      %930 = vdwg.mxu0
      %931 = vmatpush.msra.mxu0 0.0
      %932 = vmatpush.msra.mxu0 0.0
      %933 = vmatpush.msra.mxu0 0.0
      %934 = vmatpush.msra.mxu0 0.0
      %935 = vmatpush.msra.mxu0 0.0
      %936 = vmatpush.msra.mxu0 0.0
      %937 = vmatpush.msra.mxu0 0.0
      %938 = vmatpush.msra.mxu0 0.0
      %939 = vmatpush.msra.mxu0 0.0
      %940 = vmatpush.msra.mxu0 0.0
      %941 = vmatpush.msra.mxu0 0.0
      %942 = vmatpush.msra.mxu0 0.0
      %943 = vmatpush.msra.mxu0 %v854
      %944 = vmatpush.msra.mxu0 %v853
      %945 = vmatpush.msra.mxu0 %v852
      %946 = vmatpush.msra.mxu0 %v851
      %947 = vmatmul.f32.gmra.mxu0 %v645
      %v948 = vpop.f32.mrf.mxu0
      %v949 = vadd.f32 %v866, %v948
      %950 = vdwg.mxu0
      %vm951 = vcmask 64512
      %v953 = vsel %vm951, %v665, 0
      %v956 = vsel %vm951, %v777, 0
      %958 = vmatpush.xpose.msra.mxu0 0.0
      %959 = vmatpush.xpose.msra.mxu0 0.0
      %960 = vmatpush.xpose.msra.mxu0 0.0
      %961 = vmatpush.xpose.msra.mxu0 0.0
      %962 = vmatpush.xpose.msra.mxu0 0.0
      %963 = vmatpush.xpose.msra.mxu0 0.0
      %964 = vmatpush.xpose.msra.mxu0 0.0
      %965 = vmatpush.xpose.msra.mxu0 0.0
      %966 = vmatpush.xpose.msra.mxu0 0.0
      %967 = vmatpush.xpose.msra.mxu0 0.0
      %968 = vmatpush.xpose.msra.mxu0 0.0
      %969 = vmatpush.xpose.msra.mxu0 0.0
      %970 = vmatpush.xpose.msra.mxu0 0.0
      %971 = vmatpush.xpose.msra.mxu0 0.0
      %972 = vmatpush.xpose.msra.mxu0 0.0
      %973 = vmatpush.xpose.msra.mxu0 %v956
      %974 = vmatmul.f32.gmra.mxu0 %v953
      %v975 = vpop.f32.mrf.mxu0
      %v976 = vadd.f32 0.0, %v975
      %977 = vdwg.mxu0
      %v979 = vsel %vm951, %v685, 0
      %v982 = vsel %vm951, %v797, 0
      %984 = vmatpush.xpose.msra.mxu0 0.0
      %985 = vmatpush.xpose.msra.mxu0 0.0
      %986 = vmatpush.xpose.msra.mxu0 0.0
      %987 = vmatpush.xpose.msra.mxu0 0.0
      %988 = vmatpush.xpose.msra.mxu0 0.0
      %989 = vmatpush.xpose.msra.mxu0 0.0
      %990 = vmatpush.xpose.msra.mxu0 0.0
      %991 = vmatpush.xpose.msra.mxu0 0.0
      %992 = vmatpush.xpose.msra.mxu0 0.0
      %993 = vmatpush.xpose.msra.mxu0 0.0
      %994 = vmatpush.xpose.msra.mxu0 0.0
      %995 = vmatpush.xpose.msra.mxu0 0.0
      %996 = vmatpush.xpose.msra.mxu0 0.0
      %997 = vmatpush.xpose.msra.mxu0 0.0
      %998 = vmatpush.xpose.msra.mxu0 0.0
      %999 = vmatpush.xpose.msra.mxu0 %v982
      %1000 = vmatmul.f32.gmra.mxu0 %v979
      %v1001 = vpop.f32.mrf.mxu0
      %v1002 = vadd.f32 0.0, %v1001
      %1003 = vdwg.mxu0
      %v1005 = vsel %vm951, %v705, 0
      %v1008 = vsel %vm951, %v817, 0
      %1010 = vmatpush.xpose.msra.mxu0 0.0
      %1011 = vmatpush.xpose.msra.mxu0 0.0
      %1012 = vmatpush.xpose.msra.mxu0 0.0
      %1013 = vmatpush.xpose.msra.mxu0 0.0
      %1014 = vmatpush.xpose.msra.mxu0 0.0
      %1015 = vmatpush.xpose.msra.mxu0 0.0
      %1016 = vmatpush.xpose.msra.mxu0 0.0
      %1017 = vmatpush.xpose.msra.mxu0 0.0
      %1018 = vmatpush.xpose.msra.mxu0 0.0
      %1019 = vmatpush.xpose.msra.mxu0 0.0
      %1020 = vmatpush.xpose.msra.mxu0 0.0
      %1021 = vmatpush.xpose.msra.mxu0 0.0
      %1022 = vmatpush.xpose.msra.mxu0 0.0
      %1023 = vmatpush.xpose.msra.mxu0 0.0
      %1024 = vmatpush.xpose.msra.mxu0 0.0
      %1025 = vmatpush.xpose.msra.mxu0 %v1008
      %1026 = vmatmul.f32.gmra.mxu0 %v1005
      %v1027 = vpop.f32.mrf.mxu0
      %v1028 = vadd.f32 0.0, %v1027
      %1029 = vdwg.mxu0
      %v1031 = vsel %vm951, %v725, 0
      %v1034 = vsel %vm951, %v837, 0
      %1036 = vmatpush.xpose.msra.mxu0 0.0
      %1037 = vmatpush.xpose.msra.mxu0 0.0
      %1038 = vmatpush.xpose.msra.mxu0 0.0
      %1039 = vmatpush.xpose.msra.mxu0 0.0
      %1040 = vmatpush.xpose.msra.mxu0 0.0
      %1041 = vmatpush.xpose.msra.mxu0 0.0
      %1042 = vmatpush.xpose.msra.mxu0 0.0
      %1043 = vmatpush.xpose.msra.mxu0 0.0
      %1044 = vmatpush.xpose.msra.mxu0 0.0
      %1045 = vmatpush.xpose.msra.mxu0 0.0
      %1046 = vmatpush.xpose.msra.mxu0 0.0
      %1047 = vmatpush.xpose.msra.mxu0 0.0
      %1048 = vmatpush.xpose.msra.mxu0 0.0
      %1049 = vmatpush.xpose.msra.mxu0 0.0
      %1050 = vmatpush.xpose.msra.mxu0 0.0
      %1051 = vmatpush.xpose.msra.mxu0 %v1034
      %1052 = vmatmul.f32.gmra.mxu0 %v1031
      %v1053 = vpop.f32.mrf.mxu0
      %v1054 = vadd.f32 0.0, %v1053
      %1055 = vdwg.mxu0
      %v1056 = vsel %vm951, %v976, -inf
      %1057 = vmax.xlane.f32.xlu0 %v1056
      %v1058 = vpop.xlane.xlu0 %1057
      %v1059 = vsel %vm951, %v1002, -inf
      %1060 = vmax.xlane.f32.xlu0 %v1059
      %v1061 = vpop.xlane.xlu0 %1060
      %v1062 = vsel %vm951, %v1028, -inf
      %1063 = vmax.xlane.f32.xlu0 %v1062
      %v1064 = vpop.xlane.xlu0 %1063
      %v1065 = vsel %vm951, %v1054, -inf
      %1066 = vmax.xlane.f32.xlu0 %v1065
      %v1067 = vpop.xlane.xlu0 %1066
      %v1068 = vsub.f32 %v976, %v1058
      %v1069 = vsub.f32 %v1002, %v1061
      %v1070 = vsub.f32 %v1028, %v1064
      %v1071 = vsub.f32 %v1054, %v1067
      %v1072 = vmul.f32 %v1068, 1.442695
      %v1073 = vpow.pop %v1072
      %v1074 = vmul.f32 %v1069, 1.442695
      %v1075 = vpow.pop %v1074
      %v1076 = vmul.f32 %v1070, 1.442695
      %v1077 = vpow.pop %v1076
      %v1078 = vmul.f32 %v1071, 1.442695
      %v1079 = vpow.pop %v1078
      %v1080 = vsel %vm951, %v1073, 0.0
      %1081 = vadd.xlane.f32.xlu0 %v1080
      %v1082 = vpop.xlane.xlu0 %1081
      %v1083 = vsel %vm951, %v1075, 0.0
      %1084 = vadd.xlane.f32.xlu0 %v1083
      %v1085 = vpop.xlane.xlu0 %1084
      %v1086 = vsel %vm951, %v1077, 0.0
      %1087 = vadd.xlane.f32.xlu0 %v1086
      %v1088 = vpop.xlane.xlu0 %1087
      %v1089 = vsel %vm951, %v1079, 0.0
      %1090 = vadd.xlane.f32.xlu0 %v1089
      %v1091 = vpop.xlane.xlu0 %1090
      %v1092 = vrcp.pop %v1082
      %v1093 = vrcp.pop %v1085
      %v1094 = vrcp.pop %v1088
      %v1095 = vrcp.pop %v1091
      %v1096 = vmul.f32 %v1073, %v1092
      %v1097 = vmul.f32 %v1075, %v1093
      %v1098 = vmul.f32 %v1077, %v1094
      %v1099 = vmul.f32 %v1079, %v1095
      %v1101 = vsel %vm951, %v1096, 0
      %1103 = vmatpush.msra.mxu0 0.0
      %1104 = vmatpush.msra.mxu0 0.0
      %1105 = vmatpush.msra.mxu0 0.0
      %1106 = vmatpush.msra.mxu0 0.0
      %1107 = vmatpush.msra.mxu0 0.0
      %1108 = vmatpush.msra.mxu0 0.0
      %1109 = vmatpush.msra.mxu0 0.0
      %1110 = vmatpush.msra.mxu0 0.0
      %1111 = vmatpush.msra.mxu0 0.0
      %1112 = vmatpush.msra.mxu0 0.0
      %1113 = vmatpush.msra.mxu0 0.0
      %1114 = vmatpush.msra.mxu0 0.0
      %1115 = vmatpush.msra.mxu0 0.0
      %1116 = vmatpush.msra.mxu0 0.0
      %1117 = vmatpush.msra.mxu0 0.0
      %1118 = vmatpush.msra.mxu0 %v889
      %1119 = vmatmul.f32.gmra.mxu0 %v1101
      %v1120 = vpop.f32.mrf.mxu0
      %v1121 = vadd.f32 0.0, %v1120
      %1122 = vdwg.mxu0
      %v1124 = vsel %vm951, %v1097, 0
      %1126 = vmatpush.msra.mxu0 0.0
      %1127 = vmatpush.msra.mxu0 0.0
      %1128 = vmatpush.msra.mxu0 0.0
      %1129 = vmatpush.msra.mxu0 0.0
      %1130 = vmatpush.msra.mxu0 0.0
      %1131 = vmatpush.msra.mxu0 0.0
      %1132 = vmatpush.msra.mxu0 0.0
      %1133 = vmatpush.msra.mxu0 0.0
      %1134 = vmatpush.msra.mxu0 0.0
      %1135 = vmatpush.msra.mxu0 0.0
      %1136 = vmatpush.msra.mxu0 0.0
      %1137 = vmatpush.msra.mxu0 0.0
      %1138 = vmatpush.msra.mxu0 0.0
      %1139 = vmatpush.msra.mxu0 0.0
      %1140 = vmatpush.msra.mxu0 0.0
      %1141 = vmatpush.msra.mxu0 %v909
      %1142 = vmatmul.f32.gmra.mxu0 %v1124
      %v1143 = vpop.f32.mrf.mxu0
      %v1144 = vadd.f32 0.0, %v1143
      %1145 = vdwg.mxu0
      %v1147 = vsel %vm951, %v1098, 0
      %1149 = vmatpush.msra.mxu0 0.0
      %1150 = vmatpush.msra.mxu0 0.0
      %1151 = vmatpush.msra.mxu0 0.0
      %1152 = vmatpush.msra.mxu0 0.0
      %1153 = vmatpush.msra.mxu0 0.0
      %1154 = vmatpush.msra.mxu0 0.0
      %1155 = vmatpush.msra.mxu0 0.0
      %1156 = vmatpush.msra.mxu0 0.0
      %1157 = vmatpush.msra.mxu0 0.0
      %1158 = vmatpush.msra.mxu0 0.0
      %1159 = vmatpush.msra.mxu0 0.0
      %1160 = vmatpush.msra.mxu0 0.0
      %1161 = vmatpush.msra.mxu0 0.0
      %1162 = vmatpush.msra.mxu0 0.0
      %1163 = vmatpush.msra.mxu0 0.0
      %1164 = vmatpush.msra.mxu0 %v929
      %1165 = vmatmul.f32.gmra.mxu0 %v1147
      %v1166 = vpop.f32.mrf.mxu0
      %v1167 = vadd.f32 0.0, %v1166
      %1168 = vdwg.mxu0
      %v1170 = vsel %vm951, %v1099, 0
      %1172 = vmatpush.msra.mxu0 0.0
      %1173 = vmatpush.msra.mxu0 0.0
      %1174 = vmatpush.msra.mxu0 0.0
      %1175 = vmatpush.msra.mxu0 0.0
      %1176 = vmatpush.msra.mxu0 0.0
      %1177 = vmatpush.msra.mxu0 0.0
      %1178 = vmatpush.msra.mxu0 0.0
      %1179 = vmatpush.msra.mxu0 0.0
      %1180 = vmatpush.msra.mxu0 0.0
      %1181 = vmatpush.msra.mxu0 0.0
      %1182 = vmatpush.msra.mxu0 0.0
      %1183 = vmatpush.msra.mxu0 0.0
      %1184 = vmatpush.msra.mxu0 0.0
      %1185 = vmatpush.msra.mxu0 0.0
      %1186 = vmatpush.msra.mxu0 0.0
      %1187 = vmatpush.msra.mxu0 %v949
      %1188 = vmatmul.f32.gmra.mxu0 %v1170
      %v1189 = vpop.f32.mrf.mxu0
      %v1190 = vadd.f32 0.0, %v1189
      %1191 = vdwg.mxu0
      %v1192 = vld [vmem:[%s9] sm:$0xff]
      %v1193 = vld [vmem:[%s9 + $0x8] sm:$0xff]
      %v1194 = vld [vmem:[%s9 + $0x10] sm:$0xff]
      %v1195 = vld [vmem:[%s9 + $0x18] sm:$0xff]
      %v1197 = vsel %vm951, %v1121, 0
      %1199 = vmatpush.msra.mxu0 0.0
      %1200 = vmatpush.msra.mxu0 0.0
      %1201 = vmatpush.msra.mxu0 0.0
      %1202 = vmatpush.msra.mxu0 0.0
      %1203 = vmatpush.msra.mxu0 0.0
      %1204 = vmatpush.msra.mxu0 0.0
      %1205 = vmatpush.msra.mxu0 0.0
      %1206 = vmatpush.msra.mxu0 0.0
      %1207 = vmatpush.msra.mxu0 0.0
      %1208 = vmatpush.msra.mxu0 0.0
      %1209 = vmatpush.msra.mxu0 0.0
      %1210 = vmatpush.msra.mxu0 0.0
      %1211 = vmatpush.msra.mxu0 0.0
      %1212 = vmatpush.msra.mxu0 0.0
      %1213 = vmatpush.msra.mxu0 0.0
      %1214 = vmatpush.msra.mxu0 %v1192
      %1215 = vmatmul.f32.gmra.mxu0 %v1197
      %v1216 = vpop.f32.mrf.mxu0
      %v1217 = vadd.f32 0.0, %v1216
      %1218 = vdwg.mxu0
      %v1220 = vsel %vm951, %v1144, 0
      %1222 = vmatpush.msra.mxu0 0.0
      %1223 = vmatpush.msra.mxu0 0.0
      %1224 = vmatpush.msra.mxu0 0.0
      %1225 = vmatpush.msra.mxu0 0.0
      %1226 = vmatpush.msra.mxu0 0.0
      %1227 = vmatpush.msra.mxu0 0.0
      %1228 = vmatpush.msra.mxu0 0.0
      %1229 = vmatpush.msra.mxu0 0.0
      %1230 = vmatpush.msra.mxu0 0.0
      %1231 = vmatpush.msra.mxu0 0.0
      %1232 = vmatpush.msra.mxu0 0.0
      %1233 = vmatpush.msra.mxu0 0.0
      %1234 = vmatpush.msra.mxu0 0.0
      %1235 = vmatpush.msra.mxu0 0.0
      %1236 = vmatpush.msra.mxu0 0.0
      %1237 = vmatpush.msra.mxu0 %v1193
      %1238 = vmatmul.f32.gmra.mxu0 %v1220
      %v1239 = vpop.f32.mrf.mxu0
      %v1240 = vadd.f32 0.0, %v1239
      %1241 = vdwg.mxu0
      %v1243 = vsel %vm951, %v1167, 0
      %1245 = vmatpush.msra.mxu0 0.0
      %1246 = vmatpush.msra.mxu0 0.0
      %1247 = vmatpush.msra.mxu0 0.0
      %1248 = vmatpush.msra.mxu0 0.0
      %1249 = vmatpush.msra.mxu0 0.0
      %1250 = vmatpush.msra.mxu0 0.0
      %1251 = vmatpush.msra.mxu0 0.0
      %1252 = vmatpush.msra.mxu0 0.0
      %1253 = vmatpush.msra.mxu0 0.0
      %1254 = vmatpush.msra.mxu0 0.0
      %1255 = vmatpush.msra.mxu0 0.0
      %1256 = vmatpush.msra.mxu0 0.0
      %1257 = vmatpush.msra.mxu0 0.0
      %1258 = vmatpush.msra.mxu0 0.0
      %1259 = vmatpush.msra.mxu0 0.0
      %1260 = vmatpush.msra.mxu0 %v1194
      %1261 = vmatmul.f32.gmra.mxu0 %v1243
      %v1262 = vpop.f32.mrf.mxu0
      %v1263 = vadd.f32 0.0, %v1262
      %1264 = vdwg.mxu0
      %v1266 = vsel %vm951, %v1190, 0
      %1268 = vmatpush.msra.mxu0 0.0
      %1269 = vmatpush.msra.mxu0 0.0
      %1270 = vmatpush.msra.mxu0 0.0
      %1271 = vmatpush.msra.mxu0 0.0
      %1272 = vmatpush.msra.mxu0 0.0
      %1273 = vmatpush.msra.mxu0 0.0
      %1274 = vmatpush.msra.mxu0 0.0
      %1275 = vmatpush.msra.mxu0 0.0
      %1276 = vmatpush.msra.mxu0 0.0
      %1277 = vmatpush.msra.mxu0 0.0
      %1278 = vmatpush.msra.mxu0 0.0
      %1279 = vmatpush.msra.mxu0 0.0
      %1280 = vmatpush.msra.mxu0 0.0
      %1281 = vmatpush.msra.mxu0 0.0
      %1282 = vmatpush.msra.mxu0 0.0
      %1283 = vmatpush.msra.mxu0 %v1195
      %1284 = vmatmul.f32.gmra.mxu0 %v1266
      %v1285 = vpop.f32.mrf.mxu0
      %v1286 = vadd.f32 0.0, %v1285
      %1287 = vdwg.mxu0
      %v1288 = vsel %vm574, %v1217, 0.0
      %v1289 = vsel %vm574, %v1240, 0.0
      %v1290 = vadd.f32 %v1288, %v1289
      %v1291 = vsel %vm574, %v1263, 0.0
      %v1292 = vadd.f32 %v1290, %v1291
      %v1293 = vsel %vm574, %v1286, 0.0
      %v1294 = vadd.f32 %v1292, %v1293
      %v1295 = vld [vmem:[%s10] sm:$0x1]
      %v1297 = vperm.slane %v1295, 0
      %v1299 = vadd.f32 %v1294, %v1297
      %v1300 = vadd.f32 %v1299, %v571
      %v1301 = vld [vmem:[%s11] sm:$0x1]
      %v1302 = vld [vmem:[%s12] sm:$0x1]
      %v1303 = vsel %vm574, %v1300, 0.0
      %1304 = vadd.xlane.f32.xlu0 %v1303
      %v1305 = vpop.xlane.xlu0 %1304
      %v1306 = vmul.f32 %v1305, %v584
      %v1307 = vsub.f32 %v1300, %v1306
      %v1308 = vmul.f32 %v1307, %v1307
      %v1309 = vsel %vm574, %v1308, 0.0
      %1310 = vadd.xlane.f32.xlu0 %v1309
      %v1311 = vpop.xlane.xlu0 %1310
      %v1312 = vmul.f32 %v1311, %v584
      %v1313 = vadd.f32 %v1312, 1e-05
      %v1314 = vrsqrt.pop %v1313
      %v1315 = vmul.f32 %v1314, %v1313
      %v1316 = vmul.f32 %v1315, %v1314
      %v1317 = vmul.f32 0.5, %v1316
      %v1318 = vsub.f32 1.5, %v1317
      %v1319 = vmul.f32 %v1314, %v1318
      %vm1320 = vweird.f32 %v1313
      %vm1321 = vweird.f32 %v1314
      %vm1322 = vmor %vm1320, %vm1321
      %v1323 = vsel %vm1322, %v1314, %v1319
      %v1324 = vmul.f32 %v1307, %v1323
      %v1326 = vperm.slane %v1301, 0
      %v1328 = vmul.f32 %v1324, %v1326
      %v1330 = vperm.slane %v1302, 0
      %v1332 = vadd.f32 %v1328, %v1330
      %v1333 = vld [vmem:[%s13] sm:$0xff]
      %v1334 = vld [vmem:[%s13 + $0x8] sm:$0xff]
      %v1335 = vld [vmem:[%s13 + $0x10] sm:$0xff]
      %v1336 = vld [vmem:[%s13 + $0x18] sm:$0xff]
      %v1338 = vsel %vm574, %v1332, 0
      %1340 = vmatpush.msra.mxu0 0.0
      %1341 = vmatpush.msra.mxu0 0.0
      %1342 = vmatpush.msra.mxu0 0.0
      %1343 = vmatpush.msra.mxu0 0.0
      %1344 = vmatpush.msra.mxu0 0.0
      %1345 = vmatpush.msra.mxu0 0.0
      %1346 = vmatpush.msra.mxu0 0.0
      %1347 = vmatpush.msra.mxu0 0.0
      %1348 = vmatpush.msra.mxu0 0.0
      %1349 = vmatpush.msra.mxu0 0.0
      %1350 = vmatpush.msra.mxu0 0.0
      %1351 = vmatpush.msra.mxu0 0.0
      %1352 = vmatpush.msra.mxu0 %v1336
      %1353 = vmatpush.msra.mxu0 %v1335
      %1354 = vmatpush.msra.mxu0 %v1334
      %1355 = vmatpush.msra.mxu0 %v1333
      %1356 = vmatmul.f32.gmra.mxu0 %v1338
      %v1357 = vpop.f32.mrf.mxu0
      %v1358 = vadd.f32 0.0, %v1357
      %1359 = vdwg.mxu0
      %v1360 = vld [vmem:[%s14] sm:$0xff]
      %v1361 = vld [vmem:[%s14 + $0x8] sm:$0xff]
      %v1362 = vld [vmem:[%s14 + $0x10] sm:$0xff]
      %v1363 = vld [vmem:[%s14 + $0x18] sm:$0xff]
      %1364 = vmatpush.msra.mxu0 0.0
      %1365 = vmatpush.msra.mxu0 0.0
      %1366 = vmatpush.msra.mxu0 0.0
      %1367 = vmatpush.msra.mxu0 0.0
      %1368 = vmatpush.msra.mxu0 0.0
      %1369 = vmatpush.msra.mxu0 0.0
      %1370 = vmatpush.msra.mxu0 0.0
      %1371 = vmatpush.msra.mxu0 0.0
      %1372 = vmatpush.msra.mxu0 0.0
      %1373 = vmatpush.msra.mxu0 0.0
      %1374 = vmatpush.msra.mxu0 0.0
      %1375 = vmatpush.msra.mxu0 0.0
      %1376 = vmatpush.msra.mxu0 %v1363
      %1377 = vmatpush.msra.mxu0 %v1362
      %1378 = vmatpush.msra.mxu0 %v1361
      %1379 = vmatpush.msra.mxu0 %v1360
      %1380 = vmatmul.f32.gmra.mxu0 %v1338
      %v1381 = vpop.f32.mrf.mxu0
      %v1382 = vadd.f32 0.0, %v1381
      %1383 = vdwg.mxu0
      %v1384 = vxor.u32 %v1382, 2147483648
      %v1385 = vmul.f32 %v1384, 1.442695
      %v1386 = vpow.pop %v1385
      %v1387 = vadd.f32 %v1386, 1.0
      %v1388 = vrcp.pop %v1387
      %v1389 = vmul.f32 %v1387, %v1388
      %v1390 = vsub.f32 1.0, %v1389
      %v1391 = vmul.f32 %v1388, %v1390
      %v1392 = vadd.f32 %v1388, %v1391
      %vm1393 = vweird.f32 %v1387
      %vm1394 = vweird.f32 %v1388
      %vm1395 = vmor %vm1393, %vm1394
      %v1396 = vsel %vm1395, %v1388, %v1392
      %v1397 = vand.u32 2147483647, %v1387
      %vm1398 = vcmp.eq.f32.partialorder %v1397, 8.507059e+37
      %v1399 = vand.u32 %v1387, 2147483648
      %v1400 = vor.u32 1.1754944e-38, %v1399
      %v1401 = vsel %vm1398, %v1400, %v1396
      %v1402 = vmul.f32 1.0, %v1401
      %v1403 = vmul.f32 %v1358, %v1402
      %v1404 = vld [vmem:[%s15 + $0x8] sm:$0xff]
      %v1405 = vld [vmem:[%s15 + $0x10] sm:$0xff]
      %v1407 = vrot.slane %v1403, 1
      %vm1409 = vcmask 1046528
      %v1410 = vsel %vm1409, 0.0, %v1407
      %v1411 = vsel %vm1409, %v1407, 0.0
      %v1412 = vperm.slane %v1404, 0
      %v1413 = vmul.f32 %v1410, %v1412
      %v1414 = vadd.f32 %v1413, 0.0
      %v1415 = vperm.slane %v1404, 1
      %v1416 = vmul.f32 %v1410, %v1415
      %v1417 = vmul.f32 %v1411, %v1415
      %v1420 = vrot.slane %v1416, 1
      %v1421 = vrot.slane %v1417, 1
      %v1422 = vsel %vm1409, %v1420, %v1421
      %v1424 = vadd.f32 %v1414, %v1422
      %v1425 = vperm.slane %v1404, 2
      %v1426 = vmul.f32 %v1410, %v1425
      %v1427 = vmul.f32 %v1411, %v1425
      %vm1430 = vcmask 1045504
      %v1431 = vrot.slane %v1426, 2
      %v1432 = vrot.slane %v1427, 2
      %v1433 = vsel %vm1430, %v1431, %v1432
      %v1435 = vadd.f32 %v1424, %v1433
      %v1436 = vperm.slane %v1404, 3
      %v1437 = vmul.f32 %v1410, %v1436
      %v1438 = vmul.f32 %v1411, %v1436
      %vm1441 = vcmask 1044480
      %v1442 = vrot.slane %v1437, 3
      %v1443 = vrot.slane %v1438, 3
      %v1444 = vsel %vm1441, %v1442, %v1443
      %v1446 = vadd.f32 %v1435, %v1444
      %v1447 = vperm.slane %v1404, 4
      %v1448 = vmul.f32 %v1410, %v1447
      %v1449 = vmul.f32 %v1411, %v1447
      %vm1452 = vcmask 1043456
      %v1453 = vrot.slane %v1448, 4
      %v1454 = vrot.slane %v1449, 4
      %v1455 = vsel %vm1452, %v1453, %v1454
      %v1457 = vadd.f32 %v1446, %v1455
      %v1458 = vperm.slane %v1404, 5
      %v1459 = vmul.f32 %v1410, %v1458
      %v1460 = vmul.f32 %v1411, %v1458
      %vm1463 = vcmask 1042432
      %v1464 = vrot.slane %v1459, 5
      %v1465 = vrot.slane %v1460, 5
      %v1466 = vsel %vm1463, %v1464, %v1465
      %v1468 = vadd.f32 %v1457, %v1466
      %v1469 = vperm.slane %v1404, 6
      %v1470 = vmul.f32 %v1410, %v1469
      %v1471 = vmul.f32 %v1411, %v1469
      %vm1474 = vcmask 1041408
      %v1475 = vrot.slane %v1470, 6
      %v1476 = vrot.slane %v1471, 6
      %v1477 = vsel %vm1474, %v1475, %v1476
      %v1479 = vadd.f32 %v1468, %v1477
      %v1480 = vperm.slane %v1404, 7
      %v1481 = vmul.f32 %v1410, %v1480
      %v1482 = vmul.f32 %v1411, %v1480
      %vm1485 = vcmask 1040384
      %v1486 = vrot.slane %v1481, 7
      %v1487 = vrot.slane %v1482, 7
      %v1488 = vsel %vm1485, %v1486, %v1487
      %v1490 = vadd.f32 %v1479, %v1488
      %v1491 = vperm.slane %v1405, 0
      %v1492 = vmul.f32 %v1411, %v1491
      %v1493 = vadd.f32 %v1490, %v1492
      %v1494 = vperm.slane %v1405, 1
      %v1495 = vmul.f32 %v1411, %v1494
      %v1496 = vmul.f32 %v1494, 0.0
      %v1499 = vrot.slane %v1495, 1
      %v1500 = vrot.slane %v1496, 1
      %v1501 = vsel %vm1409, %v1499, %v1500
      %v1503 = vadd.f32 %v1493, %v1501
      %v1504 = vperm.slane %v1405, 2
      %v1505 = vmul.f32 %v1411, %v1504
      %v1506 = vmul.f32 %v1504, 0.0
      %v1509 = vrot.slane %v1505, 2
      %v1510 = vrot.slane %v1506, 2
      %v1511 = vsel %vm1430, %v1509, %v1510
      %v1513 = vadd.f32 %v1503, %v1511
      %v1514 = vperm.slane %v1405, 3
      %v1515 = vmul.f32 %v1411, %v1514
      %v1516 = vmul.f32 %v1514, 0.0
      %v1519 = vrot.slane %v1515, 3
      %v1520 = vrot.slane %v1516, 3
      %v1521 = vsel %vm1441, %v1519, %v1520
      %v1523 = vadd.f32 %v1513, %v1521
      %v1524 = vperm.slane %v1405, 4
      %v1525 = vmul.f32 %v1411, %v1524
      %v1526 = vmul.f32 %v1524, 0.0
      %v1529 = vrot.slane %v1525, 4
      %v1530 = vrot.slane %v1526, 4
      %v1531 = vsel %vm1452, %v1529, %v1530
      %v1533 = vadd.f32 %v1523, %v1531
      %v1534 = vperm.slane %v1405, 5
      %v1535 = vmul.f32 %v1411, %v1534
      %v1536 = vmul.f32 %v1534, 0.0
      %v1539 = vrot.slane %v1535, 5
      %v1540 = vrot.slane %v1536, 5
      %v1541 = vsel %vm1463, %v1539, %v1540
      %v1543 = vadd.f32 %v1533, %v1541
      %v1544 = vperm.slane %v1405, 6
      %v1545 = vmul.f32 %v1411, %v1544
      %v1546 = vmul.f32 %v1544, 0.0
      %v1549 = vrot.slane %v1545, 6
      %v1550 = vrot.slane %v1546, 6
      %v1551 = vsel %vm1474, %v1549, %v1550
      %v1553 = vadd.f32 %v1543, %v1551
      %v1554 = vld [vmem:[%s16] sm:$0x1]
      %v1556 = vperm.slane %v1554, 0
      %v1558 = vadd.f32 %v1553, %v1556
      %v1559 = vxor.u32 %v1558, 2147483648
      %v1560 = vmul.f32 %v1559, 1.442695
      %v1561 = vpow.pop %v1560
      %v1562 = vadd.f32 %v1561, 1.0
      %v1563 = vrcp.pop %v1562
      %v1564 = vmul.f32 %v1562, %v1563
      %v1565 = vsub.f32 1.0, %v1564
      %v1566 = vmul.f32 %v1563, %v1565
      %v1567 = vadd.f32 %v1563, %v1566
      %vm1568 = vweird.f32 %v1562
      %vm1569 = vweird.f32 %v1563
      %vm1570 = vmor %vm1568, %vm1569
      %v1571 = vsel %vm1570, %v1563, %v1567
      %v1572 = vand.u32 2147483647, %v1562
      %vm1573 = vcmp.eq.f32.partialorder %v1572, 8.507059e+37
      %v1574 = vand.u32 %v1562, 2147483648
      %v1575 = vor.u32 1.1754944e-38, %v1574
      %v1576 = vsel %vm1573, %v1575, %v1571
      %v1577 = vmul.f32 1.0, %v1576
      %v1578 = vmul.f32 %v1558, %v1577
      %v1579 = vld [vmem:[%s17] sm:$0xff]
      %v1580 = vld [vmem:[%s17 + $0x8] sm:$0xff]
      %v1581 = vld [vmem:[%s17 + $0x10] sm:$0xff]
      %v1582 = vld [vmem:[%s17 + $0x18] sm:$0xff]
      %v1584 = vsel %vm574, %v1578, 0
      %1586 = vmatpush.msra.mxu0 0.0
      %1587 = vmatpush.msra.mxu0 0.0
      %1588 = vmatpush.msra.mxu0 0.0
      %1589 = vmatpush.msra.mxu0 0.0
      %1590 = vmatpush.msra.mxu0 0.0
      %1591 = vmatpush.msra.mxu0 0.0
      %1592 = vmatpush.msra.mxu0 0.0
      %1593 = vmatpush.msra.mxu0 0.0
      %1594 = vmatpush.msra.mxu0 0.0
      %1595 = vmatpush.msra.mxu0 0.0
      %1596 = vmatpush.msra.mxu0 0.0
      %1597 = vmatpush.msra.mxu0 0.0
      %1598 = vmatpush.msra.mxu0 %v1582
      %1599 = vmatpush.msra.mxu0 %v1581
      %1600 = vmatpush.msra.mxu0 %v1580
      %1601 = vmatpush.msra.mxu0 %v1579
      %1602 = vmatmul.f32.gmra.mxu0 %v1584
      %v1603 = vpop.f32.mrf.mxu0
      %v1604 = vadd.f32 %v1300, %v1603
      %1605 = vdwg.mxu0
      %1606 = vst.msk [vmem:[%s570] sm:$0xff] %vm574, %v1604
      %p1607 = scmp.lt.s32.totalorder %s29, 1
      %s1608 = scalar_select %p1607, %s29, 1
      %s1609 = smul.addr %s1608, 8
      %s1610 = scalar_lea.vmem %s18, %s1609
      // Predicated region
      $region93: #{branchformer_layer.4} parent=91 // pred_check
        %p1611 = pneg %p430
      $region94: #{branchformer_layer.4} parent=91 // pred_check_branch
        %1613 = sbr.rel (%p1611) target = $region96
      $region95: #{branchformer_layer.4} parent=91 // pred_region
        _
      $region96: #{branchformer_layer.4} parent=91 // pred_fallthru
        _
    $region92: #{branchformer_layer.4} parent=5 // pred_fallthru
      _
    %p1614 = scmp.le.s32.totalorder 2, %s24
    // Predicated region
    $region97: #{branchformer_layer.4} parent=5 // pred_check
      %p1615 = pneg %p1614
    $region98: #{branchformer_layer.4} parent=5 // pred_check_branch
      %1617 = sbr.rel (%p1615) target = $region100
    $region99: #{branchformer_layer.4} parent=5 // pred_region
      %s1618 = ssub.s32 %s24, 2
      // Predicated region
      $region101: #{branchformer_layer.4} parent=99 // pred_check
        %p1619 = pneg %p436
      $region102: #{branchformer_layer.4} parent=99 // pred_check_branch
        %1621 = sbr.rel (%p1619) target = $region104
      $region103: #{branchformer_layer.4} parent=99 // pred_region
        %p1622 = scmp.lt.s32.totalorder %s30, 1
        %s1623 = scalar_select %p1622, %s30, 1
        %s1624 = smul.addr %s1623, 8
        %s1625 = scalar_lea.vmem %s18, %s1624
      $region104: #{branchformer_layer.4} parent=99 // pred_fallthru
        _
    $region100: #{branchformer_layer.4} parent=5 // pred_fallthru
      _
  $region6: #{branchformer_layer.4} parent=0 // loop_footer
    %s28 = sadd.s32 1, %s24
  $region7: #{branchformer_layer.4} parent=0 // loop_footer_branch
    %23 = sbr.rel target = $region3
  $region8: #{branchformer_layer.4} parent=0 // loop_exit
    _

</llo_original>
